<compile_context>
chip_gen: v7x
topology: tpu7x:2x2x1
jax: 0.10.0
libtpu: 0.0.40
codegen_flags: <defaults>
</compile_context>

<pallas_src>
import math

import jax
import jax.numpy as jnp
from jax.experimental import pallas as pl
from jax.experimental.pallas import tpu as pltpu

OUT_DIM = 32
NUM_HEADS = 4
HEAD_DIM = OUT_DIM // NUM_HEADS
MLP_HIDDEN = 2 * OUT_DIM
NUM_FIRST_SA_BLOCKS = 2          # cfgs.first_SA_block_cfgs.num_blocks
HIGH_SCORE_RATIO = 0.5           # cfgs.high_score_ratio_list[0]
SEQ_LEN = 16                     # cfgs.sequence_length
S_TOTAL = SEQ_LEN + 1            # tokens + cls
EPS_LN = 1e-5


# ----------------------------- fused Pallas kernel ------------------------------

def _pc_attn_re_kernel(x_ref, cls_ref, pos_ref,
                       ln1_g_ref, ln1_b_ref,
                       wq_ref, bq_ref, wk_ref, bk_ref, wv_ref, bv_ref,
                       wo_ref, bo_ref,
                       ln2_g_ref, ln2_b_ref,
                       wfc1_ref, bfc1_ref, wfc2_ref, bfc2_ref,
                       aggr_ref, attn_ref,
                       x_scr):
    """Whole coarsest-resolution forward for one batch element (one grid step).

    cls prepend + pos-emb + NUM_FIRST_SA_BLOCKS residual SA blocks + cls-feature /
    cls-attention-row extraction, all resident in VMEM / vregs.  Matmul operands are
    bf16 with f32 accumulation; layernorm / softmax / residual math stays in f32.
    """
    scale = 1.0 / math.sqrt(HEAD_DIM)

    def ln(x, g, b):
        mu = jnp.mean(x, axis=-1, keepdims=True)
        var = jnp.mean(jnp.square(x - mu), axis=-1, keepdims=True)
        return (x - mu) * jax.lax.rsqrt(var + EPS_LN) * g + b

    def mm(a, w):
        return jnp.dot(a.astype(jnp.bfloat16), w.astype(jnp.bfloat16),
                       preferred_element_type=jnp.float32)

    # cls-token prepend + sinusoidal pos-emb, assembled once in a VMEM scratch slab.
    x_scr[0:1, :] = cls_ref[...] + pos_ref[0:1, :]
    x_scr[1:, :] = x_ref[0] + pos_ref[1:, :]
    x = x_scr[...]                                            # (S_TOTAL, OUT_DIM) f32

    attn_cls = jnp.zeros((1, S_TOTAL), jnp.float32)
    for blk in range(NUM_FIRST_SA_BLOCKS):
        last_blk = blk == NUM_FIRST_SA_BLOCKS - 1

        # ---- pre-LN multi-head self-attention + residual ----
        h = ln(x, ln1_g_ref[blk], ln1_b_ref[blk])
        proj = jnp.zeros((S_TOTAL, OUT_DIM), jnp.float32)
        for hd in range(NUM_HEADS):
            i = blk * NUM_HEADS + hd
            q = mm(h, wq_ref[i]) + bq_ref[i]                  # (S, HEAD_DIM)
            k = mm(h, wk_ref[i]) + bk_ref[i]
            v = mm(h, wv_ref[i]) + bv_ref[i]
            s = jax.lax.dot_general(
                q.astype(jnp.bfloat16), k.astype(jnp.bfloat16),
                (((1,), (1,)), ((), ())),
                preferred_element_type=jnp.float32) * scale   # (S, S)
            s = s - jnp.max(s, axis=-1, keepdims=True)
            e = jnp.exp(s)
            p = e / jnp.sum(e, axis=-1, keepdims=True)        # f32 softmax
            o = mm(p, v)                                      # (S, HEAD_DIM)
            proj = proj + mm(o, wo_ref[i])                    # head-sliced out-projection
            if last_blk:
                attn_cls = attn_cls + p[0:1, :]               # only the cls-query row is kept
        x = x + proj + bo_ref[blk]

        # ---- pre-LN MLP + residual ----
        h = ln(x, ln2_g_ref[blk], ln2_b_ref[blk])
        # TODO(synk): tanh-approx GELU; swap for exact erf / QuickGELU if
        # ResidualSelfAttentionBlock_v2 uses those.
        h = jax.nn.gelu(mm(h, wfc1_ref[blk]) + bfc1_ref[blk], approximate=True)
        x = x + mm(h, wfc2_ref[blk]) + bfc2_ref[blk]

    aggr_ref[0] = x[0:1, :].astype(aggr_ref.dtype)                        # cls feature
    attn_ref[0] = (attn_cls * (1.0 / NUM_HEADS)).astype(attn_ref.dtype)   # head-mean cls row


def _rep_spec(shape):
    """Whole-array VMEM block replicated across the batch grid."""
    n = len(shape)
    return pl.BlockSpec(shape, lambda b, _n=n: (0,) * _n)


def fused_coarsest_forward(params, x_tok):
    """x_tok: (B, SEQ_LEN, OUT_DIM) -> (aggr_feat (B, OUT_DIM), cls attn row (B, S_TOTAL))."""
    B, N, D = x_tok.shape
    assert (N, D) == (SEQ_LEN, OUT_DIM)
    blocks = params["first_sa_blocks"]
    NB = len(blocks)
    H, HD = NUM_HEADS, HEAD_DIM

    stack = lambda name: jnp.stack([blk[name] for blk in blocks])

    # Wrapper-side layout plumbing: split fused QKV / out-proj weights per head so the
    # kernel never lane-slices, and pre-cast MXU weight operands to bf16.
    w_qkv = stack("w_qkv").reshape(NB, D, 3, H, HD)
    b_qkv = stack("b_qkv").reshape(NB, 3, H, 1, HD)

    def head_w(j):
        return (jnp.transpose(w_qkv[:, :, j], (0, 2, 1, 3))
                .reshape(NB * H, D, HD).astype(jnp.bfloat16))

    w_q, w_k, w_v = head_w(0), head_w(1), head_w(2)
    b_q = b_qkv[:, 0].reshape(NB * H, 1, HD)
    b_k = b_qkv[:, 1].reshape(NB * H, 1, HD)
    b_v = b_qkv[:, 2].reshape(NB * H, 1, HD)
    w_o = stack("w_o").reshape(NB * H, HD, D).astype(jnp.bfloat16)
    b_o = stack("b_o")                                           # (NB, 1, D)
    ln1_g = stack("ln1_g").reshape(NB, 1, D)
    ln1_b = stack("ln1_b").reshape(NB, 1, D)
    ln2_g = stack("ln2_g").reshape(NB, 1, D)
    ln2_b = stack("ln2_b").reshape(NB, 1, D)
    w_fc1 = stack("w_fc1").astype(jnp.bfloat16)                  # (NB, D, MLP_HIDDEN)
    b_fc1 = stack("b_fc1")                                       # (NB, 1, MLP_HIDDEN)
    w_fc2 = stack("w_fc2").astype(jnp.bfloat16)                  # (NB, MLP_HIDDEN, D)
    b_fc2 = stack("b_fc2")                                       # (NB, 1, D)
    cls = params["cls_emb"].reshape(1, D)
    pos = params["pos_emb"][0]                                   # (S_TOTAL, D)

    aggr, attn = pl.pallas_call(
        _pc_attn_re_kernel,
        grid=(B,),
        in_specs=[
            pl.BlockSpec((1, SEQ_LEN, D), lambda b: (b, 0, 0)),          # token feats
            _rep_spec((1, D)),                                           # cls emb
            _rep_spec((S_TOTAL, D)),                                     # pos emb
            _rep_spec((NB, 1, D)), _rep_spec((NB, 1, D)),                # ln1 gamma/beta
            _rep_spec((NB * H, D, HD)), _rep_spec((NB * H, 1, HD)),      # Wq, bq (per head)
            _rep_spec((NB * H, D, HD)), _rep_spec((NB * H, 1, HD)),      # Wk, bk
            _rep_spec((NB * H, D, HD)), _rep_spec((NB * H, 1, HD)),      # Wv, bv
            _rep_spec((NB * H, HD, D)), _rep_spec((NB, 1, D)),           # Wo (per head), bo
            _rep_spec((NB, 1, D)), _rep_spec((NB, 1, D)),                # ln2 gamma/beta
            _rep_spec((NB, D, MLP_HIDDEN)), _rep_spec((NB, 1, MLP_HIDDEN)),  # fc1
            _rep_spec((NB, MLP_HIDDEN, D)), _rep_spec((NB, 1, D)),           # fc2
        ],
        out_specs=(
            pl.BlockSpec((1, 1, D), lambda b: (b, 0, 0)),
            pl.BlockSpec((1, 1, S_TOTAL), lambda b: (b, 0, 0)),
        ),
        out_shape=(
            jax.ShapeDtypeStruct((B, 1, D), jnp.float32),                # cls feature
            jax.ShapeDtypeStruct((B, 1, S_TOTAL), jnp.float32),          # cls attn row
        ),
        scratch_shapes=[pltpu.VMEM((S_TOTAL, D), jnp.float32)],
        compiler_params=pltpu.CompilerParams(
            dimension_semantics=("parallel",)),   # batch -> 2 TCs on v7x; serial elsewhere
    )(x_tok, cls, pos,
      ln1_g, ln1_b, w_q, b_q, w_k, b_k, w_v, b_v, w_o, b_o,
      ln2_g, ln2_b, w_fc1, b_fc1, w_fc2, b_fc2)
    return aggr[:, 0, :], attn[:, 0, :]


# ------------------------------- parameters ---------------------------------

def sinusoidal_embedding(n_channels, dim):
    p = jnp.arange(n_channels, dtype=jnp.float32)[:, None]
    i = jnp.arange(dim, dtype=jnp.float32)[None, :]
    pe = p / jnp.power(10000.0, 2.0 * jnp.floor(i / 2.0) / dim)
    pe = pe.at[:, 0::2].set(jnp.sin(pe[:, 0::2]))
    pe = pe.at[:, 1::2].set(jnp.cos(pe[:, 1::2]))
    return pe[None]   # (1, n_channels, dim)


def init_params(key, seq_len):
    D = OUT_DIM
    ks = jax.random.split(key, 4)

    def nrm(k, shape):
        return 0.02 * jax.random.normal(k, shape, jnp.float32)

    block = {
        "ln1_g": jnp.ones((D,), jnp.float32),
        "ln1_b": jnp.zeros((D,), jnp.float32),
        "w_qkv": nrm(ks[0], (D, 3 * D)),
        "b_qkv": jnp.zeros((1, 3 * D), jnp.float32),
        "w_o": nrm(ks[1], (D, D)),
        "b_o": jnp.zeros((1, D), jnp.float32),
        "ln2_g": jnp.ones((D,), jnp.float32),
        "ln2_b": jnp.zeros((D,), jnp.float32),
        "w_fc1": nrm(ks[2], (D, MLP_HIDDEN)),
        "b_fc1": jnp.zeros((1, MLP_HIDDEN), jnp.float32),
        "w_fc2": nrm(ks[3], (MLP_HIDDEN, D)),
        "b_fc2": jnp.zeros((1, D), jnp.float32),
    }
    return {
        "cls_emb": jnp.zeros((1, 1, D), jnp.float32),                   # nn.Parameter(zeros)
        "pos_emb": sinusoidal_embedding(seq_len + 1, D),                # frozen sinusoid
        # deepcopy in the PyTorch __init__ => all first_SA_blocks share identical init
        "first_sa_blocks": [block] * NUM_FIRST_SA_BLOCKS,
    }


# ------------------------------- forward ------------------------------------

def pc_attn_re_forward(params, pc_feats_list, pc_coords_list):
    # pc_feats_list[0]: (B, C=OUT_DIM, N) -- conv-style NCW; pc_coords_list[0]: (B, N, 3)
    feats = pc_feats_list[0]
    B, D, N = feats.shape

    # TODO(synk): generate_pc_index_and_coords_v3 (multi-resolution KNN index build) is
    # undefined in the reference and data-dependent; with a single resolution
    # (layer_num == 0) it is a no-op here.
    del pc_coords_list

    x_tok = jnp.transpose(feats, (0, 2, 1))                      # (B, N, D) layout plumbing

    aggr_feat, attn_cls_row = fused_coarsest_forward(params, x_tok)
    attn_inuse = attn_cls_row[:, 1:]                             # cls->token scores (B, N)

    # descending-order index selection of the high-score tokens (select_type == 1)
    k = int(N * HIGH_SCORE_RATIO)
    _, to_aggr_feat_idx = jax.lax.top_k(attn_inuse, k)           # indices of k largest, desc

    aggr_feat_list = [aggr_feat]
    to_aggr_feat_idx_list = [[to_aggr_feat_idx]]

    # TODO(synk): the layer_num > 0 refinement loop (KeOps Kmin_argKmin KNN,
    # torch_scatter scatter_mean/max/min, SABlockSeq / CABlockSeq) is skipped by
    # config (sa_cfgs_list == ca_cfgs_list == []).
    return aggr_feat_list, to_aggr_feat_idx_list


# --------------------------------- main --------------------------------------

if __name__ == "__main__":
    key = jax.random.PRNGKey(0)
    kf, kc, kp = jax.random.split(key, 3)

    B, D, N = 2, OUT_DIM, SEQ_LEN
    pc_feats = jax.random.normal(kf, (B, D, N), jnp.float32)             # (B, C, N)
    pc_coords = jax.random.normal(kc, (B, N, 3), jnp.float32)            # (B, N, 3)

    params = init_params(kp, N)
    aggr_feat_list, to_aggr_feat_idx_list = pc_attn_re_forward(
        params, [pc_feats], [pc_coords])

    jax.tree_util.tree_map(lambda a: a.block_until_ready(),
                           (aggr_feat_list, to_aggr_feat_idx_list))
    assert aggr_feat_list[0].shape == (B, D)
    assert to_aggr_feat_idx_list[0][0].shape == (B, int(N * HIGH_SCORE_RATIO))
    print("KERNEL_OK")
</pallas_src>

<mosaic_0001>
module attributes {stable_mosaic.version = 11 : i64} {
  func.func @_pc_attn_re_kernel(%arg0: i32, %arg1: memref<1x16x32xf32, #tpu.memory_space<vmem>>, %arg2: memref<1x32xf32, #tpu.memory_space<vmem>>, %arg3: memref<17x32xf32, #tpu.memory_space<vmem>>, %arg4: memref<2x1x32xf32, #tpu.memory_space<vmem>>, %arg5: memref<2x1x32xf32, #tpu.memory_space<vmem>>, %arg6: memref<8x32x8xbf16, #tpu.memory_space<vmem>>, %arg7: memref<8x1x8xf32, #tpu.memory_space<vmem>>, %arg8: memref<8x32x8xbf16, #tpu.memory_space<vmem>>, %arg9: memref<8x1x8xf32, #tpu.memory_space<vmem>>, %arg10: memref<8x32x8xbf16, #tpu.memory_space<vmem>>, %arg11: memref<8x1x8xf32, #tpu.memory_space<vmem>>, %arg12: memref<8x8x32xbf16, #tpu.memory_space<vmem>>, %arg13: memref<2x1x32xf32, #tpu.memory_space<vmem>>, %arg14: memref<2x1x32xf32, #tpu.memory_space<vmem>>, %arg15: memref<2x1x32xf32, #tpu.memory_space<vmem>>, %arg16: memref<2x32x64xbf16, #tpu.memory_space<vmem>>, %arg17: memref<2x1x64xf32, #tpu.memory_space<vmem>>, %arg18: memref<2x64x32xbf16, #tpu.memory_space<vmem>>, %arg19: memref<2x1x32xf32, #tpu.memory_space<vmem>>, %arg20: memref<1x1x32xf32, #tpu.memory_space<vmem>>, %arg21: memref<1x1x17xf32, #tpu.memory_space<vmem>>, %arg22: memref<17x32xf32, #tpu.memory_space<vmem>>) attributes {dimension_semantics = [#tpu.dimension_semantics<parallel>], iteration_bounds = array<i64: 2>, scalar_prefetch = 0 : i64, scratch_operands = 1 : i64, tpu.core_type = #tpu.core_type<tc>, window_params = [{transform_indices = @transform_0, window_bounds = array<i64: 1, 16, 32>}, {pipeline_mode = #tpu.pipeline_mode<synchronous>, transform_indices = @transform_1, window_bounds = array<i64: 1, 32>}, {pipeline_mode = #tpu.pipeline_mode<synchronous>, transform_indices = @transform_2, window_bounds = array<i64: 17, 32>}, {pipeline_mode = #tpu.pipeline_mode<synchronous>, transform_indices = @transform_3, window_bounds = array<i64: 2, 1, 32>}, {pipeline_mode = #tpu.pipeline_mode<synchronous>, transform_indices = @transform_4, window_bounds = array<i64: 2, 1, 32>}, {pipeline_mode = #tpu.pipeline_mode<synchronous>, transform_indices = @transform_5, window_bounds = array<i64: 8, 32, 8>}, {pipeline_mode = #tpu.pipeline_mode<synchronous>, transform_indices = @transform_6, window_bounds = array<i64: 8, 1, 8>}, {pipeline_mode = #tpu.pipeline_mode<synchronous>, transform_indices = @transform_7, window_bounds = array<i64: 8, 32, 8>}, {pipeline_mode = #tpu.pipeline_mode<synchronous>, transform_indices = @transform_8, window_bounds = array<i64: 8, 1, 8>}, {pipeline_mode = #tpu.pipeline_mode<synchronous>, transform_indices = @transform_9, window_bounds = array<i64: 8, 32, 8>}, {pipeline_mode = #tpu.pipeline_mode<synchronous>, transform_indices = @transform_10, window_bounds = array<i64: 8, 1, 8>}, {pipeline_mode = #tpu.pipeline_mode<synchronous>, transform_indices = @transform_11, window_bounds = array<i64: 8, 8, 32>}, {pipeline_mode = #tpu.pipeline_mode<synchronous>, transform_indices = @transform_12, window_bounds = array<i64: 2, 1, 32>}, {pipeline_mode = #tpu.pipeline_mode<synchronous>, transform_indices = @transform_13, window_bounds = array<i64: 2, 1, 32>}, {pipeline_mode = #tpu.pipeline_mode<synchronous>, transform_indices = @transform_14, window_bounds = array<i64: 2, 1, 32>}, {pipeline_mode = #tpu.pipeline_mode<synchronous>, transform_indices = @transform_15, window_bounds = array<i64: 2, 32, 64>}, {pipeline_mode = #tpu.pipeline_mode<synchronous>, transform_indices = @transform_16, window_bounds = array<i64: 2, 1, 64>}, {pipeline_mode = #tpu.pipeline_mode<synchronous>, transform_indices = @transform_17, window_bounds = array<i64: 2, 64, 32>}, {pipeline_mode = #tpu.pipeline_mode<synchronous>, transform_indices = @transform_18, window_bounds = array<i64: 2, 1, 32>}, {transform_indices = @transform_19, window_bounds = array<i64: 1, 1, 32>}, {transform_indices = @transform_20, window_bounds = array<i64: 1, 1, 17>}]} {
    %c0 = arith.constant 0 : index
    %c0_0 = arith.constant 0 : index
    %0 = vector.load %arg2[%c0, %c0_0] : memref<1x32xf32, #tpu.memory_space<vmem>>, vector<1x32xf32>
    %c0_1 = arith.constant 0 : index
    %c0_2 = arith.constant 0 : index
    %1 = vector.load %arg3[%c0_1, %c0_2] : memref<17x32xf32, #tpu.memory_space<vmem>>, vector<1x32xf32>
    %2 = arith.addf %0, %1 : vector<1x32xf32>
    %c0_3 = arith.constant 0 : index
    %c0_4 = arith.constant 0 : index
    %3 = vector.load %arg22[%c0_3, %c0_4] : memref<17x32xf32, #tpu.memory_space<vmem>>, vector<1x32xf32>
    tpu.vector_store %arg22[%c0_3, %c0_4], %2 {strides = array<i32>} : memref<17x32xf32, #tpu.memory_space<vmem>>, vector<1x32xf32>,
    %c0_5 = arith.constant 0 : index
    %c0_6 = arith.constant 0 : index
    %c0_7 = arith.constant 0 : index
    %4 = vector.load %arg1[%c0_5, %c0_6, %c0_7] : memref<1x16x32xf32, #tpu.memory_space<vmem>>, vector<1x16x32xf32>
    %5 = vector.shape_cast %4 : vector<1x16x32xf32> to vector<16x32xf32>
    %c1 = arith.constant 1 : index
    %c0_8 = arith.constant 0 : index
    %6 = vector.load %arg3[%c1, %c0_8] : memref<17x32xf32, #tpu.memory_space<vmem>>, vector<16x32xf32>
    %7 = arith.addf %5, %6 : vector<16x32xf32>
    %c1_9 = arith.constant 1 : index
    %c0_10 = arith.constant 0 : index
    %8 = vector.load %arg22[%c1_9, %c0_10] : memref<17x32xf32, #tpu.memory_space<vmem>>, vector<16x32xf32>
    tpu.vector_store %arg22[%c1_9, %c0_10], %7 {strides = array<i32>} : memref<17x32xf32, #tpu.memory_space<vmem>>, vector<16x32xf32>,
    %c0_11 = arith.constant 0 : index
    %c0_12 = arith.constant 0 : index
    %9 = vector.load %arg22[%c0_11, %c0_12] : memref<17x32xf32, #tpu.memory_space<vmem>>, vector<17x32xf32>
    %cst = arith.constant 0.000000e+00 : f32
    %10 = vector.broadcast %cst : f32 to vector<1x17xf32>
    %c0_13 = arith.constant 0 : index
    %c0_14 = arith.constant 0 : index
    %c0_15 = arith.constant 0 : index
    %11 = vector.load %arg4[%c0_13, %c0_14, %c0_15] : memref<2x1x32xf32, #tpu.memory_space<vmem>>, vector<1x1x32xf32>
    %12 = vector.shape_cast %11 : vector<1x1x32xf32> to vector<1x32xf32>
    %c0_16 = arith.constant 0 : index
    %c0_17 = arith.constant 0 : index
    %c0_18 = arith.constant 0 : index
    %13 = vector.load %arg5[%c0_16, %c0_17, %c0_18] : memref<2x1x32xf32, #tpu.memory_space<vmem>>, vector<1x1x32xf32>
    %14 = vector.shape_cast %13 : vector<1x1x32xf32> to vector<1x32xf32>
    %cst_19 = arith.constant dense<0.000000e+00> : vector<17xf32>
    %15 = vector.multi_reduction <add>, %9, %cst_19 [1] : vector<17x32xf32> to vector<17xf32>
    %16 = vector.shape_cast %15 : vector<17xf32> to vector<17x1xf32>
    %cst_20 = arith.constant 3.200000e+01 : f32
    %17 = vector.broadcast %cst_20 : f32 to vector<17x1xf32>
    %18 = arith.divf %16, %17 : vector<17x1xf32>
    %19 = vector.broadcast %18 : vector<17x1xf32> to vector<17x32xf32>
    %20 = arith.subf %9, %19 : vector<17x32xf32>
    %21 = arith.mulf %20, %20 : vector<17x32xf32>
    %cst_21 = arith.constant dense<0.000000e+00> : vector<17xf32>
    %22 = vector.multi_reduction <add>, %21, %cst_21 [1] : vector<17x32xf32> to vector<17xf32>
    %23 = vector.shape_cast %22 : vector<17xf32> to vector<17x1xf32>
    %cst_22 = arith.constant 3.200000e+01 : f32
    %24 = vector.broadcast %cst_22 : f32 to vector<17x1xf32>
    %25 = arith.divf %23, %24 : vector<17x1xf32>
    %26 = vector.broadcast %18 : vector<17x1xf32> to vector<17x32xf32>
    %27 = arith.subf %9, %26 : vector<17x32xf32>
    %cst_23 = arith.constant 9.99999974E-6 : f32
    %28 = vector.broadcast %cst_23 : f32 to vector<17x1xf32>
    %29 = arith.addf %25, %28 : vector<17x1xf32>
    %30 = math.rsqrt %29 : vector<17x1xf32>
    %31 = vector.broadcast %30 : vector<17x1xf32> to vector<17x32xf32>
    %32 = arith.mulf %27, %31 : vector<17x32xf32>
    %33 = vector.broadcast %12 : vector<1x32xf32> to vector<17x32xf32>
    %34 = arith.mulf %32, %33 : vector<17x32xf32>
    %35 = vector.broadcast %14 : vector<1x32xf32> to vector<17x32xf32>
    %36 = arith.addf %34, %35 : vector<17x32xf32>
    %cst_24 = arith.constant 0.000000e+00 : f32
    %37 = vector.broadcast %cst_24 : f32 to vector<17x32xf32>
    %c0_25 = arith.constant 0 : index
    %c0_26 = arith.constant 0 : index
    %c0_27 = arith.constant 0 : index
    %38 = vector.load %arg6[%c0_25, %c0_26, %c0_27] : memref<8x32x8xbf16, #tpu.memory_space<vmem>>, vector<1x32x8xbf16>
    %39 = vector.shape_cast %38 : vector<1x32x8xbf16> to vector<32x8xbf16>
    %40 = arith.truncf %36 : vector<17x32xf32> to vector<17x32xbf16>
    %cst_28 = arith.constant dense<0.000000e+00> : vector<17x8xf32>
    %41 = tpu.matmul %40, %39, %cst_28 {dimension_numbers = #tpu.dot_dimension_numbers<[1], [0], [0], [1], [0, 0, 1, 1], [], []>} : vector<17x32xbf16>, vector<32x8xbf16>, vector<17x8xf32> -> vector<17x8xf32>
    %c0_29 = arith.constant 0 : index
    %c0_30 = arith.constant 0 : index
    %c0_31 = arith.constant 0 : index
    %42 = vector.load %arg7[%c0_29, %c0_30, %c0_31] : memref<8x1x8xf32, #tpu.memory_space<vmem>>, vector<1x1x8xf32>
    %43 = vector.shape_cast %42 : vector<1x1x8xf32> to vector<1x8xf32>
    %44 = vector.broadcast %43 : vector<1x8xf32> to vector<17x8xf32>
    %45 = arith.addf %41, %44 : vector<17x8xf32>
    %c0_32 = arith.constant 0 : index
    %c0_33 = arith.constant 0 : index
    %c0_34 = arith.constant 0 : index
    %46 = vector.load %arg8[%c0_32, %c0_33, %c0_34] : memref<8x32x8xbf16, #tpu.memory_space<vmem>>, vector<1x32x8xbf16>
    %47 = vector.shape_cast %46 : vector<1x32x8xbf16> to vector<32x8xbf16>
    %48 = arith.truncf %36 : vector<17x32xf32> to vector<17x32xbf16>
    %cst_35 = arith.constant dense<0.000000e+00> : vector<17x8xf32>
    %49 = tpu.matmul %48, %47, %cst_35 {dimension_numbers = #tpu.dot_dimension_numbers<[1], [0], [0], [1], [0, 0, 1, 1], [], []>} : vector<17x32xbf16>, vector<32x8xbf16>, vector<17x8xf32> -> vector<17x8xf32>
    %c0_36 = arith.constant 0 : index
    %c0_37 = arith.constant 0 : index
    %c0_38 = arith.constant 0 : index
    %50 = vector.load %arg9[%c0_36, %c0_37, %c0_38] : memref<8x1x8xf32, #tpu.memory_space<vmem>>, vector<1x1x8xf32>
    %51 = vector.shape_cast %50 : vector<1x1x8xf32> to vector<1x8xf32>
    %52 = vector.broadcast %51 : vector<1x8xf32> to vector<17x8xf32>
    %53 = arith.addf %49, %52 : vector<17x8xf32>
    %c0_39 = arith.constant 0 : index
    %c0_40 = arith.constant 0 : index
    %c0_41 = arith.constant 0 : index
    %54 = vector.load %arg10[%c0_39, %c0_40, %c0_41] : memref<8x32x8xbf16, #tpu.memory_space<vmem>>, vector<1x32x8xbf16>
    %55 = vector.shape_cast %54 : vector<1x32x8xbf16> to vector<32x8xbf16>
    %56 = arith.truncf %36 : vector<17x32xf32> to vector<17x32xbf16>
    %cst_42 = arith.constant dense<0.000000e+00> : vector<17x8xf32>
    %57 = tpu.matmul %56, %55, %cst_42 {dimension_numbers = #tpu.dot_dimension_numbers<[1], [0], [0], [1], [0, 0, 1, 1], [], []>} : vector<17x32xbf16>, vector<32x8xbf16>, vector<17x8xf32> -> vector<17x8xf32>
    %c0_43 = arith.constant 0 : index
    %c0_44 = arith.constant 0 : index
    %c0_45 = arith.constant 0 : index
    %58 = vector.load %arg11[%c0_43, %c0_44, %c0_45] : memref<8x1x8xf32, #tpu.memory_space<vmem>>, vector<1x1x8xf32>
    %59 = vector.shape_cast %58 : vector<1x1x8xf32> to vector<1x8xf32>
    %60 = vector.broadcast %59 : vector<1x8xf32> to vector<17x8xf32>
    %61 = arith.addf %57, %60 : vector<17x8xf32>
    %62 = arith.truncf %45 : vector<17x8xf32> to vector<17x8xbf16>
    %63 = arith.truncf %53 : vector<17x8xf32> to vector<17x8xbf16>
    %cst_46 = arith.constant dense<0.000000e+00> : vector<17x17xf32>
    %64 = tpu.matmul %62, %63, %cst_46 {dimension_numbers = #tpu.dot_dimension_numbers<[1], [1], [0], [0], [0, 0, 1, 0], [], []>} : vector<17x8xbf16>, vector<17x8xbf16>, vector<17x17xf32> -> vector<17x17xf32>
    %cst_47 = arith.constant 0.353553385 : f32
    %65 = vector.broadcast %cst_47 : f32 to vector<17x17xf32>
    %66 = arith.mulf %64, %65 : vector<17x17xf32>
    %cst_48 = arith.constant dense<0xFF800000> : vector<17xf32>
    %67 = vector.multi_reduction <maximumf>, %66, %cst_48 [1] : vector<17x17xf32> to vector<17xf32>
    %68 = vector.shape_cast %67 : vector<17xf32> to vector<17x1xf32>
    %69 = vector.broadcast %68 : vector<17x1xf32> to vector<17x17xf32>
    %70 = arith.subf %66, %69 : vector<17x17xf32>
    %71 = math.exp %70 : vector<17x17xf32>
    %cst_49 = arith.constant dense<0.000000e+00> : vector<17xf32>
    %72 = vector.multi_reduction <add>, %71, %cst_49 [1] : vector<17x17xf32> to vector<17xf32>
    %73 = vector.shape_cast %72 : vector<17xf32> to vector<17x1xf32>
    %74 = vector.broadcast %73 : vector<17x1xf32> to vector<17x17xf32>
    %75 = arith.divf %71, %74 : vector<17x17xf32>
    %76 = arith.truncf %75 : vector<17x17xf32> to vector<17x17xbf16>
    %77 = arith.truncf %61 : vector<17x8xf32> to vector<17x8xbf16>
    %cst_50 = arith.constant dense<0.000000e+00> : vector<17x8xf32>
    %78 = tpu.matmul %76, %77, %cst_50 {dimension_numbers = #tpu.dot_dimension_numbers<[1], [0], [0], [1], [0, 0, 1, 1], [], []>} : vector<17x17xbf16>, vector<17x8xbf16>, vector<17x8xf32> -> vector<17x8xf32>
    %c0_51 = arith.constant 0 : index
    %c0_52 = arith.constant 0 : index
    %c0_53 = arith.constant 0 : index
    %79 = vector.load %arg12[%c0_51, %c0_52, %c0_53] : memref<8x8x32xbf16, #tpu.memory_space<vmem>>, vector<1x8x32xbf16>
    %80 = vector.shape_cast %79 : vector<1x8x32xbf16> to vector<8x32xbf16>
    %81 = arith.truncf %78 : vector<17x8xf32> to vector<17x8xbf16>
    %cst_54 = arith.constant dense<0.000000e+00> : vector<17x32xf32>
    %82 = tpu.matmul %81, %80, %cst_54 {dimension_numbers = #tpu.dot_dimension_numbers<[1], [0], [0], [1], [0, 0, 1, 1], [], []>} : vector<17x8xbf16>, vector<8x32xbf16>, vector<17x32xf32> -> vector<17x32xf32>
    %83 = arith.addf %37, %82 : vector<17x32xf32>
    %c1_55 = arith.constant 1 : index
    %c0_56 = arith.constant 0 : index
    %c0_57 = arith.constant 0 : index
    %84 = vector.load %arg6[%c1_55, %c0_56, %c0_57] : memref<8x32x8xbf16, #tpu.memory_space<vmem>>, vector<1x32x8xbf16>
    %85 = vector.shape_cast %84 : vector<1x32x8xbf16> to vector<32x8xbf16>
    %86 = arith.truncf %36 : vector<17x32xf32> to vector<17x32xbf16>
    %cst_58 = arith.constant dense<0.000000e+00> : vector<17x8xf32>
    %87 = tpu.matmul %86, %85, %cst_58 {dimension_numbers = #tpu.dot_dimension_numbers<[1], [0], [0], [1], [0, 0, 1, 1], [], []>} : vector<17x32xbf16>, vector<32x8xbf16>, vector<17x8xf32> -> vector<17x8xf32>
    %c1_59 = arith.constant 1 : index
    %c0_60 = arith.constant 0 : index
    %c0_61 = arith.constant 0 : index
    %88 = vector.load %arg7[%c1_59, %c0_60, %c0_61] : memref<8x1x8xf32, #tpu.memory_space<vmem>>, vector<1x1x8xf32>
    %89 = vector.shape_cast %88 : vector<1x1x8xf32> to vector<1x8xf32>
    %90 = vector.broadcast %89 : vector<1x8xf32> to vector<17x8xf32>
    %91 = arith.addf %87, %90 : vector<17x8xf32>
    %c1_62 = arith.constant 1 : index
    %c0_63 = arith.constant 0 : index
    %c0_64 = arith.constant 0 : index
    %92 = vector.load %arg8[%c1_62, %c0_63, %c0_64] : memref<8x32x8xbf16, #tpu.memory_space<vmem>>, vector<1x32x8xbf16>
    %93 = vector.shape_cast %92 : vector<1x32x8xbf16> to vector<32x8xbf16>
    %94 = arith.truncf %36 : vector<17x32xf32> to vector<17x32xbf16>
    %cst_65 = arith.constant dense<0.000000e+00> : vector<17x8xf32>
    %95 = tpu.matmul %94, %93, %cst_65 {dimension_numbers = #tpu.dot_dimension_numbers<[1], [0], [0], [1], [0, 0, 1, 1], [], []>} : vector<17x32xbf16>, vector<32x8xbf16>, vector<17x8xf32> -> vector<17x8xf32>
    %c1_66 = arith.constant 1 : index
    %c0_67 = arith.constant 0 : index
    %c0_68 = arith.constant 0 : index
    %96 = vector.load %arg9[%c1_66, %c0_67, %c0_68] : memref<8x1x8xf32, #tpu.memory_space<vmem>>, vector<1x1x8xf32>
    %97 = vector.shape_cast %96 : vector<1x1x8xf32> to vector<1x8xf32>
    %98 = vector.broadcast %97 : vector<1x8xf32> to vector<17x8xf32>
    %99 = arith.addf %95, %98 : vector<17x8xf32>
    %c1_69 = arith.constant 1 : index
    %c0_70 = arith.constant 0 : index
    %c0_71 = arith.constant 0 : index
    %100 = vector.load %arg10[%c1_69, %c0_70, %c0_71] : memref<8x32x8xbf16, #tpu.memory_space<vmem>>, vector<1x32x8xbf16>
    %101 = vector.shape_cast %100 : vector<1x32x8xbf16> to vector<32x8xbf16>
    %102 = arith.truncf %36 : vector<17x32xf32> to vector<17x32xbf16>
    %cst_72 = arith.constant dense<0.000000e+00> : vector<17x8xf32>
    %103 = tpu.matmul %102, %101, %cst_72 {dimension_numbers = #tpu.dot_dimension_numbers<[1], [0], [0], [1], [0, 0, 1, 1], [], []>} : vector<17x32xbf16>, vector<32x8xbf16>, vector<17x8xf32> -> vector<17x8xf32>
    %c1_73 = arith.constant 1 : index
    %c0_74 = arith.constant 0 : index
    %c0_75 = arith.constant 0 : index
    %104 = vector.load %arg11[%c1_73, %c0_74, %c0_75] : memref<8x1x8xf32, #tpu.memory_space<vmem>>, vector<1x1x8xf32>
    %105 = vector.shape_cast %104 : vector<1x1x8xf32> to vector<1x8xf32>
    %106 = vector.broadcast %105 : vector<1x8xf32> to vector<17x8xf32>
    %107 = arith.addf %103, %106 : vector<17x8xf32>
    %108 = arith.truncf %91 : vector<17x8xf32> to vector<17x8xbf16>
    %109 = arith.truncf %99 : vector<17x8xf32> to vector<17x8xbf16>
    %cst_76 = arith.constant dense<0.000000e+00> : vector<17x17xf32>
    %110 = tpu.matmul %108, %109, %cst_76 {dimension_numbers = #tpu.dot_dimension_numbers<[1], [1], [0], [0], [0, 0, 1, 0], [], []>} : vector<17x8xbf16>, vector<17x8xbf16>, vector<17x17xf32> -> vector<17x17xf32>
    %cst_77 = arith.constant 0.353553385 : f32
    %111 = vector.broadcast %cst_77 : f32 to vector<17x17xf32>
    %112 = arith.mulf %110, %111 : vector<17x17xf32>
    %cst_78 = arith.constant dense<0xFF800000> : vector<17xf32>
    %113 = vector.multi_reduction <maximumf>, %112, %cst_78 [1] : vector<17x17xf32> to vector<17xf32>
    %114 = vector.shape_cast %113 : vector<17xf32> to vector<17x1xf32>
    %115 = vector.broadcast %114 : vector<17x1xf32> to vector<17x17xf32>
    %116 = arith.subf %112, %115 : vector<17x17xf32>
    %117 = math.exp %116 : vector<17x17xf32>
    %cst_79 = arith.constant dense<0.000000e+00> : vector<17xf32>
    %118 = vector.multi_reduction <add>, %117, %cst_79 [1] : vector<17x17xf32> to vector<17xf32>
    %119 = vector.shape_cast %118 : vector<17xf32> to vector<17x1xf32>
    %120 = vector.broadcast %119 : vector<17x1xf32> to vector<17x17xf32>
    %121 = arith.divf %117, %120 : vector<17x17xf32>
    %122 = arith.truncf %121 : vector<17x17xf32> to vector<17x17xbf16>
    %123 = arith.truncf %107 : vector<17x8xf32> to vector<17x8xbf16>
    %cst_80 = arith.constant dense<0.000000e+00> : vector<17x8xf32>
    %124 = tpu.matmul %122, %123, %cst_80 {dimension_numbers = #tpu.dot_dimension_numbers<[1], [0], [0], [1], [0, 0, 1, 1], [], []>} : vector<17x17xbf16>, vector<17x8xbf16>, vector<17x8xf32> -> vector<17x8xf32>
    %c1_81 = arith.constant 1 : index
    %c0_82 = arith.constant 0 : index
    %c0_83 = arith.constant 0 : index
    %125 = vector.load %arg12[%c1_81, %c0_82, %c0_83] : memref<8x8x32xbf16, #tpu.memory_space<vmem>>, vector<1x8x32xbf16>
    %126 = vector.shape_cast %125 : vector<1x8x32xbf16> to vector<8x32xbf16>
    %127 = arith.truncf %124 : vector<17x8xf32> to vector<17x8xbf16>
    %cst_84 = arith.constant dense<0.000000e+00> : vector<17x32xf32>
    %128 = tpu.matmul %127, %126, %cst_84 {dimension_numbers = #tpu.dot_dimension_numbers<[1], [0], [0], [1], [0, 0, 1, 1], [], []>} : vector<17x8xbf16>, vector<8x32xbf16>, vector<17x32xf32> -> vector<17x32xf32>
    %129 = arith.addf %83, %128 : vector<17x32xf32>
    %c2 = arith.constant 2 : index
    %c0_85 = arith.constant 0 : index
    %c0_86 = arith.constant 0 : index
    %130 = vector.load %arg6[%c2, %c0_85, %c0_86] : memref<8x32x8xbf16, #tpu.memory_space<vmem>>, vector<1x32x8xbf16>
    %131 = vector.shape_cast %130 : vector<1x32x8xbf16> to vector<32x8xbf16>
    %132 = arith.truncf %36 : vector<17x32xf32> to vector<17x32xbf16>
    %cst_87 = arith.constant dense<0.000000e+00> : vector<17x8xf32>
    %133 = tpu.matmul %132, %131, %cst_87 {dimension_numbers = #tpu.dot_dimension_numbers<[1], [0], [0], [1], [0, 0, 1, 1], [], []>} : vector<17x32xbf16>, vector<32x8xbf16>, vector<17x8xf32> -> vector<17x8xf32>
    %c2_88 = arith.constant 2 : index
    %c0_89 = arith.constant 0 : index
    %c0_90 = arith.constant 0 : index
    %134 = vector.load %arg7[%c2_88, %c0_89, %c0_90] : memref<8x1x8xf32, #tpu.memory_space<vmem>>, vector<1x1x8xf32>
    %135 = vector.shape_cast %134 : vector<1x1x8xf32> to vector<1x8xf32>
    %136 = vector.broadcast %135 : vector<1x8xf32> to vector<17x8xf32>
    %137 = arith.addf %133, %136 : vector<17x8xf32>
    %c2_91 = arith.constant 2 : index
    %c0_92 = arith.constant 0 : index
    %c0_93 = arith.constant 0 : index
    %138 = vector.load %arg8[%c2_91, %c0_92, %c0_93] : memref<8x32x8xbf16, #tpu.memory_space<vmem>>, vector<1x32x8xbf16>
    %139 = vector.shape_cast %138 : vector<1x32x8xbf16> to vector<32x8xbf16>
    %140 = arith.truncf %36 : vector<17x32xf32> to vector<17x32xbf16>
    %cst_94 = arith.constant dense<0.000000e+00> : vector<17x8xf32>
    %141 = tpu.matmul %140, %139, %cst_94 {dimension_numbers = #tpu.dot_dimension_numbers<[1], [0], [0], [1], [0, 0, 1, 1], [], []>} : vector<17x32xbf16>, vector<32x8xbf16>, vector<17x8xf32> -> vector<17x8xf32>
    %c2_95 = arith.constant 2 : index
    %c0_96 = arith.constant 0 : index
    %c0_97 = arith.constant 0 : index
    %142 = vector.load %arg9[%c2_95, %c0_96, %c0_97] : memref<8x1x8xf32, #tpu.memory_space<vmem>>, vector<1x1x8xf32>
    %143 = vector.shape_cast %142 : vector<1x1x8xf32> to vector<1x8xf32>
    %144 = vector.broadcast %143 : vector<1x8xf32> to vector<17x8xf32>
    %145 = arith.addf %141, %144 : vector<17x8xf32>
    %c2_98 = arith.constant 2 : index
    %c0_99 = arith.constant 0 : index
    %c0_100 = arith.constant 0 : index
    %146 = vector.load %arg10[%c2_98, %c0_99, %c0_100] : memref<8x32x8xbf16, #tpu.memory_space<vmem>>, vector<1x32x8xbf16>
    %147 = vector.shape_cast %146 : vector<1x32x8xbf16> to vector<32x8xbf16>
    %148 = arith.truncf %36 : vector<17x32xf32> to vector<17x32xbf16>
    %cst_101 = arith.constant dense<0.000000e+00> : vector<17x8xf32>
    %149 = tpu.matmul %148, %147, %cst_101 {dimension_numbers = #tpu.dot_dimension_numbers<[1], [0], [0], [1], [0, 0, 1, 1], [], []>} : vector<17x32xbf16>, vector<32x8xbf16>, vector<17x8xf32> -> vector<17x8xf32>
    %c2_102 = arith.constant 2 : index
    %c0_103 = arith.constant 0 : index
    %c0_104 = arith.constant 0 : index
    %150 = vector.load %arg11[%c2_102, %c0_103, %c0_104] : memref<8x1x8xf32, #tpu.memory_space<vmem>>, vector<1x1x8xf32>
    %151 = vector.shape_cast %150 : vector<1x1x8xf32> to vector<1x8xf32>
    %152 = vector.broadcast %151 : vector<1x8xf32> to vector<17x8xf32>
    %153 = arith.addf %149, %152 : vector<17x8xf32>
    %154 = arith.truncf %137 : vector<17x8xf32> to vector<17x8xbf16>
    %155 = arith.truncf %145 : vector<17x8xf32> to vector<17x8xbf16>
    %cst_105 = arith.constant dense<0.000000e+00> : vector<17x17xf32>
    %156 = tpu.matmul %154, %155, %cst_105 {dimension_numbers = #tpu.dot_dimension_numbers<[1], [1], [0], [0], [0, 0, 1, 0], [], []>} : vector<17x8xbf16>, vector<17x8xbf16>, vector<17x17xf32> -> vector<17x17xf32>
    %cst_106 = arith.constant 0.353553385 : f32
    %157 = vector.broadcast %cst_106 : f32 to vector<17x17xf32>
    %158 = arith.mulf %156, %157 : vector<17x17xf32>
    %cst_107 = arith.constant dense<0xFF800000> : vector<17xf32>
    %159 = vector.multi_reduction <maximumf>, %158, %cst_107 [1] : vector<17x17xf32> to vector<17xf32>
    %160 = vector.shape_cast %159 : vector<17xf32> to vector<17x1xf32>
    %161 = vector.broadcast %160 : vector<17x1xf32> to vector<17x17xf32>
    %162 = arith.subf %158, %161 : vector<17x17xf32>
    %163 = math.exp %162 : vector<17x17xf32>
    %cst_108 = arith.constant dense<0.000000e+00> : vector<17xf32>
    %164 = vector.multi_reduction <add>, %163, %cst_108 [1] : vector<17x17xf32> to vector<17xf32>
    %165 = vector.shape_cast %164 : vector<17xf32> to vector<17x1xf32>
    %166 = vector.broadcast %165 : vector<17x1xf32> to vector<17x17xf32>
    %167 = arith.divf %163, %166 : vector<17x17xf32>
    %168 = arith.truncf %167 : vector<17x17xf32> to vector<17x17xbf16>
    %169 = arith.truncf %153 : vector<17x8xf32> to vector<17x8xbf16>
    %cst_109 = arith.constant dense<0.000000e+00> : vector<17x8xf32>
    %170 = tpu.matmul %168, %169, %cst_109 {dimension_numbers = #tpu.dot_dimension_numbers<[1], [0], [0], [1], [0, 0, 1, 1], [], []>} : vector<17x17xbf16>, vector<17x8xbf16>, vector<17x8xf32> -> vector<17x8xf32>
    %c2_110 = arith.constant 2 : index
    %c0_111 = arith.constant 0 : index
    %c0_112 = arith.constant 0 : index
    %171 = vector.load %arg12[%c2_110, %c0_111, %c0_112] : memref<8x8x32xbf16, #tpu.memory_space<vmem>>, vector<1x8x32xbf16>
    %172 = vector.shape_cast %171 : vector<1x8x32xbf16> to vector<8x32xbf16>
    %173 = arith.truncf %170 : vector<17x8xf32> to vector<17x8xbf16>
    %cst_113 = arith.constant dense<0.000000e+00> : vector<17x32xf32>
    %174 = tpu.matmul %173, %172, %cst_113 {dimension_numbers = #tpu.dot_dimension_numbers<[1], [0], [0], [1], [0, 0, 1, 1], [], []>} : vector<17x8xbf16>, vector<8x32xbf16>, vector<17x32xf32> -> vector<17x32xf32>
    %175 = arith.addf %129, %174 : vector<17x32xf32>
    %c3 = arith.constant 3 : index
    %c0_114 = arith.constant 0 : index
    %c0_115 = arith.constant 0 : index
    %176 = vector.load %arg6[%c3, %c0_114, %c0_115] : memref<8x32x8xbf16, #tpu.memory_space<vmem>>, vector<1x32x8xbf16>
    %177 = vector.shape_cast %176 : vector<1x32x8xbf16> to vector<32x8xbf16>
    %178 = arith.truncf %36 : vector<17x32xf32> to vector<17x32xbf16>
    %cst_116 = arith.constant dense<0.000000e+00> : vector<17x8xf32>
    %179 = tpu.matmul %178, %177, %cst_116 {dimension_numbers = #tpu.dot_dimension_numbers<[1], [0], [0], [1], [0, 0, 1, 1], [], []>} : vector<17x32xbf16>, vector<32x8xbf16>, vector<17x8xf32> -> vector<17x8xf32>
    %c3_117 = arith.constant 3 : index
    %c0_118 = arith.constant 0 : index
    %c0_119 = arith.constant 0 : index
    %180 = vector.load %arg7[%c3_117, %c0_118, %c0_119] : memref<8x1x8xf32, #tpu.memory_space<vmem>>, vector<1x1x8xf32>
    %181 = vector.shape_cast %180 : vector<1x1x8xf32> to vector<1x8xf32>
    %182 = vector.broadcast %181 : vector<1x8xf32> to vector<17x8xf32>
    %183 = arith.addf %179, %182 : vector<17x8xf32>
    %c3_120 = arith.constant 3 : index
    %c0_121 = arith.constant 0 : index
    %c0_122 = arith.constant 0 : index
    %184 = vector.load %arg8[%c3_120, %c0_121, %c0_122] : memref<8x32x8xbf16, #tpu.memory_space<vmem>>, vector<1x32x8xbf16>
    %185 = vector.shape_cast %184 : vector<1x32x8xbf16> to vector<32x8xbf16>
    %186 = arith.truncf %36 : vector<17x32xf32> to vector<17x32xbf16>
    %cst_123 = arith.constant dense<0.000000e+00> : vector<17x8xf32>
    %187 = tpu.matmul %186, %185, %cst_123 {dimension_numbers = #tpu.dot_dimension_numbers<[1], [0], [0], [1], [0, 0, 1, 1], [], []>} : vector<17x32xbf16>, vector<32x8xbf16>, vector<17x8xf32> -> vector<17x8xf32>
    %c3_124 = arith.constant 3 : index
    %c0_125 = arith.constant 0 : index
    %c0_126 = arith.constant 0 : index
    %188 = vector.load %arg9[%c3_124, %c0_125, %c0_126] : memref<8x1x8xf32, #tpu.memory_space<vmem>>, vector<1x1x8xf32>
    %189 = vector.shape_cast %188 : vector<1x1x8xf32> to vector<1x8xf32>
    %190 = vector.broadcast %189 : vector<1x8xf32> to vector<17x8xf32>
    %191 = arith.addf %187, %190 : vector<17x8xf32>
    %c3_127 = arith.constant 3 : index
    %c0_128 = arith.constant 0 : index
    %c0_129 = arith.constant 0 : index
    %192 = vector.load %arg10[%c3_127, %c0_128, %c0_129] : memref<8x32x8xbf16, #tpu.memory_space<vmem>>, vector<1x32x8xbf16>
    %193 = vector.shape_cast %192 : vector<1x32x8xbf16> to vector<32x8xbf16>
    %194 = arith.truncf %36 : vector<17x32xf32> to vector<17x32xbf16>
    %cst_130 = arith.constant dense<0.000000e+00> : vector<17x8xf32>
    %195 = tpu.matmul %194, %193, %cst_130 {dimension_numbers = #tpu.dot_dimension_numbers<[1], [0], [0], [1], [0, 0, 1, 1], [], []>} : vector<17x32xbf16>, vector<32x8xbf16>, vector<17x8xf32> -> vector<17x8xf32>
    %c3_131 = arith.constant 3 : index
    %c0_132 = arith.constant 0 : index
    %c0_133 = arith.constant 0 : index
    %196 = vector.load %arg11[%c3_131, %c0_132, %c0_133] : memref<8x1x8xf32, #tpu.memory_space<vmem>>, vector<1x1x8xf32>
    %197 = vector.shape_cast %196 : vector<1x1x8xf32> to vector<1x8xf32>
    %198 = vector.broadcast %197 : vector<1x8xf32> to vector<17x8xf32>
    %199 = arith.addf %195, %198 : vector<17x8xf32>
    %200 = arith.truncf %183 : vector<17x8xf32> to vector<17x8xbf16>
    %201 = arith.truncf %191 : vector<17x8xf32> to vector<17x8xbf16>
    %cst_134 = arith.constant dense<0.000000e+00> : vector<17x17xf32>
    %202 = tpu.matmul %200, %201, %cst_134 {dimension_numbers = #tpu.dot_dimension_numbers<[1], [1], [0], [0], [0, 0, 1, 0], [], []>} : vector<17x8xbf16>, vector<17x8xbf16>, vector<17x17xf32> -> vector<17x17xf32>
    %cst_135 = arith.constant 0.353553385 : f32
    %203 = vector.broadcast %cst_135 : f32 to vector<17x17xf32>
    %204 = arith.mulf %202, %203 : vector<17x17xf32>
    %cst_136 = arith.constant dense<0xFF800000> : vector<17xf32>
    %205 = vector.multi_reduction <maximumf>, %204, %cst_136 [1] : vector<17x17xf32> to vector<17xf32>
    %206 = vector.shape_cast %205 : vector<17xf32> to vector<17x1xf32>
    %207 = vector.broadcast %206 : vector<17x1xf32> to vector<17x17xf32>
    %208 = arith.subf %204, %207 : vector<17x17xf32>
    %209 = math.exp %208 : vector<17x17xf32>
    %cst_137 = arith.constant dense<0.000000e+00> : vector<17xf32>
    %210 = vector.multi_reduction <add>, %209, %cst_137 [1] : vector<17x17xf32> to vector<17xf32>
    %211 = vector.shape_cast %210 : vector<17xf32> to vector<17x1xf32>
    %212 = vector.broadcast %211 : vector<17x1xf32> to vector<17x17xf32>
    %213 = arith.divf %209, %212 : vector<17x17xf32>
    %214 = arith.truncf %213 : vector<17x17xf32> to vector<17x17xbf16>
    %215 = arith.truncf %199 : vector<17x8xf32> to vector<17x8xbf16>
    %cst_138 = arith.constant dense<0.000000e+00> : vector<17x8xf32>
    %216 = tpu.matmul %214, %215, %cst_138 {dimension_numbers = #tpu.dot_dimension_numbers<[1], [0], [0], [1], [0, 0, 1, 1], [], []>} : vector<17x17xbf16>, vector<17x8xbf16>, vector<17x8xf32> -> vector<17x8xf32>
    %c3_139 = arith.constant 3 : index
    %c0_140 = arith.constant 0 : index
    %c0_141 = arith.constant 0 : index
    %217 = vector.load %arg12[%c3_139, %c0_140, %c0_141] : memref<8x8x32xbf16, #tpu.memory_space<vmem>>, vector<1x8x32xbf16>
    %218 = vector.shape_cast %217 : vector<1x8x32xbf16> to vector<8x32xbf16>
    %219 = arith.truncf %216 : vector<17x8xf32> to vector<17x8xbf16>
    %cst_142 = arith.constant dense<0.000000e+00> : vector<17x32xf32>
    %220 = tpu.matmul %219, %218, %cst_142 {dimension_numbers = #tpu.dot_dimension_numbers<[1], [0], [0], [1], [0, 0, 1, 1], [], []>} : vector<17x8xbf16>, vector<8x32xbf16>, vector<17x32xf32> -> vector<17x32xf32>
    %221 = arith.addf %175, %220 : vector<17x32xf32>
    %222 = arith.addf %9, %221 : vector<17x32xf32>
    %c0_143 = arith.constant 0 : index
    %c0_144 = arith.constant 0 : index
    %c0_145 = arith.constant 0 : index
    %223 = vector.load %arg13[%c0_143, %c0_144, %c0_145] : memref<2x1x32xf32, #tpu.memory_space<vmem>>, vector<1x1x32xf32>
    %224 = vector.shape_cast %223 : vector<1x1x32xf32> to vector<1x32xf32>
    %225 = vector.broadcast %224 : vector<1x32xf32> to vector<17x32xf32>
    %226 = arith.addf %222, %225 : vector<17x32xf32>
    %c0_146 = arith.constant 0 : index
    %c0_147 = arith.constant 0 : index
    %c0_148 = arith.constant 0 : index
    %227 = vector.load %arg14[%c0_146, %c0_147, %c0_148] : memref<2x1x32xf32, #tpu.memory_space<vmem>>, vector<1x1x32xf32>
    %228 = vector.shape_cast %227 : vector<1x1x32xf32> to vector<1x32xf32>
    %c0_149 = arith.constant 0 : index
    %c0_150 = arith.constant 0 : index
    %c0_151 = arith.constant 0 : index
    %229 = vector.load %arg15[%c0_149, %c0_150, %c0_151] : memref<2x1x32xf32, #tpu.memory_space<vmem>>, vector<1x1x32xf32>
    %230 = vector.shape_cast %229 : vector<1x1x32xf32> to vector<1x32xf32>
    %cst_152 = arith.constant dense<0.000000e+00> : vector<17xf32>
    %231 = vector.multi_reduction <add>, %226, %cst_152 [1] : vector<17x32xf32> to vector<17xf32>
    %232 = vector.shape_cast %231 : vector<17xf32> to vector<17x1xf32>
    %cst_153 = arith.constant 3.200000e+01 : f32
    %233 = vector.broadcast %cst_153 : f32 to vector<17x1xf32>
    %234 = arith.divf %232, %233 : vector<17x1xf32>
    %235 = vector.broadcast %234 : vector<17x1xf32> to vector<17x32xf32>
    %236 = arith.subf %226, %235 : vector<17x32xf32>
    %237 = arith.mulf %236, %236 : vector<17x32xf32>
    %cst_154 = arith.constant dense<0.000000e+00> : vector<17xf32>
    %238 = vector.multi_reduction <add>, %237, %cst_154 [1] : vector<17x32xf32> to vector<17xf32>
    %239 = vector.shape_cast %238 : vector<17xf32> to vector<17x1xf32>
    %cst_155 = arith.constant 3.200000e+01 : f32
    %240 = vector.broadcast %cst_155 : f32 to vector<17x1xf32>
    %241 = arith.divf %239, %240 : vector<17x1xf32>
    %242 = vector.broadcast %234 : vector<17x1xf32> to vector<17x32xf32>
    %243 = arith.subf %226, %242 : vector<17x32xf32>
    %cst_156 = arith.constant 9.99999974E-6 : f32
    %244 = vector.broadcast %cst_156 : f32 to vector<17x1xf32>
    %245 = arith.addf %241, %244 : vector<17x1xf32>
    %246 = math.rsqrt %245 : vector<17x1xf32>
    %247 = vector.broadcast %246 : vector<17x1xf32> to vector<17x32xf32>
    %248 = arith.mulf %243, %247 : vector<17x32xf32>
    %249 = vector.broadcast %228 : vector<1x32xf32> to vector<17x32xf32>
    %250 = arith.mulf %248, %249 : vector<17x32xf32>
    %251 = vector.broadcast %230 : vector<1x32xf32> to vector<17x32xf32>
    %252 = arith.addf %250, %251 : vector<17x32xf32>
    %c0_157 = arith.constant 0 : index
    %c0_158 = arith.constant 0 : index
    %c0_159 = arith.constant 0 : index
    %253 = vector.load %arg16[%c0_157, %c0_158, %c0_159] : memref<2x32x64xbf16, #tpu.memory_space<vmem>>, vector<1x32x64xbf16>
    %254 = vector.shape_cast %253 : vector<1x32x64xbf16> to vector<32x64xbf16>
    %255 = arith.truncf %252 : vector<17x32xf32> to vector<17x32xbf16>
    %cst_160 = arith.constant dense<0.000000e+00> : vector<17x64xf32>
    %256 = tpu.matmul %255, %254, %cst_160 {dimension_numbers = #tpu.dot_dimension_numbers<[1], [0], [0], [1], [0, 0, 1, 1], [], []>} : vector<17x32xbf16>, vector<32x64xbf16>, vector<17x64xf32> -> vector<17x64xf32>
    %c0_161 = arith.constant 0 : index
    %c0_162 = arith.constant 0 : index
    %c0_163 = arith.constant 0 : index
    %257 = vector.load %arg17[%c0_161, %c0_162, %c0_163] : memref<2x1x64xf32, #tpu.memory_space<vmem>>, vector<1x1x64xf32>
    %258 = vector.shape_cast %257 : vector<1x1x64xf32> to vector<1x64xf32>
    %259 = vector.broadcast %258 : vector<1x64xf32> to vector<17x64xf32>
    %260 = arith.addf %256, %259 : vector<17x64xf32>
    %261 = arith.mulf %260, %260 : vector<17x64xf32>
    %262 = arith.mulf %260, %261 : vector<17x64xf32>
    %cst_164 = arith.constant 4.471500e-02 : f32
    %263 = vector.broadcast %cst_164 : f32 to vector<17x64xf32>
    %264 = arith.mulf %263, %262 : vector<17x64xf32>
    %265 = arith.addf %260, %264 : vector<17x64xf32>
    %cst_165 = arith.constant 0.797884583 : f32
    %266 = vector.broadcast %cst_165 : f32 to vector<17x64xf32>
    %267 = arith.mulf %266, %265 : vector<17x64xf32>
    %268 = math.tanh %267 : vector<17x64xf32>
    %cst_166 = arith.constant 1.000000e+00 : f32
    %269 = vector.broadcast %cst_166 : f32 to vector<17x64xf32>
    %270 = arith.addf %269, %268 : vector<17x64xf32>
    %cst_167 = arith.constant 5.000000e-01 : f32
    %271 = vector.broadcast %cst_167 : f32 to vector<17x64xf32>
    %272 = arith.mulf %271, %270 : vector<17x64xf32>
    %273 = arith.mulf %260, %272 : vector<17x64xf32>
    %c0_168 = arith.constant 0 : index
    %c0_169 = arith.constant 0 : index
    %c0_170 = arith.constant 0 : index
    %274 = vector.load %arg18[%c0_168, %c0_169, %c0_170] : memref<2x64x32xbf16, #tpu.memory_space<vmem>>, vector<1x64x32xbf16>
    %275 = vector.shape_cast %274 : vector<1x64x32xbf16> to vector<64x32xbf16>
    %276 = arith.truncf %273 : vector<17x64xf32> to vector<17x64xbf16>
    %cst_171 = arith.constant dense<0.000000e+00> : vector<17x32xf32>
    %277 = tpu.matmul %276, %275, %cst_171 {dimension_numbers = #tpu.dot_dimension_numbers<[1], [0], [0], [1], [0, 0, 1, 1], [], []>} : vector<17x64xbf16>, vector<64x32xbf16>, vector<17x32xf32> -> vector<17x32xf32>
    %278 = arith.addf %226, %277 : vector<17x32xf32>
    %c0_172 = arith.constant 0 : index
    %c0_173 = arith.constant 0 : index
    %c0_174 = arith.constant 0 : index
    %279 = vector.load %arg19[%c0_172, %c0_173, %c0_174] : memref<2x1x32xf32, #tpu.memory_space<vmem>>, vector<1x1x32xf32>
    %280 = vector.shape_cast %279 : vector<1x1x32xf32> to vector<1x32xf32>
    %281 = vector.broadcast %280 : vector<1x32xf32> to vector<17x32xf32>
    %282 = arith.addf %278, %281 : vector<17x32xf32>
    %c1_175 = arith.constant 1 : index
    %c0_176 = arith.constant 0 : index
    %c0_177 = arith.constant 0 : index
    %283 = vector.load %arg4[%c1_175, %c0_176, %c0_177] : memref<2x1x32xf32, #tpu.memory_space<vmem>>, vector<1x1x32xf32>
    %284 = vector.shape_cast %283 : vector<1x1x32xf32> to vector<1x32xf32>
    %c1_178 = arith.constant 1 : index
    %c0_179 = arith.constant 0 : index
    %c0_180 = arith.constant 0 : index
    %285 = vector.load %arg5[%c1_178, %c0_179, %c0_180] : memref<2x1x32xf32, #tpu.memory_space<vmem>>, vector<1x1x32xf32>
    %286 = vector.shape_cast %285 : vector<1x1x32xf32> to vector<1x32xf32>
    %cst_181 = arith.constant dense<0.000000e+00> : vector<17xf32>
    %287 = vector.multi_reduction <add>, %282, %cst_181 [1] : vector<17x32xf32> to vector<17xf32>
    %288 = vector.shape_cast %287 : vector<17xf32> to vector<17x1xf32>
    %cst_182 = arith.constant 3.200000e+01 : f32
    %289 = vector.broadcast %cst_182 : f32 to vector<17x1xf32>
    %290 = arith.divf %288, %289 : vector<17x1xf32>
    %291 = vector.broadcast %290 : vector<17x1xf32> to vector<17x32xf32>
    %292 = arith.subf %282, %291 : vector<17x32xf32>
    %293 = arith.mulf %292, %292 : vector<17x32xf32>
    %cst_183 = arith.constant dense<0.000000e+00> : vector<17xf32>
    %294 = vector.multi_reduction <add>, %293, %cst_183 [1] : vector<17x32xf32> to vector<17xf32>
    %295 = vector.shape_cast %294 : vector<17xf32> to vector<17x1xf32>
    %cst_184 = arith.constant 3.200000e+01 : f32
    %296 = vector.broadcast %cst_184 : f32 to vector<17x1xf32>
    %297 = arith.divf %295, %296 : vector<17x1xf32>
    %298 = vector.broadcast %290 : vector<17x1xf32> to vector<17x32xf32>
    %299 = arith.subf %282, %298 : vector<17x32xf32>
    %cst_185 = arith.constant 9.99999974E-6 : f32
    %300 = vector.broadcast %cst_185 : f32 to vector<17x1xf32>
    %301 = arith.addf %297, %300 : vector<17x1xf32>
    %302 = math.rsqrt %301 : vector<17x1xf32>
    %303 = vector.broadcast %302 : vector<17x1xf32> to vector<17x32xf32>
    %304 = arith.mulf %299, %303 : vector<17x32xf32>
    %305 = vector.broadcast %284 : vector<1x32xf32> to vector<17x32xf32>
    %306 = arith.mulf %304, %305 : vector<17x32xf32>
    %307 = vector.broadcast %286 : vector<1x32xf32> to vector<17x32xf32>
    %308 = arith.addf %306, %307 : vector<17x32xf32>
    %cst_186 = arith.constant 0.000000e+00 : f32
    %309 = vector.broadcast %cst_186 : f32 to vector<17x32xf32>
    %c4 = arith.constant 4 : index
    %c0_187 = arith.constant 0 : index
    %c0_188 = arith.constant 0 : index
    %310 = vector.load %arg6[%c4, %c0_187, %c0_188] : memref<8x32x8xbf16, #tpu.memory_space<vmem>>, vector<1x32x8xbf16>
    %311 = vector.shape_cast %310 : vector<1x32x8xbf16> to vector<32x8xbf16>
    %312 = arith.truncf %308 : vector<17x32xf32> to vector<17x32xbf16>
    %cst_189 = arith.constant dense<0.000000e+00> : vector<17x8xf32>
    %313 = tpu.matmul %312, %311, %cst_189 {dimension_numbers = #tpu.dot_dimension_numbers<[1], [0], [0], [1], [0, 0, 1, 1], [], []>} : vector<17x32xbf16>, vector<32x8xbf16>, vector<17x8xf32> -> vector<17x8xf32>
    %c4_190 = arith.constant 4 : index
    %c0_191 = arith.constant 0 : index
    %c0_192 = arith.constant 0 : index
    %314 = vector.load %arg7[%c4_190, %c0_191, %c0_192] : memref<8x1x8xf32, #tpu.memory_space<vmem>>, vector<1x1x8xf32>
    %315 = vector.shape_cast %314 : vector<1x1x8xf32> to vector<1x8xf32>
    %316 = vector.broadcast %315 : vector<1x8xf32> to vector<17x8xf32>
    %317 = arith.addf %313, %316 : vector<17x8xf32>
    %c4_193 = arith.constant 4 : index
    %c0_194 = arith.constant 0 : index
    %c0_195 = arith.constant 0 : index
    %318 = vector.load %arg8[%c4_193, %c0_194, %c0_195] : memref<8x32x8xbf16, #tpu.memory_space<vmem>>, vector<1x32x8xbf16>
    %319 = vector.shape_cast %318 : vector<1x32x8xbf16> to vector<32x8xbf16>
    %320 = arith.truncf %308 : vector<17x32xf32> to vector<17x32xbf16>
    %cst_196 = arith.constant dense<0.000000e+00> : vector<17x8xf32>
    %321 = tpu.matmul %320, %319, %cst_196 {dimension_numbers = #tpu.dot_dimension_numbers<[1], [0], [0], [1], [0, 0, 1, 1], [], []>} : vector<17x32xbf16>, vector<32x8xbf16>, vector<17x8xf32> -> vector<17x8xf32>
    %c4_197 = arith.constant 4 : index
    %c0_198 = arith.constant 0 : index
    %c0_199 = arith.constant 0 : index
    %322 = vector.load %arg9[%c4_197, %c0_198, %c0_199] : memref<8x1x8xf32, #tpu.memory_space<vmem>>, vector<1x1x8xf32>
    %323 = vector.shape_cast %322 : vector<1x1x8xf32> to vector<1x8xf32>
    %324 = vector.broadcast %323 : vector<1x8xf32> to vector<17x8xf32>
    %325 = arith.addf %321, %324 : vector<17x8xf32>
    %c4_200 = arith.constant 4 : index
    %c0_201 = arith.constant 0 : index
    %c0_202 = arith.constant 0 : index
    %326 = vector.load %arg10[%c4_200, %c0_201, %c0_202] : memref<8x32x8xbf16, #tpu.memory_space<vmem>>, vector<1x32x8xbf16>
    %327 = vector.shape_cast %326 : vector<1x32x8xbf16> to vector<32x8xbf16>
    %328 = arith.truncf %308 : vector<17x32xf32> to vector<17x32xbf16>
    %cst_203 = arith.constant dense<0.000000e+00> : vector<17x8xf32>
    %329 = tpu.matmul %328, %327, %cst_203 {dimension_numbers = #tpu.dot_dimension_numbers<[1], [0], [0], [1], [0, 0, 1, 1], [], []>} : vector<17x32xbf16>, vector<32x8xbf16>, vector<17x8xf32> -> vector<17x8xf32>
    %c4_204 = arith.constant 4 : index
    %c0_205 = arith.constant 0 : index
    %c0_206 = arith.constant 0 : index
    %330 = vector.load %arg11[%c4_204, %c0_205, %c0_206] : memref<8x1x8xf32, #tpu.memory_space<vmem>>, vector<1x1x8xf32>
    %331 = vector.shape_cast %330 : vector<1x1x8xf32> to vector<1x8xf32>
    %332 = vector.broadcast %331 : vector<1x8xf32> to vector<17x8xf32>
    %333 = arith.addf %329, %332 : vector<17x8xf32>
    %334 = arith.truncf %317 : vector<17x8xf32> to vector<17x8xbf16>
    %335 = arith.truncf %325 : vector<17x8xf32> to vector<17x8xbf16>
    %cst_207 = arith.constant dense<0.000000e+00> : vector<17x17xf32>
    %336 = tpu.matmul %334, %335, %cst_207 {dimension_numbers = #tpu.dot_dimension_numbers<[1], [1], [0], [0], [0, 0, 1, 0], [], []>} : vector<17x8xbf16>, vector<17x8xbf16>, vector<17x17xf32> -> vector<17x17xf32>
    %cst_208 = arith.constant 0.353553385 : f32
    %337 = vector.broadcast %cst_208 : f32 to vector<17x17xf32>
    %338 = arith.mulf %336, %337 : vector<17x17xf32>
    %cst_209 = arith.constant dense<0xFF800000> : vector<17xf32>
    %339 = vector.multi_reduction <maximumf>, %338, %cst_209 [1] : vector<17x17xf32> to vector<17xf32>
    %340 = vector.shape_cast %339 : vector<17xf32> to vector<17x1xf32>
    %341 = vector.broadcast %340 : vector<17x1xf32> to vector<17x17xf32>
    %342 = arith.subf %338, %341 : vector<17x17xf32>
    %343 = math.exp %342 : vector<17x17xf32>
    %cst_210 = arith.constant dense<0.000000e+00> : vector<17xf32>
    %344 = vector.multi_reduction <add>, %343, %cst_210 [1] : vector<17x17xf32> to vector<17xf32>
    %345 = vector.shape_cast %344 : vector<17xf32> to vector<17x1xf32>
    %346 = vector.broadcast %345 : vector<17x1xf32> to vector<17x17xf32>
    %347 = arith.divf %343, %346 : vector<17x17xf32>
    %348 = arith.truncf %347 : vector<17x17xf32> to vector<17x17xbf16>
    %349 = arith.truncf %333 : vector<17x8xf32> to vector<17x8xbf16>
    %cst_211 = arith.constant dense<0.000000e+00> : vector<17x8xf32>
    %350 = tpu.matmul %348, %349, %cst_211 {dimension_numbers = #tpu.dot_dimension_numbers<[1], [0], [0], [1], [0, 0, 1, 1], [], []>} : vector<17x17xbf16>, vector<17x8xbf16>, vector<17x8xf32> -> vector<17x8xf32>
    %c4_212 = arith.constant 4 : index
    %c0_213 = arith.constant 0 : index
    %c0_214 = arith.constant 0 : index
    %351 = vector.load %arg12[%c4_212, %c0_213, %c0_214] : memref<8x8x32xbf16, #tpu.memory_space<vmem>>, vector<1x8x32xbf16>
    %352 = vector.shape_cast %351 : vector<1x8x32xbf16> to vector<8x32xbf16>
    %353 = arith.truncf %350 : vector<17x8xf32> to vector<17x8xbf16>
    %cst_215 = arith.constant dense<0.000000e+00> : vector<17x32xf32>
    %354 = tpu.matmul %353, %352, %cst_215 {dimension_numbers = #tpu.dot_dimension_numbers<[1], [0], [0], [1], [0, 0, 1, 1], [], []>} : vector<17x8xbf16>, vector<8x32xbf16>, vector<17x32xf32> -> vector<17x32xf32>
    %355 = arith.addf %309, %354 : vector<17x32xf32>
    %356 = vector.extract_strided_slice %347 {offsets = [0, 0], sizes = [1, 17], strides = [1, 1]} : vector<17x17xf32> to vector<1x17xf32>
    %357 = arith.addf %10, %356 : vector<1x17xf32>
    %c5 = arith.constant 5 : index
    %c0_216 = arith.constant 0 : index
    %c0_217 = arith.constant 0 : index
    %358 = vector.load %arg6[%c5, %c0_216, %c0_217] : memref<8x32x8xbf16, #tpu.memory_space<vmem>>, vector<1x32x8xbf16>
    %359 = vector.shape_cast %358 : vector<1x32x8xbf16> to vector<32x8xbf16>
    %360 = arith.truncf %308 : vector<17x32xf32> to vector<17x32xbf16>
    %cst_218 = arith.constant dense<0.000000e+00> : vector<17x8xf32>
    %361 = tpu.matmul %360, %359, %cst_218 {dimension_numbers = #tpu.dot_dimension_numbers<[1], [0], [0], [1], [0, 0, 1, 1], [], []>} : vector<17x32xbf16>, vector<32x8xbf16>, vector<17x8xf32> -> vector<17x8xf32>
    %c5_219 = arith.constant 5 : index
    %c0_220 = arith.constant 0 : index
    %c0_221 = arith.constant 0 : index
    %362 = vector.load %arg7[%c5_219, %c0_220, %c0_221] : memref<8x1x8xf32, #tpu.memory_space<vmem>>, vector<1x1x8xf32>
    %363 = vector.shape_cast %362 : vector<1x1x8xf32> to vector<1x8xf32>
    %364 = vector.broadcast %363 : vector<1x8xf32> to vector<17x8xf32>
    %365 = arith.addf %361, %364 : vector<17x8xf32>
    %c5_222 = arith.constant 5 : index
    %c0_223 = arith.constant 0 : index
    %c0_224 = arith.constant 0 : index
    %366 = vector.load %arg8[%c5_222, %c0_223, %c0_224] : memref<8x32x8xbf16, #tpu.memory_space<vmem>>, vector<1x32x8xbf16>
    %367 = vector.shape_cast %366 : vector<1x32x8xbf16> to vector<32x8xbf16>
    %368 = arith.truncf %308 : vector<17x32xf32> to vector<17x32xbf16>
    %cst_225 = arith.constant dense<0.000000e+00> : vector<17x8xf32>
    %369 = tpu.matmul %368, %367, %cst_225 {dimension_numbers = #tpu.dot_dimension_numbers<[1], [0], [0], [1], [0, 0, 1, 1], [], []>} : vector<17x32xbf16>, vector<32x8xbf16>, vector<17x8xf32> -> vector<17x8xf32>
    %c5_226 = arith.constant 5 : index
    %c0_227 = arith.constant 0 : index
    %c0_228 = arith.constant 0 : index
    %370 = vector.load %arg9[%c5_226, %c0_227, %c0_228] : memref<8x1x8xf32, #tpu.memory_space<vmem>>, vector<1x1x8xf32>
    %371 = vector.shape_cast %370 : vector<1x1x8xf32> to vector<1x8xf32>
    %372 = vector.broadcast %371 : vector<1x8xf32> to vector<17x8xf32>
    %373 = arith.addf %369, %372 : vector<17x8xf32>
    %c5_229 = arith.constant 5 : index
    %c0_230 = arith.constant 0 : index
    %c0_231 = arith.constant 0 : index
    %374 = vector.load %arg10[%c5_229, %c0_230, %c0_231] : memref<8x32x8xbf16, #tpu.memory_space<vmem>>, vector<1x32x8xbf16>
    %375 = vector.shape_cast %374 : vector<1x32x8xbf16> to vector<32x8xbf16>
    %376 = arith.truncf %308 : vector<17x32xf32> to vector<17x32xbf16>
    %cst_232 = arith.constant dense<0.000000e+00> : vector<17x8xf32>
    %377 = tpu.matmul %376, %375, %cst_232 {dimension_numbers = #tpu.dot_dimension_numbers<[1], [0], [0], [1], [0, 0, 1, 1], [], []>} : vector<17x32xbf16>, vector<32x8xbf16>, vector<17x8xf32> -> vector<17x8xf32>
    %c5_233 = arith.constant 5 : index
    %c0_234 = arith.constant 0 : index
    %c0_235 = arith.constant 0 : index
    %378 = vector.load %arg11[%c5_233, %c0_234, %c0_235] : memref<8x1x8xf32, #tpu.memory_space<vmem>>, vector<1x1x8xf32>
    %379 = vector.shape_cast %378 : vector<1x1x8xf32> to vector<1x8xf32>
    %380 = vector.broadcast %379 : vector<1x8xf32> to vector<17x8xf32>
    %381 = arith.addf %377, %380 : vector<17x8xf32>
    %382 = arith.truncf %365 : vector<17x8xf32> to vector<17x8xbf16>
    %383 = arith.truncf %373 : vector<17x8xf32> to vector<17x8xbf16>
    %cst_236 = arith.constant dense<0.000000e+00> : vector<17x17xf32>
    %384 = tpu.matmul %382, %383, %cst_236 {dimension_numbers = #tpu.dot_dimension_numbers<[1], [1], [0], [0], [0, 0, 1, 0], [], []>} : vector<17x8xbf16>, vector<17x8xbf16>, vector<17x17xf32> -> vector<17x17xf32>
    %cst_237 = arith.constant 0.353553385 : f32
    %385 = vector.broadcast %cst_237 : f32 to vector<17x17xf32>
    %386 = arith.mulf %384, %385 : vector<17x17xf32>
    %cst_238 = arith.constant dense<0xFF800000> : vector<17xf32>
    %387 = vector.multi_reduction <maximumf>, %386, %cst_238 [1] : vector<17x17xf32> to vector<17xf32>
    %388 = vector.shape_cast %387 : vector<17xf32> to vector<17x1xf32>
    %389 = vector.broadcast %388 : vector<17x1xf32> to vector<17x17xf32>
    %390 = arith.subf %386, %389 : vector<17x17xf32>
    %391 = math.exp %390 : vector<17x17xf32>
    %cst_239 = arith.constant dense<0.000000e+00> : vector<17xf32>
    %392 = vector.multi_reduction <add>, %391, %cst_239 [1] : vector<17x17xf32> to vector<17xf32>
    %393 = vector.shape_cast %392 : vector<17xf32> to vector<17x1xf32>
    %394 = vector.broadcast %393 : vector<17x1xf32> to vector<17x17xf32>
    %395 = arith.divf %391, %394 : vector<17x17xf32>
    %396 = arith.truncf %395 : vector<17x17xf32> to vector<17x17xbf16>
    %397 = arith.truncf %381 : vector<17x8xf32> to vector<17x8xbf16>
    %cst_240 = arith.constant dense<0.000000e+00> : vector<17x8xf32>
    %398 = tpu.matmul %396, %397, %cst_240 {dimension_numbers = #tpu.dot_dimension_numbers<[1], [0], [0], [1], [0, 0, 1, 1], [], []>} : vector<17x17xbf16>, vector<17x8xbf16>, vector<17x8xf32> -> vector<17x8xf32>
    %c5_241 = arith.constant 5 : index
    %c0_242 = arith.constant 0 : index
    %c0_243 = arith.constant 0 : index
    %399 = vector.load %arg12[%c5_241, %c0_242, %c0_243] : memref<8x8x32xbf16, #tpu.memory_space<vmem>>, vector<1x8x32xbf16>
    %400 = vector.shape_cast %399 : vector<1x8x32xbf16> to vector<8x32xbf16>
    %401 = arith.truncf %398 : vector<17x8xf32> to vector<17x8xbf16>
    %cst_244 = arith.constant dense<0.000000e+00> : vector<17x32xf32>
    %402 = tpu.matmul %401, %400, %cst_244 {dimension_numbers = #tpu.dot_dimension_numbers<[1], [0], [0], [1], [0, 0, 1, 1], [], []>} : vector<17x8xbf16>, vector<8x32xbf16>, vector<17x32xf32> -> vector<17x32xf32>
    %403 = arith.addf %355, %402 : vector<17x32xf32>
    %404 = vector.extract_strided_slice %395 {offsets = [0, 0], sizes = [1, 17], strides = [1, 1]} : vector<17x17xf32> to vector<1x17xf32>
    %405 = arith.addf %357, %404 : vector<1x17xf32>
    %c6 = arith.constant 6 : index
    %c0_245 = arith.constant 0 : index
    %c0_246 = arith.constant 0 : index
    %406 = vector.load %arg6[%c6, %c0_245, %c0_246] : memref<8x32x8xbf16, #tpu.memory_space<vmem>>, vector<1x32x8xbf16>
    %407 = vector.shape_cast %406 : vector<1x32x8xbf16> to vector<32x8xbf16>
    %408 = arith.truncf %308 : vector<17x32xf32> to vector<17x32xbf16>
    %cst_247 = arith.constant dense<0.000000e+00> : vector<17x8xf32>
    %409 = tpu.matmul %408, %407, %cst_247 {dimension_numbers = #tpu.dot_dimension_numbers<[1], [0], [0], [1], [0, 0, 1, 1], [], []>} : vector<17x32xbf16>, vector<32x8xbf16>, vector<17x8xf32> -> vector<17x8xf32>
    %c6_248 = arith.constant 6 : index
    %c0_249 = arith.constant 0 : index
    %c0_250 = arith.constant 0 : index
    %410 = vector.load %arg7[%c6_248, %c0_249, %c0_250] : memref<8x1x8xf32, #tpu.memory_space<vmem>>, vector<1x1x8xf32>
    %411 = vector.shape_cast %410 : vector<1x1x8xf32> to vector<1x8xf32>
    %412 = vector.broadcast %411 : vector<1x8xf32> to vector<17x8xf32>
    %413 = arith.addf %409, %412 : vector<17x8xf32>
    %c6_251 = arith.constant 6 : index
    %c0_252 = arith.constant 0 : index
    %c0_253 = arith.constant 0 : index
    %414 = vector.load %arg8[%c6_251, %c0_252, %c0_253] : memref<8x32x8xbf16, #tpu.memory_space<vmem>>, vector<1x32x8xbf16>
    %415 = vector.shape_cast %414 : vector<1x32x8xbf16> to vector<32x8xbf16>
    %416 = arith.truncf %308 : vector<17x32xf32> to vector<17x32xbf16>
    %cst_254 = arith.constant dense<0.000000e+00> : vector<17x8xf32>
    %417 = tpu.matmul %416, %415, %cst_254 {dimension_numbers = #tpu.dot_dimension_numbers<[1], [0], [0], [1], [0, 0, 1, 1], [], []>} : vector<17x32xbf16>, vector<32x8xbf16>, vector<17x8xf32> -> vector<17x8xf32>
    %c6_255 = arith.constant 6 : index
    %c0_256 = arith.constant 0 : index
    %c0_257 = arith.constant 0 : index
    %418 = vector.load %arg9[%c6_255, %c0_256, %c0_257] : memref<8x1x8xf32, #tpu.memory_space<vmem>>, vector<1x1x8xf32>
    %419 = vector.shape_cast %418 : vector<1x1x8xf32> to vector<1x8xf32>
    %420 = vector.broadcast %419 : vector<1x8xf32> to vector<17x8xf32>
    %421 = arith.addf %417, %420 : vector<17x8xf32>
    %c6_258 = arith.constant 6 : index
    %c0_259 = arith.constant 0 : index
    %c0_260 = arith.constant 0 : index
    %422 = vector.load %arg10[%c6_258, %c0_259, %c0_260] : memref<8x32x8xbf16, #tpu.memory_space<vmem>>, vector<1x32x8xbf16>
    %423 = vector.shape_cast %422 : vector<1x32x8xbf16> to vector<32x8xbf16>
    %424 = arith.truncf %308 : vector<17x32xf32> to vector<17x32xbf16>
    %cst_261 = arith.constant dense<0.000000e+00> : vector<17x8xf32>
    %425 = tpu.matmul %424, %423, %cst_261 {dimension_numbers = #tpu.dot_dimension_numbers<[1], [0], [0], [1], [0, 0, 1, 1], [], []>} : vector<17x32xbf16>, vector<32x8xbf16>, vector<17x8xf32> -> vector<17x8xf32>
    %c6_262 = arith.constant 6 : index
    %c0_263 = arith.constant 0 : index
    %c0_264 = arith.constant 0 : index
    %426 = vector.load %arg11[%c6_262, %c0_263, %c0_264] : memref<8x1x8xf32, #tpu.memory_space<vmem>>, vector<1x1x8xf32>
    %427 = vector.shape_cast %426 : vector<1x1x8xf32> to vector<1x8xf32>
    %428 = vector.broadcast %427 : vector<1x8xf32> to vector<17x8xf32>
    %429 = arith.addf %425, %428 : vector<17x8xf32>
    %430 = arith.truncf %413 : vector<17x8xf32> to vector<17x8xbf16>
    %431 = arith.truncf %421 : vector<17x8xf32> to vector<17x8xbf16>
    %cst_265 = arith.constant dense<0.000000e+00> : vector<17x17xf32>
    %432 = tpu.matmul %430, %431, %cst_265 {dimension_numbers = #tpu.dot_dimension_numbers<[1], [1], [0], [0], [0, 0, 1, 0], [], []>} : vector<17x8xbf16>, vector<17x8xbf16>, vector<17x17xf32> -> vector<17x17xf32>
    %cst_266 = arith.constant 0.353553385 : f32
    %433 = vector.broadcast %cst_266 : f32 to vector<17x17xf32>
    %434 = arith.mulf %432, %433 : vector<17x17xf32>
    %cst_267 = arith.constant dense<0xFF800000> : vector<17xf32>
    %435 = vector.multi_reduction <maximumf>, %434, %cst_267 [1] : vector<17x17xf32> to vector<17xf32>
    %436 = vector.shape_cast %435 : vector<17xf32> to vector<17x1xf32>
    %437 = vector.broadcast %436 : vector<17x1xf32> to vector<17x17xf32>
    %438 = arith.subf %434, %437 : vector<17x17xf32>
    %439 = math.exp %438 : vector<17x17xf32>
    %cst_268 = arith.constant dense<0.000000e+00> : vector<17xf32>
    %440 = vector.multi_reduction <add>, %439, %cst_268 [1] : vector<17x17xf32> to vector<17xf32>
    %441 = vector.shape_cast %440 : vector<17xf32> to vector<17x1xf32>
    %442 = vector.broadcast %441 : vector<17x1xf32> to vector<17x17xf32>
    %443 = arith.divf %439, %442 : vector<17x17xf32>
    %444 = arith.truncf %443 : vector<17x17xf32> to vector<17x17xbf16>
    %445 = arith.truncf %429 : vector<17x8xf32> to vector<17x8xbf16>
    %cst_269 = arith.constant dense<0.000000e+00> : vector<17x8xf32>
    %446 = tpu.matmul %444, %445, %cst_269 {dimension_numbers = #tpu.dot_dimension_numbers<[1], [0], [0], [1], [0, 0, 1, 1], [], []>} : vector<17x17xbf16>, vector<17x8xbf16>, vector<17x8xf32> -> vector<17x8xf32>
    %c6_270 = arith.constant 6 : index
    %c0_271 = arith.constant 0 : index
    %c0_272 = arith.constant 0 : index
    %447 = vector.load %arg12[%c6_270, %c0_271, %c0_272] : memref<8x8x32xbf16, #tpu.memory_space<vmem>>, vector<1x8x32xbf16>
    %448 = vector.shape_cast %447 : vector<1x8x32xbf16> to vector<8x32xbf16>
    %449 = arith.truncf %446 : vector<17x8xf32> to vector<17x8xbf16>
    %cst_273 = arith.constant dense<0.000000e+00> : vector<17x32xf32>
    %450 = tpu.matmul %449, %448, %cst_273 {dimension_numbers = #tpu.dot_dimension_numbers<[1], [0], [0], [1], [0, 0, 1, 1], [], []>} : vector<17x8xbf16>, vector<8x32xbf16>, vector<17x32xf32> -> vector<17x32xf32>
    %451 = arith.addf %403, %450 : vector<17x32xf32>
    %452 = vector.extract_strided_slice %443 {offsets = [0, 0], sizes = [1, 17], strides = [1, 1]} : vector<17x17xf32> to vector<1x17xf32>
    %453 = arith.addf %405, %452 : vector<1x17xf32>
    %c7 = arith.constant 7 : index
    %c0_274 = arith.constant 0 : index
    %c0_275 = arith.constant 0 : index
    %454 = vector.load %arg6[%c7, %c0_274, %c0_275] : memref<8x32x8xbf16, #tpu.memory_space<vmem>>, vector<1x32x8xbf16>
    %455 = vector.shape_cast %454 : vector<1x32x8xbf16> to vector<32x8xbf16>
    %456 = arith.truncf %308 : vector<17x32xf32> to vector<17x32xbf16>
    %cst_276 = arith.constant dense<0.000000e+00> : vector<17x8xf32>
    %457 = tpu.matmul %456, %455, %cst_276 {dimension_numbers = #tpu.dot_dimension_numbers<[1], [0], [0], [1], [0, 0, 1, 1], [], []>} : vector<17x32xbf16>, vector<32x8xbf16>, vector<17x8xf32> -> vector<17x8xf32>
    %c7_277 = arith.constant 7 : index
    %c0_278 = arith.constant 0 : index
    %c0_279 = arith.constant 0 : index
    %458 = vector.load %arg7[%c7_277, %c0_278, %c0_279] : memref<8x1x8xf32, #tpu.memory_space<vmem>>, vector<1x1x8xf32>
    %459 = vector.shape_cast %458 : vector<1x1x8xf32> to vector<1x8xf32>
    %460 = vector.broadcast %459 : vector<1x8xf32> to vector<17x8xf32>
    %461 = arith.addf %457, %460 : vector<17x8xf32>
    %c7_280 = arith.constant 7 : index
    %c0_281 = arith.constant 0 : index
    %c0_282 = arith.constant 0 : index
    %462 = vector.load %arg8[%c7_280, %c0_281, %c0_282] : memref<8x32x8xbf16, #tpu.memory_space<vmem>>, vector<1x32x8xbf16>
    %463 = vector.shape_cast %462 : vector<1x32x8xbf16> to vector<32x8xbf16>
    %464 = arith.truncf %308 : vector<17x32xf32> to vector<17x32xbf16>
    %cst_283 = arith.constant dense<0.000000e+00> : vector<17x8xf32>
    %465 = tpu.matmul %464, %463, %cst_283 {dimension_numbers = #tpu.dot_dimension_numbers<[1], [0], [0], [1], [0, 0, 1, 1], [], []>} : vector<17x32xbf16>, vector<32x8xbf16>, vector<17x8xf32> -> vector<17x8xf32>
    %c7_284 = arith.constant 7 : index
    %c0_285 = arith.constant 0 : index
    %c0_286 = arith.constant 0 : index
    %466 = vector.load %arg9[%c7_284, %c0_285, %c0_286] : memref<8x1x8xf32, #tpu.memory_space<vmem>>, vector<1x1x8xf32>
    %467 = vector.shape_cast %466 : vector<1x1x8xf32> to vector<1x8xf32>
    %468 = vector.broadcast %467 : vector<1x8xf32> to vector<17x8xf32>
    %469 = arith.addf %465, %468 : vector<17x8xf32>
    %c7_287 = arith.constant 7 : index
    %c0_288 = arith.constant 0 : index
    %c0_289 = arith.constant 0 : index
    %470 = vector.load %arg10[%c7_287, %c0_288, %c0_289] : memref<8x32x8xbf16, #tpu.memory_space<vmem>>, vector<1x32x8xbf16>
    %471 = vector.shape_cast %470 : vector<1x32x8xbf16> to vector<32x8xbf16>
    %472 = arith.truncf %308 : vector<17x32xf32> to vector<17x32xbf16>
    %cst_290 = arith.constant dense<0.000000e+00> : vector<17x8xf32>
    %473 = tpu.matmul %472, %471, %cst_290 {dimension_numbers = #tpu.dot_dimension_numbers<[1], [0], [0], [1], [0, 0, 1, 1], [], []>} : vector<17x32xbf16>, vector<32x8xbf16>, vector<17x8xf32> -> vector<17x8xf32>
    %c7_291 = arith.constant 7 : index
    %c0_292 = arith.constant 0 : index
    %c0_293 = arith.constant 0 : index
    %474 = vector.load %arg11[%c7_291, %c0_292, %c0_293] : memref<8x1x8xf32, #tpu.memory_space<vmem>>, vector<1x1x8xf32>
    %475 = vector.shape_cast %474 : vector<1x1x8xf32> to vector<1x8xf32>
    %476 = vector.broadcast %475 : vector<1x8xf32> to vector<17x8xf32>
    %477 = arith.addf %473, %476 : vector<17x8xf32>
    %478 = arith.truncf %461 : vector<17x8xf32> to vector<17x8xbf16>
    %479 = arith.truncf %469 : vector<17x8xf32> to vector<17x8xbf16>
    %cst_294 = arith.constant dense<0.000000e+00> : vector<17x17xf32>
    %480 = tpu.matmul %478, %479, %cst_294 {dimension_numbers = #tpu.dot_dimension_numbers<[1], [1], [0], [0], [0, 0, 1, 0], [], []>} : vector<17x8xbf16>, vector<17x8xbf16>, vector<17x17xf32> -> vector<17x17xf32>
    %cst_295 = arith.constant 0.353553385 : f32
    %481 = vector.broadcast %cst_295 : f32 to vector<17x17xf32>
    %482 = arith.mulf %480, %481 : vector<17x17xf32>
    %cst_296 = arith.constant dense<0xFF800000> : vector<17xf32>
    %483 = vector.multi_reduction <maximumf>, %482, %cst_296 [1] : vector<17x17xf32> to vector<17xf32>
    %484 = vector.shape_cast %483 : vector<17xf32> to vector<17x1xf32>
    %485 = vector.broadcast %484 : vector<17x1xf32> to vector<17x17xf32>
    %486 = arith.subf %482, %485 : vector<17x17xf32>
    %487 = math.exp %486 : vector<17x17xf32>
    %cst_297 = arith.constant dense<0.000000e+00> : vector<17xf32>
    %488 = vector.multi_reduction <add>, %487, %cst_297 [1] : vector<17x17xf32> to vector<17xf32>
    %489 = vector.shape_cast %488 : vector<17xf32> to vector<17x1xf32>
    %490 = vector.broadcast %489 : vector<17x1xf32> to vector<17x17xf32>
    %491 = arith.divf %487, %490 : vector<17x17xf32>
    %492 = arith.truncf %491 : vector<17x17xf32> to vector<17x17xbf16>
    %493 = arith.truncf %477 : vector<17x8xf32> to vector<17x8xbf16>
    %cst_298 = arith.constant dense<0.000000e+00> : vector<17x8xf32>
    %494 = tpu.matmul %492, %493, %cst_298 {dimension_numbers = #tpu.dot_dimension_numbers<[1], [0], [0], [1], [0, 0, 1, 1], [], []>} : vector<17x17xbf16>, vector<17x8xbf16>, vector<17x8xf32> -> vector<17x8xf32>
    %c7_299 = arith.constant 7 : index
    %c0_300 = arith.constant 0 : index
    %c0_301 = arith.constant 0 : index
    %495 = vector.load %arg12[%c7_299, %c0_300, %c0_301] : memref<8x8x32xbf16, #tpu.memory_space<vmem>>, vector<1x8x32xbf16>
    %496 = vector.shape_cast %495 : vector<1x8x32xbf16> to vector<8x32xbf16>
    %497 = arith.truncf %494 : vector<17x8xf32> to vector<17x8xbf16>
    %cst_302 = arith.constant dense<0.000000e+00> : vector<17x32xf32>
    %498 = tpu.matmul %497, %496, %cst_302 {dimension_numbers = #tpu.dot_dimension_numbers<[1], [0], [0], [1], [0, 0, 1, 1], [], []>} : vector<17x8xbf16>, vector<8x32xbf16>, vector<17x32xf32> -> vector<17x32xf32>
    %499 = arith.addf %451, %498 : vector<17x32xf32>
    %500 = vector.extract_strided_slice %491 {offsets = [0, 0], sizes = [1, 17], strides = [1, 1]} : vector<17x17xf32> to vector<1x17xf32>
    %501 = arith.addf %453, %500 : vector<1x17xf32>
    %502 = arith.addf %282, %499 : vector<17x32xf32>
    %c1_303 = arith.constant 1 : index
    %c0_304 = arith.constant 0 : index
    %c0_305 = arith.constant 0 : index
    %503 = vector.load %arg13[%c1_303, %c0_304, %c0_305] : memref<2x1x32xf32, #tpu.memory_space<vmem>>, vector<1x1x32xf32>
    %504 = vector.shape_cast %503 : vector<1x1x32xf32> to vector<1x32xf32>
    %505 = vector.broadcast %504 : vector<1x32xf32> to vector<17x32xf32>
    %506 = arith.addf %502, %505 : vector<17x32xf32>
    %c1_306 = arith.constant 1 : index
    %c0_307 = arith.constant 0 : index
    %c0_308 = arith.constant 0 : index
    %507 = vector.load %arg14[%c1_306, %c0_307, %c0_308] : memref<2x1x32xf32, #tpu.memory_space<vmem>>, vector<1x1x32xf32>
    %508 = vector.shape_cast %507 : vector<1x1x32xf32> to vector<1x32xf32>
    %c1_309 = arith.constant 1 : index
    %c0_310 = arith.constant 0 : index
    %c0_311 = arith.constant 0 : index
    %509 = vector.load %arg15[%c1_309, %c0_310, %c0_311] : memref<2x1x32xf32, #tpu.memory_space<vmem>>, vector<1x1x32xf32>
    %510 = vector.shape_cast %509 : vector<1x1x32xf32> to vector<1x32xf32>
    %cst_312 = arith.constant dense<0.000000e+00> : vector<17xf32>
    %511 = vector.multi_reduction <add>, %506, %cst_312 [1] : vector<17x32xf32> to vector<17xf32>
    %512 = vector.shape_cast %511 : vector<17xf32> to vector<17x1xf32>
    %cst_313 = arith.constant 3.200000e+01 : f32
    %513 = vector.broadcast %cst_313 : f32 to vector<17x1xf32>
    %514 = arith.divf %512, %513 : vector<17x1xf32>
    %515 = vector.broadcast %514 : vector<17x1xf32> to vector<17x32xf32>
    %516 = arith.subf %506, %515 : vector<17x32xf32>
    %517 = arith.mulf %516, %516 : vector<17x32xf32>
    %cst_314 = arith.constant dense<0.000000e+00> : vector<17xf32>
    %518 = vector.multi_reduction <add>, %517, %cst_314 [1] : vector<17x32xf32> to vector<17xf32>
    %519 = vector.shape_cast %518 : vector<17xf32> to vector<17x1xf32>
    %cst_315 = arith.constant 3.200000e+01 : f32
    %520 = vector.broadcast %cst_315 : f32 to vector<17x1xf32>
    %521 = arith.divf %519, %520 : vector<17x1xf32>
    %522 = vector.broadcast %514 : vector<17x1xf32> to vector<17x32xf32>
    %523 = arith.subf %506, %522 : vector<17x32xf32>
    %cst_316 = arith.constant 9.99999974E-6 : f32
    %524 = vector.broadcast %cst_316 : f32 to vector<17x1xf32>
    %525 = arith.addf %521, %524 : vector<17x1xf32>
    %526 = math.rsqrt %525 : vector<17x1xf32>
    %527 = vector.broadcast %526 : vector<17x1xf32> to vector<17x32xf32>
    %528 = arith.mulf %523, %527 : vector<17x32xf32>
    %529 = vector.broadcast %508 : vector<1x32xf32> to vector<17x32xf32>
    %530 = arith.mulf %528, %529 : vector<17x32xf32>
    %531 = vector.broadcast %510 : vector<1x32xf32> to vector<17x32xf32>
    %532 = arith.addf %530, %531 : vector<17x32xf32>
    %c1_317 = arith.constant 1 : index
    %c0_318 = arith.constant 0 : index
    %c0_319 = arith.constant 0 : index
    %533 = vector.load %arg16[%c1_317, %c0_318, %c0_319] : memref<2x32x64xbf16, #tpu.memory_space<vmem>>, vector<1x32x64xbf16>
    %534 = vector.shape_cast %533 : vector<1x32x64xbf16> to vector<32x64xbf16>
    %535 = arith.truncf %532 : vector<17x32xf32> to vector<17x32xbf16>
    %cst_320 = arith.constant dense<0.000000e+00> : vector<17x64xf32>
    %536 = tpu.matmul %535, %534, %cst_320 {dimension_numbers = #tpu.dot_dimension_numbers<[1], [0], [0], [1], [0, 0, 1, 1], [], []>} : vector<17x32xbf16>, vector<32x64xbf16>, vector<17x64xf32> -> vector<17x64xf32>
    %c1_321 = arith.constant 1 : index
    %c0_322 = arith.constant 0 : index
    %c0_323 = arith.constant 0 : index
    %537 = vector.load %arg17[%c1_321, %c0_322, %c0_323] : memref<2x1x64xf32, #tpu.memory_space<vmem>>, vector<1x1x64xf32>
    %538 = vector.shape_cast %537 : vector<1x1x64xf32> to vector<1x64xf32>
    %539 = vector.broadcast %538 : vector<1x64xf32> to vector<17x64xf32>
    %540 = arith.addf %536, %539 : vector<17x64xf32>
    %541 = arith.mulf %540, %540 : vector<17x64xf32>
    %542 = arith.mulf %540, %541 : vector<17x64xf32>
    %cst_324 = arith.constant 4.471500e-02 : f32
    %543 = vector.broadcast %cst_324 : f32 to vector<17x64xf32>
    %544 = arith.mulf %543, %542 : vector<17x64xf32>
    %545 = arith.addf %540, %544 : vector<17x64xf32>
    %cst_325 = arith.constant 0.797884583 : f32
    %546 = vector.broadcast %cst_325 : f32 to vector<17x64xf32>
    %547 = arith.mulf %546, %545 : vector<17x64xf32>
    %548 = math.tanh %547 : vector<17x64xf32>
    %cst_326 = arith.constant 1.000000e+00 : f32
    %549 = vector.broadcast %cst_326 : f32 to vector<17x64xf32>
    %550 = arith.addf %549, %548 : vector<17x64xf32>
    %cst_327 = arith.constant 5.000000e-01 : f32
    %551 = vector.broadcast %cst_327 : f32 to vector<17x64xf32>
    %552 = arith.mulf %551, %550 : vector<17x64xf32>
    %553 = arith.mulf %540, %552 : vector<17x64xf32>
    %c1_328 = arith.constant 1 : index
    %c0_329 = arith.constant 0 : index
    %c0_330 = arith.constant 0 : index
    %554 = vector.load %arg18[%c1_328, %c0_329, %c0_330] : memref<2x64x32xbf16, #tpu.memory_space<vmem>>, vector<1x64x32xbf16>
    %555 = vector.shape_cast %554 : vector<1x64x32xbf16> to vector<64x32xbf16>
    %556 = arith.truncf %553 : vector<17x64xf32> to vector<17x64xbf16>
    %cst_331 = arith.constant dense<0.000000e+00> : vector<17x32xf32>
    %557 = tpu.matmul %556, %555, %cst_331 {dimension_numbers = #tpu.dot_dimension_numbers<[1], [0], [0], [1], [0, 0, 1, 1], [], []>} : vector<17x64xbf16>, vector<64x32xbf16>, vector<17x32xf32> -> vector<17x32xf32>
    %558 = arith.addf %506, %557 : vector<17x32xf32>
    %c1_332 = arith.constant 1 : index
    %c0_333 = arith.constant 0 : index
    %c0_334 = arith.constant 0 : index
    %559 = vector.load %arg19[%c1_332, %c0_333, %c0_334] : memref<2x1x32xf32, #tpu.memory_space<vmem>>, vector<1x1x32xf32>
    %560 = vector.shape_cast %559 : vector<1x1x32xf32> to vector<1x32xf32>
    %561 = vector.broadcast %560 : vector<1x32xf32> to vector<17x32xf32>
    %562 = arith.addf %558, %561 : vector<17x32xf32>
    %563 = vector.extract_strided_slice %562 {offsets = [0, 0], sizes = [1, 32], strides = [1, 1]} : vector<17x32xf32> to vector<1x32xf32>
    %c0_335 = arith.constant 0 : index
    %c0_336 = arith.constant 0 : index
    %c0_337 = arith.constant 0 : index
    %564 = vector.load %arg20[%c0_335, %c0_336, %c0_337] : memref<1x1x32xf32, #tpu.memory_space<vmem>>, vector<1x1x32xf32>
    %565 = vector.shape_cast %564 : vector<1x1x32xf32> to vector<1x32xf32>
    %566 = vector.shape_cast %563 : vector<1x32xf32> to vector<1x1x32xf32>
    tpu.vector_store %arg20[%c0_335, %c0_336, %c0_337], %566 {strides = array<i32>} : memref<1x1x32xf32, #tpu.memory_space<vmem>>, vector<1x1x32xf32>,
    %cst_338 = arith.constant 2.500000e-01 : f32
    %567 = vector.broadcast %cst_338 : f32 to vector<1x17xf32>
    %568 = arith.mulf %501, %567 : vector<1x17xf32>
    %c0_339 = arith.constant 0 : index
    %c0_340 = arith.constant 0 : index
    %c0_341 = arith.constant 0 : index
    %569 = vector.load %arg21[%c0_339, %c0_340, %c0_341] : memref<1x1x17xf32, #tpu.memory_space<vmem>>, vector<1x1x17xf32>
    %570 = vector.shape_cast %569 : vector<1x1x17xf32> to vector<1x17xf32>
    %571 = vector.shape_cast %568 : vector<1x17xf32> to vector<1x1x17xf32>
    tpu.vector_store %arg21[%c0_339, %c0_340, %c0_341], %571 {strides = array<i32>} : memref<1x1x17xf32, #tpu.memory_space<vmem>>, vector<1x1x17xf32>,
    return
  }
  func.func @transform_0(%arg0: i32) -> (i32, i32, i32) {
    %c0_i32 = arith.constant 0 : i32
    %c0_i32_0 = arith.constant 0 : i32
    %c0_i32_1 = arith.constant 0 : i32
    return %arg0, %c0_i32, %c0_i32_0 : i32, i32, i32
  }
  func.func @transform_1(%arg0: i32) -> (i32, i32) {
    %c0_i32 = arith.constant 0 : i32
    %c0_i32_0 = arith.constant 0 : i32
    %c0_i32_1 = arith.constant 0 : i32
    return %c0_i32, %c0_i32_0 : i32, i32
  }
  func.func @transform_2(%arg0: i32) -> (i32, i32) {
    %c0_i32 = arith.constant 0 : i32
    %c0_i32_0 = arith.constant 0 : i32
    %c0_i32_1 = arith.constant 0 : i32
    return %c0_i32, %c0_i32_0 : i32, i32
  }
  func.func @transform_3(%arg0: i32) -> (i32, i32, i32) {
    %c0_i32 = arith.constant 0 : i32
    %c0_i32_0 = arith.constant 0 : i32
    %c0_i32_1 = arith.constant 0 : i32
    %c0_i32_2 = arith.constant 0 : i32
    return %c0_i32, %c0_i32_0, %c0_i32_1 : i32, i32, i32
  }
  func.func @transform_4(%arg0: i32) -> (i32, i32, i32) {
    %c0_i32 = arith.constant 0 : i32
    %c0_i32_0 = arith.constant 0 : i32
    %c0_i32_1 = arith.constant 0 : i32
    %c0_i32_2 = arith.constant 0 : i32
    return %c0_i32, %c0_i32_0, %c0_i32_1 : i32, i32, i32
  }
  func.func @transform_5(%arg0: i32) -> (i32, i32, i32) {
    %c0_i32 = arith.constant 0 : i32
    %c0_i32_0 = arith.constant 0 : i32
    %c0_i32_1 = arith.constant 0 : i32
    %c0_i32_2 = arith.constant 0 : i32
    return %c0_i32, %c0_i32_0, %c0_i32_1 : i32, i32, i32
  }
  func.func @transform_6(%arg0: i32) -> (i32, i32, i32) {
    %c0_i32 = arith.constant 0 : i32
    %c0_i32_0 = arith.constant 0 : i32
    %c0_i32_1 = arith.constant 0 : i32
    %c0_i32_2 = arith.constant 0 : i32
    return %c0_i32, %c0_i32_0, %c0_i32_1 : i32, i32, i32
  }
  func.func @transform_7(%arg0: i32) -> (i32, i32, i32) {
    %c0_i32 = arith.constant 0 : i32
    %c0_i32_0 = arith.constant 0 : i32
    %c0_i32_1 = arith.constant 0 : i32
    %c0_i32_2 = arith.constant 0 : i32
    return %c0_i32, %c0_i32_0, %c0_i32_1 : i32, i32, i32
  }
  func.func @transform_8(%arg0: i32) -> (i32, i32, i32) {
    %c0_i32 = arith.constant 0 : i32
    %c0_i32_0 = arith.constant 0 : i32
    %c0_i32_1 = arith.constant 0 : i32
    %c0_i32_2 = arith.constant 0 : i32
    return %c0_i32, %c0_i32_0, %c0_i32_1 : i32, i32, i32
  }
  func.func @transform_9(%arg0: i32) -> (i32, i32, i32) {
    %c0_i32 = arith.constant 0 : i32
    %c0_i32_0 = arith.constant 0 : i32
    %c0_i32_1 = arith.constant 0 : i32
    %c0_i32_2 = arith.constant 0 : i32
    return %c0_i32, %c0_i32_0, %c0_i32_1 : i32, i32, i32
  }
  func.func @transform_10(%arg0: i32) -> (i32, i32, i32) {
    %c0_i32 = arith.constant 0 : i32
    %c0_i32_0 = arith.constant 0 : i32
    %c0_i32_1 = arith.constant 0 : i32
    %c0_i32_2 = arith.constant 0 : i32
    return %c0_i32, %c0_i32_0, %c0_i32_1 : i32, i32, i32
  }
  func.func @transform_11(%arg0: i32) -> (i32, i32, i32) {
    %c0_i32 = arith.constant 0 : i32
    %c0_i32_0 = arith.constant 0 : i32
    %c0_i32_1 = arith.constant 0 : i32
    %c0_i32_2 = arith.constant 0 : i32
    return %c0_i32, %c0_i32_0, %c0_i32_1 : i32, i32, i32
  }
  func.func @transform_12(%arg0: i32) -> (i32, i32, i32) {
    %c0_i32 = arith.constant 0 : i32
    %c0_i32_0 = arith.constant 0 : i32
    %c0_i32_1 = arith.constant 0 : i32
    %c0_i32_2 = arith.constant 0 : i32
    return %c0_i32, %c0_i32_0, %c0_i32_1 : i32, i32, i32
  }
  func.func @transform_13(%arg0: i32) -> (i32, i32, i32) {
    %c0_i32 = arith.constant 0 : i32
    %c0_i32_0 = arith.constant 0 : i32
    %c0_i32_1 = arith.constant 0 : i32
    %c0_i32_2 = arith.constant 0 : i32
    return %c0_i32, %c0_i32_0, %c0_i32_1 : i32, i32, i32
  }
  func.func @transform_14(%arg0: i32) -> (i32, i32, i32) {
    %c0_i32 = arith.constant 0 : i32
    %c0_i32_0 = arith.constant 0 : i32
    %c0_i32_1 = arith.constant 0 : i32
    %c0_i32_2 = arith.constant 0 : i32
    return %c0_i32, %c0_i32_0, %c0_i32_1 : i32, i32, i32
  }
  func.func @transform_15(%arg0: i32) -> (i32, i32, i32) {
    %c0_i32 = arith.constant 0 : i32
    %c0_i32_0 = arith.constant 0 : i32
    %c0_i32_1 = arith.constant 0 : i32
    %c0_i32_2 = arith.constant 0 : i32
    return %c0_i32, %c0_i32_0, %c0_i32_1 : i32, i32, i32
  }
  func.func @transform_16(%arg0: i32) -> (i32, i32, i32) {
    %c0_i32 = arith.constant 0 : i32
    %c0_i32_0 = arith.constant 0 : i32
    %c0_i32_1 = arith.constant 0 : i32
    %c0_i32_2 = arith.constant 0 : i32
    return %c0_i32, %c0_i32_0, %c0_i32_1 : i32, i32, i32
  }
  func.func @transform_17(%arg0: i32) -> (i32, i32, i32) {
    %c0_i32 = arith.constant 0 : i32
    %c0_i32_0 = arith.constant 0 : i32
    %c0_i32_1 = arith.constant 0 : i32
    %c0_i32_2 = arith.constant 0 : i32
    return %c0_i32, %c0_i32_0, %c0_i32_1 : i32, i32, i32
  }
  func.func @transform_18(%arg0: i32) -> (i32, i32, i32) {
    %c0_i32 = arith.constant 0 : i32
    %c0_i32_0 = arith.constant 0 : i32
    %c0_i32_1 = arith.constant 0 : i32
    %c0_i32_2 = arith.constant 0 : i32
    return %c0_i32, %c0_i32_0, %c0_i32_1 : i32, i32, i32
  }
  func.func @transform_19(%arg0: i32) -> (i32, i32, i32) {
    %c0_i32 = arith.constant 0 : i32
    %c0_i32_0 = arith.constant 0 : i32
    %c0_i32_1 = arith.constant 0 : i32
    return %arg0, %c0_i32, %c0_i32_0 : i32, i32, i32
  }
  func.func @transform_20(%arg0: i32) -> (i32, i32, i32) {
    %c0_i32 = arith.constant 0 : i32
    %c0_i32_0 = arith.constant 0 : i32
    %c0_i32_1 = arith.constant 0 : i32
    return %arg0, %c0_i32, %c0_i32_0 : i32, i32, i32
  }
}

</mosaic_0001>

<llo_original>
// kernel: tpu_custom_call.1
$region0: #{tpu_custom_call.1}
  #allocation0 [shape = 'u32[]', space=smem, size = 0x4, offset = 0x4, fixed_abs, tag = 'smem constant byte address 0x4 - core index']
  #allocation1 [shape = 'u32[144,128]{1,0:T(1,128)}', space=vmem, size = 0x12000, scoped, tag = 'internal scratch']
  #allocation2 [shape = 'f32[17,32]{1,0:T(8,128)}', space=vmem, size = 0x3000, scoped, tag = 'scratch operand']
  %s0 = inlined_call_operand.vmem [shape: f32[2,16,32], index: 0, kind: input, shape index: {}]
  %s1 = inlined_call_operand.vmem [shape: f32[1,32], index: 1, kind: input, shape index: {}]
  %s2 = inlined_call_operand.vmem [shape: f32[17,32], index: 2, kind: input, shape index: {}]
  %s3 = inlined_call_operand.vmem [shape: f32[2,1,32], index: 3, kind: input, shape index: {}]
  %s4 = inlined_call_operand.vmem [shape: f32[2,1,32], index: 4, kind: input, shape index: {}]
  %s5 = inlined_call_operand.vmem [shape: bf16[8,32,8], index: 5, kind: input, shape index: {}]
  %s6 = inlined_call_operand.vmem [shape: f32[8,1,8], index: 6, kind: input, shape index: {}]
  %s7 = inlined_call_operand.vmem [shape: bf16[8,32,8], index: 7, kind: input, shape index: {}]
  %s8 = inlined_call_operand.vmem [shape: f32[8,1,8], index: 8, kind: input, shape index: {}]
  %s9 = inlined_call_operand.vmem [shape: bf16[8,32,8], index: 9, kind: input, shape index: {}]
  %s10 = inlined_call_operand.vmem [shape: f32[8,1,8], index: 10, kind: input, shape index: {}]
  %s11 = inlined_call_operand.vmem [shape: bf16[8,8,32], index: 11, kind: input, shape index: {}]
  %s12 = inlined_call_operand.vmem [shape: f32[2,1,32], index: 12, kind: input, shape index: {}]
  %s13 = inlined_call_operand.vmem [shape: f32[2,1,32], index: 13, kind: input, shape index: {}]
  %s14 = inlined_call_operand.vmem [shape: f32[2,1,32], index: 14, kind: input, shape index: {}]
  %s15 = inlined_call_operand.vmem [shape: bf16[2,32,64], index: 15, kind: input, shape index: {}]
  %s16 = inlined_call_operand.vmem [shape: f32[2,1,64], index: 16, kind: input, shape index: {}]
  %s17 = inlined_call_operand.vmem [shape: bf16[2,64,32], index: 17, kind: input, shape index: {}]
  %s18 = inlined_call_operand.vmem [shape: f32[2,1,32], index: 18, kind: input, shape index: {}]
  %s19 = inlined_call_operand.hbm [shape: f32[2,1,32], index: 19, kind: output, shape index: {0}]
  %s20 = inlined_call_operand.hbm [shape: f32[2,1,17], index: 20, kind: output, shape index: {1}]
  %21 = xla_tuple %s19, %s20
  %s22 = sld [smem:[#allocation0]]
  $region117: #{tpu_custom_call.1} parent=0
    _
  %s24 = ssub.s32 1, %s22
  %s25 = scalar_select 0, %s24, %s22
  $region1: #{tpu_custom_call.1} parent=0
    #allocation3 [shape = 'u8[1024]{0}', space=vmem, size = 0x400, scoped, tag = 'output window, operand 0']
    #allocation4 [shape = 's32[2]{0}', space=sflag, size = 0x8, scoped, tag = 'scoped memory for tpu_custom_call.1']
    #allocation5 [shape = 'u8[1024]{0}', space=vmem, size = 0x400, scoped, tag = 'output window, operand 1']
    #allocation6 [shape = 's32[2]{0}', space=sflag, size = 0x8, scoped, tag = 'scoped memory for tpu_custom_call.1']
    %26 = vsyncpa [#allocation4], 0
    %s27 = scalar_lea.sflag [#allocation4], 1
    %28 = vsyncpa %s27, 0
    %29 = vsyncpa [#allocation6], 0
    %s30 = scalar_lea.sflag [#allocation6], 1
    %31 = vsyncpa %s30, 0
    loop: start=0, step=1, limit=4
    $region2: #{tpu_custom_call.1} parent=1 // loop_pre_header
      _
    $region3: #{tpu_custom_call.1} parent=1 // loop_header
      %s33 = sphi 0, %s37
      %p34 = scmp.ge.s32.totalorder %s33, 4
      %s43 = sphi 0, %s45
      %s46 = sphi 0, %s43
      %s47 = sphi 0, %s46
      %s63 = sphi 0, %s47
      %s67 = sphi 0, %s67
      %s69 = sphi 0, %s67
      %s70 = sphi 0, %s69
      %s84 = sphi 0, %s70
      %s88 = sphi 0, %s88
      %s90 = sphi 0, %s88
      %s91 = sphi 0, %s90
      %s105 = sphi 0, %s91
      %s109 = sphi 0, %s109
      %s111 = sphi 0, %s109
      %s112 = sphi 0, %s111
      %s126 = sphi 0, %s112
      %s130 = sphi 0, %s130
      %s132 = sphi 0, %s130
      %s133 = sphi 0, %s132
      %s147 = sphi 0, %s133
      %s151 = sphi 0, %s151
      %s153 = sphi 0, %s151
      %s154 = sphi 0, %s153
      %s168 = sphi 0, %s154
      %s172 = sphi 0, %s172
      %s174 = sphi 0, %s172
      %s175 = sphi 0, %s174
      %s189 = sphi 0, %s175
      %s193 = sphi 0, %s193
      %s195 = sphi 0, %s193
      %s196 = sphi 0, %s195
      %s210 = sphi 0, %s196
      %s214 = sphi 0, %s214
      %s216 = sphi 0, %s214
      %s217 = sphi 0, %s216
      %s231 = sphi 0, %s217
      %s235 = sphi 0, %s235
      %s237 = sphi 0, %s235
      %s238 = sphi 0, %s237
      %s252 = sphi 0, %s238
      %s256 = sphi 0, %s256
      %s258 = sphi 0, %s256
      %s259 = sphi 0, %s258
      %s273 = sphi 0, %s259
      %s277 = sphi 0, %s277
      %s279 = sphi 0, %s277
      %s280 = sphi 0, %s279
      %s294 = sphi 0, %s280
      %s298 = sphi 0, %s298
      %s300 = sphi 0, %s298
      %s301 = sphi 0, %s300
      %s315 = sphi 0, %s301
      %s319 = sphi 0, %s319
      %s321 = sphi 0, %s319
      %s322 = sphi 0, %s321
      %s336 = sphi 0, %s322
      %s340 = sphi 0, %s340
      %s342 = sphi 0, %s340
      %s343 = sphi 0, %s342
      %s357 = sphi 0, %s343
      %s361 = sphi 0, %s361
      %s363 = sphi 0, %s361
      %s364 = sphi 0, %s363
      %s378 = sphi 0, %s364
      %s382 = sphi 0, %s382
      %s384 = sphi 0, %s382
      %s385 = sphi 0, %s384
      %s399 = sphi 0, %s385
      %s403 = sphi 0, %s403
      %s405 = sphi 0, %s403
      %s406 = sphi 0, %s405
      %s420 = sphi 0, %s406
      %s424 = sphi 0, %s424
      %s426 = sphi 0, %s424
      %s427 = sphi 0, %s426
      %s441 = sphi 0, %s427
      %s447 = sphi 0, %s449
      %s450 = sphi 0, %s447
      %s451 = sphi 0, %s450
      %s467 = sphi 0, %s451
      %s473 = sphi 0, %s475
      %s476 = sphi 0, %s473
      %s477 = sphi 0, %s476
      %s493 = sphi 0, %s477
    $region4: #{tpu_custom_call.1} parent=1 // loop_header_branch
      %36 = sbr.rel (%p34) target = $region8
    $region5: #{tpu_custom_call.1} parent=1 // loop_body
      %s38 = ssub.s32 %s33, 1
      %s39 = ssub.s32 %s33, 2
      %s40 = sadd.s32 %s33, 1
      %s41 = ssub.s32 %s33, %s40
      %p42 = scmp.eq.s32.totalorder %s41, 0
      %s44 = sadd.s32 %s43, 1
      %s45 = scalar_select %p42, %s43, %s44
      %p48 = pneg %p42
      %p49 = scmp.eq.s32.totalorder %s33, 1
      %p50 = por %p48, %p49
      %p51 = scmp.ne.s32.totalorder %s43, %s46
      %p52 = scmp.eq.s32.totalorder %s33, 0
      %p53 = por %p51, %p52
      %p54 = scmp.ne.s32.totalorder %s43, %s46
      %p55 = scmp.eq.s32.totalorder %s38, 1
      %p56 = por %p54, %p55
      %p57 = scmp.ne.s32.totalorder %s46, %s47
      %p58 = scmp.eq.s32.totalorder %s38, 0
      %p59 = por %p57, %p58
      %p60 = scmp.ne.s32.totalorder %s46, %s47
      %p61 = scmp.eq.s32.totalorder %s39, 1
      %p62 = por %p60, %p61
      %p64 = scmp.ne.s32.totalorder %s47, %s63
      %p65 = scmp.eq.s32.totalorder %s39, 0
      %p66 = por %p64, %p65
      %s68 = sadd.s32 %s67, 1
      %p71 = scmp.eq.s32.totalorder %s33, 1
      %p72 = scmp.ne.s32.totalorder %s67, %s69
      %p73 = scmp.eq.s32.totalorder %s33, 0
      %p74 = por %p72, %p73
      %p75 = scmp.ne.s32.totalorder %s67, %s69
      %p76 = scmp.eq.s32.totalorder %s38, 1
      %p77 = por %p75, %p76
      %p78 = scmp.ne.s32.totalorder %s69, %s70
      %p79 = scmp.eq.s32.totalorder %s38, 0
      %p80 = por %p78, %p79
      %p81 = scmp.ne.s32.totalorder %s69, %s70
      %p82 = scmp.eq.s32.totalorder %s39, 1
      %p83 = por %p81, %p82
      %p85 = scmp.ne.s32.totalorder %s70, %s84
      %p86 = scmp.eq.s32.totalorder %s39, 0
      %p87 = por %p85, %p86
      %s89 = sadd.s32 %s88, 1
      %p92 = scmp.eq.s32.totalorder %s33, 1
      %p93 = scmp.ne.s32.totalorder %s88, %s90
      %p94 = scmp.eq.s32.totalorder %s33, 0
      %p95 = por %p93, %p94
      %p96 = scmp.ne.s32.totalorder %s88, %s90
      %p97 = scmp.eq.s32.totalorder %s38, 1
      %p98 = por %p96, %p97
      %p99 = scmp.ne.s32.totalorder %s90, %s91
      %p100 = scmp.eq.s32.totalorder %s38, 0
      %p101 = por %p99, %p100
      %p102 = scmp.ne.s32.totalorder %s90, %s91
      %p103 = scmp.eq.s32.totalorder %s39, 1
      %p104 = por %p102, %p103
      %p106 = scmp.ne.s32.totalorder %s91, %s105
      %p107 = scmp.eq.s32.totalorder %s39, 0
      %p108 = por %p106, %p107
      %s110 = sadd.s32 %s109, 1
      %p113 = scmp.eq.s32.totalorder %s33, 1
      %p114 = scmp.ne.s32.totalorder %s109, %s111
      %p115 = scmp.eq.s32.totalorder %s33, 0
      %p116 = por %p114, %p115
      %p117 = scmp.ne.s32.totalorder %s109, %s111
      %p118 = scmp.eq.s32.totalorder %s38, 1
      %p119 = por %p117, %p118
      %p120 = scmp.ne.s32.totalorder %s111, %s112
      %p121 = scmp.eq.s32.totalorder %s38, 0
      %p122 = por %p120, %p121
      %p123 = scmp.ne.s32.totalorder %s111, %s112
      %p124 = scmp.eq.s32.totalorder %s39, 1
      %p125 = por %p123, %p124
      %p127 = scmp.ne.s32.totalorder %s112, %s126
      %p128 = scmp.eq.s32.totalorder %s39, 0
      %p129 = por %p127, %p128
      %s131 = sadd.s32 %s130, 1
      %p134 = scmp.eq.s32.totalorder %s33, 1
      %p135 = scmp.ne.s32.totalorder %s130, %s132
      %p136 = scmp.eq.s32.totalorder %s33, 0
      %p137 = por %p135, %p136
      %p138 = scmp.ne.s32.totalorder %s130, %s132
      %p139 = scmp.eq.s32.totalorder %s38, 1
      %p140 = por %p138, %p139
      %p141 = scmp.ne.s32.totalorder %s132, %s133
      %p142 = scmp.eq.s32.totalorder %s38, 0
      %p143 = por %p141, %p142
      %p144 = scmp.ne.s32.totalorder %s132, %s133
      %p145 = scmp.eq.s32.totalorder %s39, 1
      %p146 = por %p144, %p145
      %p148 = scmp.ne.s32.totalorder %s133, %s147
      %p149 = scmp.eq.s32.totalorder %s39, 0
      %p150 = por %p148, %p149
      %s152 = sadd.s32 %s151, 1
      %p155 = scmp.eq.s32.totalorder %s33, 1
      %p156 = scmp.ne.s32.totalorder %s151, %s153
      %p157 = scmp.eq.s32.totalorder %s33, 0
      %p158 = por %p156, %p157
      %p159 = scmp.ne.s32.totalorder %s151, %s153
      %p160 = scmp.eq.s32.totalorder %s38, 1
      %p161 = por %p159, %p160
      %p162 = scmp.ne.s32.totalorder %s153, %s154
      %p163 = scmp.eq.s32.totalorder %s38, 0
      %p164 = por %p162, %p163
      %p165 = scmp.ne.s32.totalorder %s153, %s154
      %p166 = scmp.eq.s32.totalorder %s39, 1
      %p167 = por %p165, %p166
      %p169 = scmp.ne.s32.totalorder %s154, %s168
      %p170 = scmp.eq.s32.totalorder %s39, 0
      %p171 = por %p169, %p170
      %s173 = sadd.s32 %s172, 1
      %p176 = scmp.eq.s32.totalorder %s33, 1
      %p177 = scmp.ne.s32.totalorder %s172, %s174
      %p178 = scmp.eq.s32.totalorder %s33, 0
      %p179 = por %p177, %p178
      %p180 = scmp.ne.s32.totalorder %s172, %s174
      %p181 = scmp.eq.s32.totalorder %s38, 1
      %p182 = por %p180, %p181
      %p183 = scmp.ne.s32.totalorder %s174, %s175
      %p184 = scmp.eq.s32.totalorder %s38, 0
      %p185 = por %p183, %p184
      %p186 = scmp.ne.s32.totalorder %s174, %s175
      %p187 = scmp.eq.s32.totalorder %s39, 1
      %p188 = por %p186, %p187
      %p190 = scmp.ne.s32.totalorder %s175, %s189
      %p191 = scmp.eq.s32.totalorder %s39, 0
      %p192 = por %p190, %p191
      %s194 = sadd.s32 %s193, 1
      %p197 = scmp.eq.s32.totalorder %s33, 1
      %p198 = scmp.ne.s32.totalorder %s193, %s195
      %p199 = scmp.eq.s32.totalorder %s33, 0
      %p200 = por %p198, %p199
      %p201 = scmp.ne.s32.totalorder %s193, %s195
      %p202 = scmp.eq.s32.totalorder %s38, 1
      %p203 = por %p201, %p202
      %p204 = scmp.ne.s32.totalorder %s195, %s196
      %p205 = scmp.eq.s32.totalorder %s38, 0
      %p206 = por %p204, %p205
      %p207 = scmp.ne.s32.totalorder %s195, %s196
      %p208 = scmp.eq.s32.totalorder %s39, 1
      %p209 = por %p207, %p208
      %p211 = scmp.ne.s32.totalorder %s196, %s210
      %p212 = scmp.eq.s32.totalorder %s39, 0
      %p213 = por %p211, %p212
      %s215 = sadd.s32 %s214, 1
      %p218 = scmp.eq.s32.totalorder %s33, 1
      %p219 = scmp.ne.s32.totalorder %s214, %s216
      %p220 = scmp.eq.s32.totalorder %s33, 0
      %p221 = por %p219, %p220
      %p222 = scmp.ne.s32.totalorder %s214, %s216
      %p223 = scmp.eq.s32.totalorder %s38, 1
      %p224 = por %p222, %p223
      %p225 = scmp.ne.s32.totalorder %s216, %s217
      %p226 = scmp.eq.s32.totalorder %s38, 0
      %p227 = por %p225, %p226
      %p228 = scmp.ne.s32.totalorder %s216, %s217
      %p229 = scmp.eq.s32.totalorder %s39, 1
      %p230 = por %p228, %p229
      %p232 = scmp.ne.s32.totalorder %s217, %s231
      %p233 = scmp.eq.s32.totalorder %s39, 0
      %p234 = por %p232, %p233
      %s236 = sadd.s32 %s235, 1
      %p239 = scmp.eq.s32.totalorder %s33, 1
      %p240 = scmp.ne.s32.totalorder %s235, %s237
      %p241 = scmp.eq.s32.totalorder %s33, 0
      %p242 = por %p240, %p241
      %p243 = scmp.ne.s32.totalorder %s235, %s237
      %p244 = scmp.eq.s32.totalorder %s38, 1
      %p245 = por %p243, %p244
      %p246 = scmp.ne.s32.totalorder %s237, %s238
      %p247 = scmp.eq.s32.totalorder %s38, 0
      %p248 = por %p246, %p247
      %p249 = scmp.ne.s32.totalorder %s237, %s238
      %p250 = scmp.eq.s32.totalorder %s39, 1
      %p251 = por %p249, %p250
      %p253 = scmp.ne.s32.totalorder %s238, %s252
      %p254 = scmp.eq.s32.totalorder %s39, 0
      %p255 = por %p253, %p254
      %s257 = sadd.s32 %s256, 1
      %p260 = scmp.eq.s32.totalorder %s33, 1
      %p261 = scmp.ne.s32.totalorder %s256, %s258
      %p262 = scmp.eq.s32.totalorder %s33, 0
      %p263 = por %p261, %p262
      %p264 = scmp.ne.s32.totalorder %s256, %s258
      %p265 = scmp.eq.s32.totalorder %s38, 1
      %p266 = por %p264, %p265
      %p267 = scmp.ne.s32.totalorder %s258, %s259
      %p268 = scmp.eq.s32.totalorder %s38, 0
      %p269 = por %p267, %p268
      %p270 = scmp.ne.s32.totalorder %s258, %s259
      %p271 = scmp.eq.s32.totalorder %s39, 1
      %p272 = por %p270, %p271
      %p274 = scmp.ne.s32.totalorder %s259, %s273
      %p275 = scmp.eq.s32.totalorder %s39, 0
      %p276 = por %p274, %p275
      %s278 = sadd.s32 %s277, 1
      %p281 = scmp.eq.s32.totalorder %s33, 1
      %p282 = scmp.ne.s32.totalorder %s277, %s279
      %p283 = scmp.eq.s32.totalorder %s33, 0
      %p284 = por %p282, %p283
      %p285 = scmp.ne.s32.totalorder %s277, %s279
      %p286 = scmp.eq.s32.totalorder %s38, 1
      %p287 = por %p285, %p286
      %p288 = scmp.ne.s32.totalorder %s279, %s280
      %p289 = scmp.eq.s32.totalorder %s38, 0
      %p290 = por %p288, %p289
      %p291 = scmp.ne.s32.totalorder %s279, %s280
      %p292 = scmp.eq.s32.totalorder %s39, 1
      %p293 = por %p291, %p292
      %p295 = scmp.ne.s32.totalorder %s280, %s294
      %p296 = scmp.eq.s32.totalorder %s39, 0
      %p297 = por %p295, %p296
      %s299 = sadd.s32 %s298, 1
      %p302 = scmp.eq.s32.totalorder %s33, 1
      %p303 = scmp.ne.s32.totalorder %s298, %s300
      %p304 = scmp.eq.s32.totalorder %s33, 0
      %p305 = por %p303, %p304
      %p306 = scmp.ne.s32.totalorder %s298, %s300
      %p307 = scmp.eq.s32.totalorder %s38, 1
      %p308 = por %p306, %p307
      %p309 = scmp.ne.s32.totalorder %s300, %s301
      %p310 = scmp.eq.s32.totalorder %s38, 0
      %p311 = por %p309, %p310
      %p312 = scmp.ne.s32.totalorder %s300, %s301
      %p313 = scmp.eq.s32.totalorder %s39, 1
      %p314 = por %p312, %p313
      %p316 = scmp.ne.s32.totalorder %s301, %s315
      %p317 = scmp.eq.s32.totalorder %s39, 0
      %p318 = por %p316, %p317
      %s320 = sadd.s32 %s319, 1
      %p323 = scmp.eq.s32.totalorder %s33, 1
      %p324 = scmp.ne.s32.totalorder %s319, %s321
      %p325 = scmp.eq.s32.totalorder %s33, 0
      %p326 = por %p324, %p325
      %p327 = scmp.ne.s32.totalorder %s319, %s321
      %p328 = scmp.eq.s32.totalorder %s38, 1
      %p329 = por %p327, %p328
      %p330 = scmp.ne.s32.totalorder %s321, %s322
      %p331 = scmp.eq.s32.totalorder %s38, 0
      %p332 = por %p330, %p331
      %p333 = scmp.ne.s32.totalorder %s321, %s322
      %p334 = scmp.eq.s32.totalorder %s39, 1
      %p335 = por %p333, %p334
      %p337 = scmp.ne.s32.totalorder %s322, %s336
      %p338 = scmp.eq.s32.totalorder %s39, 0
      %p339 = por %p337, %p338
      %s341 = sadd.s32 %s340, 1
      %p344 = scmp.eq.s32.totalorder %s33, 1
      %p345 = scmp.ne.s32.totalorder %s340, %s342
      %p346 = scmp.eq.s32.totalorder %s33, 0
      %p347 = por %p345, %p346
      %p348 = scmp.ne.s32.totalorder %s340, %s342
      %p349 = scmp.eq.s32.totalorder %s38, 1
      %p350 = por %p348, %p349
      %p351 = scmp.ne.s32.totalorder %s342, %s343
      %p352 = scmp.eq.s32.totalorder %s38, 0
      %p353 = por %p351, %p352
      %p354 = scmp.ne.s32.totalorder %s342, %s343
      %p355 = scmp.eq.s32.totalorder %s39, 1
      %p356 = por %p354, %p355
      %p358 = scmp.ne.s32.totalorder %s343, %s357
      %p359 = scmp.eq.s32.totalorder %s39, 0
      %p360 = por %p358, %p359
      %s362 = sadd.s32 %s361, 1
      %p365 = scmp.eq.s32.totalorder %s33, 1
      %p366 = scmp.ne.s32.totalorder %s361, %s363
      %p367 = scmp.eq.s32.totalorder %s33, 0
      %p368 = por %p366, %p367
      %p369 = scmp.ne.s32.totalorder %s361, %s363
      %p370 = scmp.eq.s32.totalorder %s38, 1
      %p371 = por %p369, %p370
      %p372 = scmp.ne.s32.totalorder %s363, %s364
      %p373 = scmp.eq.s32.totalorder %s38, 0
      %p374 = por %p372, %p373
      %p375 = scmp.ne.s32.totalorder %s363, %s364
      %p376 = scmp.eq.s32.totalorder %s39, 1
      %p377 = por %p375, %p376
      %p379 = scmp.ne.s32.totalorder %s364, %s378
      %p380 = scmp.eq.s32.totalorder %s39, 0
      %p381 = por %p379, %p380
      %s383 = sadd.s32 %s382, 1
      %p386 = scmp.eq.s32.totalorder %s33, 1
      %p387 = scmp.ne.s32.totalorder %s382, %s384
      %p388 = scmp.eq.s32.totalorder %s33, 0
      %p389 = por %p387, %p388
      %p390 = scmp.ne.s32.totalorder %s382, %s384
      %p391 = scmp.eq.s32.totalorder %s38, 1
      %p392 = por %p390, %p391
      %p393 = scmp.ne.s32.totalorder %s384, %s385
      %p394 = scmp.eq.s32.totalorder %s38, 0
      %p395 = por %p393, %p394
      %p396 = scmp.ne.s32.totalorder %s384, %s385
      %p397 = scmp.eq.s32.totalorder %s39, 1
      %p398 = por %p396, %p397
      %p400 = scmp.ne.s32.totalorder %s385, %s399
      %p401 = scmp.eq.s32.totalorder %s39, 0
      %p402 = por %p400, %p401
      %s404 = sadd.s32 %s403, 1
      %p407 = scmp.eq.s32.totalorder %s33, 1
      %p408 = scmp.ne.s32.totalorder %s403, %s405
      %p409 = scmp.eq.s32.totalorder %s33, 0
      %p410 = por %p408, %p409
      %p411 = scmp.ne.s32.totalorder %s403, %s405
      %p412 = scmp.eq.s32.totalorder %s38, 1
      %p413 = por %p411, %p412
      %p414 = scmp.ne.s32.totalorder %s405, %s406
      %p415 = scmp.eq.s32.totalorder %s38, 0
      %p416 = por %p414, %p415
      %p417 = scmp.ne.s32.totalorder %s405, %s406
      %p418 = scmp.eq.s32.totalorder %s39, 1
      %p419 = por %p417, %p418
      %p421 = scmp.ne.s32.totalorder %s406, %s420
      %p422 = scmp.eq.s32.totalorder %s39, 0
      %p423 = por %p421, %p422
      %s425 = sadd.s32 %s424, 1
      %p428 = scmp.eq.s32.totalorder %s33, 1
      %p429 = scmp.ne.s32.totalorder %s424, %s426
      %p430 = scmp.eq.s32.totalorder %s33, 0
      %p431 = por %p429, %p430
      %p432 = scmp.ne.s32.totalorder %s424, %s426
      %p433 = scmp.eq.s32.totalorder %s38, 1
      %p434 = por %p432, %p433
      %p435 = scmp.ne.s32.totalorder %s426, %s427
      %p436 = scmp.eq.s32.totalorder %s38, 0
      %p437 = por %p435, %p436
      %p438 = scmp.ne.s32.totalorder %s426, %s427
      %p439 = scmp.eq.s32.totalorder %s39, 1
      %p440 = por %p438, %p439
      %p442 = scmp.ne.s32.totalorder %s427, %s441
      %p443 = scmp.eq.s32.totalorder %s39, 0
      %p444 = por %p442, %p443
      %s445 = ssub.s32 %s33, %s40
      %p446 = scmp.eq.s32.totalorder %s445, 0
      %s448 = sadd.s32 %s447, 1
      %s449 = scalar_select %p446, %s447, %s448
      %p452 = pneg %p446
      %p453 = scmp.eq.s32.totalorder %s33, 1
      %p454 = por %p452, %p453
      %p455 = scmp.ne.s32.totalorder %s447, %s450
      %p456 = scmp.eq.s32.totalorder %s33, 0
      %p457 = por %p455, %p456
      %p458 = scmp.ne.s32.totalorder %s447, %s450
      %p459 = scmp.eq.s32.totalorder %s38, 1
      %p460 = por %p458, %p459
      %p461 = scmp.ne.s32.totalorder %s450, %s451
      %p462 = scmp.eq.s32.totalorder %s38, 0
      %p463 = por %p461, %p462
      %p464 = scmp.ne.s32.totalorder %s450, %s451
      %p465 = scmp.eq.s32.totalorder %s39, 1
      %p466 = por %p464, %p465
      %p468 = scmp.ne.s32.totalorder %s451, %s467
      %p469 = scmp.eq.s32.totalorder %s39, 0
      %p470 = por %p468, %p469
      %s471 = ssub.s32 %s33, %s40
      %p472 = scmp.eq.s32.totalorder %s471, 0
      %s474 = sadd.s32 %s473, 1
      %s475 = scalar_select %p472, %s473, %s474
      %p478 = pneg %p472
      %p479 = scmp.eq.s32.totalorder %s33, 1
      %p480 = por %p478, %p479
      %p481 = scmp.ne.s32.totalorder %s473, %s476
      %p482 = scmp.eq.s32.totalorder %s33, 0
      %p483 = por %p481, %p482
      %p484 = scmp.ne.s32.totalorder %s473, %s476
      %p485 = scmp.eq.s32.totalorder %s38, 1
      %p486 = por %p484, %p485
      %p487 = scmp.ne.s32.totalorder %s476, %s477
      %p488 = scmp.eq.s32.totalorder %s38, 0
      %p489 = por %p487, %p488
      %p490 = scmp.ne.s32.totalorder %s476, %s477
      %p491 = scmp.eq.s32.totalorder %s39, 1
      %p492 = por %p490, %p491
      %p494 = scmp.ne.s32.totalorder %s477, %s493
      %p495 = scmp.eq.s32.totalorder %s39, 0
      %p496 = por %p494, %p495
      %p497 = scmp.le.s32.totalorder 1, %s33
      %p498 = scmp.lt.s32.totalorder %s33, 3
      %p499 = pnand %p497, %p498
      %p500 = pneg %p499
      // Predicated region
      $region9: #{tpu_custom_call.1} parent=5 // pred_check
        _
      $region10: #{tpu_custom_call.1} parent=5 // pred_check_branch
        %502 = sbr.rel (%p499) target = $region12
      $region11: #{tpu_custom_call.1} parent=5 // pred_region
        %s503 = ssub.s32 %s33, 1
        // Predicated region
        $region13: #{tpu_custom_call.1} parent=11 // pred_check
          %p504 = pneg %p80
        $region14: #{tpu_custom_call.1} parent=11 // pred_check_branch
          %506 = sbr.rel (%p504) target = $region16
        $region15: #{tpu_custom_call.1} parent=11 // pred_region
          _
        $region16: #{tpu_custom_call.1} parent=11 // pred_fallthru
          _
        // Predicated region
        $region17: #{tpu_custom_call.1} parent=11 // pred_check
          %p507 = pneg %p101
        $region18: #{tpu_custom_call.1} parent=11 // pred_check_branch
          %509 = sbr.rel (%p507) target = $region20
        $region19: #{tpu_custom_call.1} parent=11 // pred_region
          _
        $region20: #{tpu_custom_call.1} parent=11 // pred_fallthru
          _
        // Predicated region
        $region21: #{tpu_custom_call.1} parent=11 // pred_check
          %p510 = pneg %p122
        $region22: #{tpu_custom_call.1} parent=11 // pred_check_branch
          %512 = sbr.rel (%p510) target = $region24
        $region23: #{tpu_custom_call.1} parent=11 // pred_region
          _
        $region24: #{tpu_custom_call.1} parent=11 // pred_fallthru
          _
        // Predicated region
        $region25: #{tpu_custom_call.1} parent=11 // pred_check
          %p513 = pneg %p143
        $region26: #{tpu_custom_call.1} parent=11 // pred_check_branch
          %515 = sbr.rel (%p513) target = $region28
        $region27: #{tpu_custom_call.1} parent=11 // pred_region
          _
        $region28: #{tpu_custom_call.1} parent=11 // pred_fallthru
          _
        // Predicated region
        $region29: #{tpu_custom_call.1} parent=11 // pred_check
          %p516 = pneg %p164
        $region30: #{tpu_custom_call.1} parent=11 // pred_check_branch
          %518 = sbr.rel (%p516) target = $region32
        $region31: #{tpu_custom_call.1} parent=11 // pred_region
          _
        $region32: #{tpu_custom_call.1} parent=11 // pred_fallthru
          _
        // Predicated region
        $region33: #{tpu_custom_call.1} parent=11 // pred_check
          %p519 = pneg %p185
        $region34: #{tpu_custom_call.1} parent=11 // pred_check_branch
          %521 = sbr.rel (%p519) target = $region36
        $region35: #{tpu_custom_call.1} parent=11 // pred_region
          _
        $region36: #{tpu_custom_call.1} parent=11 // pred_fallthru
          _
        // Predicated region
        $region37: #{tpu_custom_call.1} parent=11 // pred_check
          %p522 = pneg %p206
        $region38: #{tpu_custom_call.1} parent=11 // pred_check_branch
          %524 = sbr.rel (%p522) target = $region40
        $region39: #{tpu_custom_call.1} parent=11 // pred_region
          _
        $region40: #{tpu_custom_call.1} parent=11 // pred_fallthru
          _
        // Predicated region
        $region41: #{tpu_custom_call.1} parent=11 // pred_check
          %p525 = pneg %p227
        $region42: #{tpu_custom_call.1} parent=11 // pred_check_branch
          %527 = sbr.rel (%p525) target = $region44
        $region43: #{tpu_custom_call.1} parent=11 // pred_region
          _
        $region44: #{tpu_custom_call.1} parent=11 // pred_fallthru
          _
        // Predicated region
        $region45: #{tpu_custom_call.1} parent=11 // pred_check
          %p528 = pneg %p248
        $region46: #{tpu_custom_call.1} parent=11 // pred_check_branch
          %530 = sbr.rel (%p528) target = $region48
        $region47: #{tpu_custom_call.1} parent=11 // pred_region
          _
        $region48: #{tpu_custom_call.1} parent=11 // pred_fallthru
          _
        // Predicated region
        $region49: #{tpu_custom_call.1} parent=11 // pred_check
          %p531 = pneg %p269
        $region50: #{tpu_custom_call.1} parent=11 // pred_check_branch
          %533 = sbr.rel (%p531) target = $region52
        $region51: #{tpu_custom_call.1} parent=11 // pred_region
          _
        $region52: #{tpu_custom_call.1} parent=11 // pred_fallthru
          _
        // Predicated region
        $region53: #{tpu_custom_call.1} parent=11 // pred_check
          %p534 = pneg %p290
        $region54: #{tpu_custom_call.1} parent=11 // pred_check_branch
          %536 = sbr.rel (%p534) target = $region56
        $region55: #{tpu_custom_call.1} parent=11 // pred_region
          _
        $region56: #{tpu_custom_call.1} parent=11 // pred_fallthru
          _
        // Predicated region
        $region57: #{tpu_custom_call.1} parent=11 // pred_check
          %p537 = pneg %p311
        $region58: #{tpu_custom_call.1} parent=11 // pred_check_branch
          %539 = sbr.rel (%p537) target = $region60
        $region59: #{tpu_custom_call.1} parent=11 // pred_region
          _
        $region60: #{tpu_custom_call.1} parent=11 // pred_fallthru
          _
        // Predicated region
        $region61: #{tpu_custom_call.1} parent=11 // pred_check
          %p540 = pneg %p332
        $region62: #{tpu_custom_call.1} parent=11 // pred_check_branch
          %542 = sbr.rel (%p540) target = $region64
        $region63: #{tpu_custom_call.1} parent=11 // pred_region
          _
        $region64: #{tpu_custom_call.1} parent=11 // pred_fallthru
          _
        // Predicated region
        $region65: #{tpu_custom_call.1} parent=11 // pred_check
          %p543 = pneg %p353
        $region66: #{tpu_custom_call.1} parent=11 // pred_check_branch
          %545 = sbr.rel (%p543) target = $region68
        $region67: #{tpu_custom_call.1} parent=11 // pred_region
          _
        $region68: #{tpu_custom_call.1} parent=11 // pred_fallthru
          _
        // Predicated region
        $region69: #{tpu_custom_call.1} parent=11 // pred_check
          %p546 = pneg %p374
        $region70: #{tpu_custom_call.1} parent=11 // pred_check_branch
          %548 = sbr.rel (%p546) target = $region72
        $region71: #{tpu_custom_call.1} parent=11 // pred_region
          _
        $region72: #{tpu_custom_call.1} parent=11 // pred_fallthru
          _
        // Predicated region
        $region73: #{tpu_custom_call.1} parent=11 // pred_check
          %p549 = pneg %p395
        $region74: #{tpu_custom_call.1} parent=11 // pred_check_branch
          %551 = sbr.rel (%p549) target = $region76
        $region75: #{tpu_custom_call.1} parent=11 // pred_region
          _
        $region76: #{tpu_custom_call.1} parent=11 // pred_fallthru
          _
        // Predicated region
        $region77: #{tpu_custom_call.1} parent=11 // pred_check
          %p552 = pneg %p416
        $region78: #{tpu_custom_call.1} parent=11 // pred_check_branch
          %554 = sbr.rel (%p552) target = $region80
        $region79: #{tpu_custom_call.1} parent=11 // pred_region
          _
        $region80: #{tpu_custom_call.1} parent=11 // pred_fallthru
          _
        // Predicated region
        $region81: #{tpu_custom_call.1} parent=11 // pred_check
          %p555 = pneg %p437
        $region82: #{tpu_custom_call.1} parent=11 // pred_check_branch
          %557 = sbr.rel (%p555) target = $region84
        $region83: #{tpu_custom_call.1} parent=11 // pred_region
          _
        $region84: #{tpu_custom_call.1} parent=11 // pred_fallthru
          _
      $region12: #{tpu_custom_call.1} parent=5 // pred_fallthru
        _
      %p558 = scmp.lt.s32.totalorder %s33, 2
      // Predicated region
      $region85: #{tpu_custom_call.1} parent=5 // pred_check
        %p559 = pneg %p558
      $region86: #{tpu_custom_call.1} parent=5 // pred_check_branch
        %561 = sbr.rel (%p559) target = $region88
      $region87: #{tpu_custom_call.1} parent=5 // pred_region
        // Predicated region
        $region89: #{tpu_custom_call.1} parent=87 // pred_check
          %p562 = pneg %p53
        $region90: #{tpu_custom_call.1} parent=87 // pred_check_branch
          %564 = sbr.rel (%p562) target = $region92
        $region91: #{tpu_custom_call.1} parent=87 // pred_region
          %p565 = scmp.lt.s32.totalorder %s33, 1
          %s566 = scalar_select %p565, %s33, 1
          %s567 = smul.addr %s566, 2
          %s568 = smul.addr %s567, 8
          %s569 = scalar_lea.vmem %s0, %s568
        $region92: #{tpu_custom_call.1} parent=87 // pred_fallthru
          _
      $region88: #{tpu_custom_call.1} parent=5 // pred_fallthru
        _
      %p570 = scmp.le.s32.totalorder 1, %s33
      %p571 = scmp.lt.s32.totalorder %s33, 3
      %p572 = pnand %p570, %p571
      %p573 = pneg %p572
      // Predicated region
      $region93: #{tpu_custom_call.1} parent=5 // pred_check
        _
      $region94: #{tpu_custom_call.1} parent=5 // pred_check_branch
        %575 = sbr.rel (%p572) target = $region96
      $region95: #{tpu_custom_call.1} parent=5 // pred_region
        %s576 = ssub.s32 %s33, 1
        %p577 = scmp.lt.s32.totalorder %s38, 1
        %s578 = scalar_select %p577, %s38, 1
        %s579 = smul.addr %s578, 2
        %s580 = smul.addr %s579, 8
        %s581 = scalar_lea.vmem %s0, %s580
        %p582 = pneg %p59
        %p583 = pneg %p56
        %p584 = pneg %p80
        %p585 = pneg %p77
        %p586 = pneg %p101
        %p587 = pneg %p98
        %p588 = pneg %p122
        %p589 = pneg %p119
        %p590 = pneg %p143
        %p591 = pneg %p140
        %p592 = pneg %p164
        %p593 = pneg %p161
        %p594 = pneg %p185
        %p595 = pneg %p182
        %p596 = pneg %p206
        %p597 = pneg %p203
        %p598 = pneg %p227
        %p599 = pneg %p224
        %p600 = pneg %p248
        %p601 = pneg %p245
        %p602 = pneg %p269
        %p603 = pneg %p266
        %p604 = pneg %p290
        %p605 = pneg %p287
        %p606 = pneg %p311
        %p607 = pneg %p308
        %p608 = pneg %p332
        %p609 = pneg %p329
        %p610 = pneg %p353
        %p611 = pneg %p350
        %p612 = pneg %p374
        %p613 = pneg %p371
        %p614 = pneg %p395
        %p615 = pneg %p392
        %p616 = pneg %p416
        %p617 = pneg %p413
        %p618 = pneg %p437
        %p619 = pneg %p434
        %p620 = pneg %p463
        %p621 = pneg %p460
        %s622 = sand.u32 %s450, 1
        %s623 = scalar_lea.sflag [#allocation4], %s622
        %s624 = sand.u32 %s450, 1
        %s625 = scalar_lea.vmem [#allocation3], %s624
        %p626 = pneg %p489
        %p627 = pneg %p486
        %s628 = sand.u32 %s476, 1
        %s629 = scalar_lea.sflag [#allocation6], %s628
        %s630 = sand.u32 %s476, 1
        %s631 = scalar_lea.vmem [#allocation5], %s630
        %p632 = scmp.lt.s32.totalorder %s38, 1
        %s633 = scalar_select %p632, %s38, 1
        %s634 = smul.addr %s633, 2
        %s635 = smul.addr %s634, 8
        %s636 = scalar_lea.vmem %s0, %s635
        %v638 = vld [vmem:[%s1] sm:$0x1]
        %v639 = vld [vmem:[%s2] sm:$0x1]
        %v640 = vadd.f32 %v638, %v639
        %vm641 = vcmask 253952
        %642 = vst.msk [vmem:[#allocation2] sm:$0x1] %vm641, %v640
        %v643 = vld [vmem:[%s636] sm:$0xff]
        %v644 = vld [vmem:[%s636 + $0x8] sm:$0xff]
        %v645 = vld [vmem:[%s2 + $0x1] sm:$0xff]
        %v646 = vld [vmem:[%s2 + $0x9] sm:$0xff]
        %v647 = vadd.f32 %v643, %v645
        %v648 = vadd.f32 %v644, %v646
        %vm649 = vcmask 261120
        %650 = vst.msk [vmem:[#allocation2 + $0x1] sm:$0xff] %vm649, %v647
        %651 = vst.msk [vmem:[#allocation2 + $0x9] sm:$0xff] %vm649, %v648
        %v652 = vld [vmem:[#allocation2] sm:$0xff]
        %v653 = vld [vmem:[#allocation2 + $0x8] sm:$0xff]
        %v654 = vld [vmem:[#allocation2 + $0x10] sm:$0x1]
        %v655 = vld [vmem:[%s3] sm:$0x1]
        %v656 = vld [vmem:[%s4] sm:$0x1]
        %v657 = vsel %vm649, %v652, 0.0
        %658 = vadd.xlane.f32.xlu0 %v657
        %v659 = vpop.xlane.xlu0 %658
        %v660 = vsel %vm649, %v653, 0.0
        %661 = vadd.xlane.f32.xlu0 %v660
        %v662 = vpop.xlane.xlu0 %661
        %v663 = vsel %vm641, %v654, 0.0
        %664 = vadd.xlane.f32.xlu0 %v663
        %v665 = vpop.xlane.xlu0 %664
        %v666 = vrcp.pop 32.0
        %v667 = vmul.f32 %v659, %v666
        %v668 = vmul.f32 %v662, %v666
        %v669 = vmul.f32 %v665, %v666
        %v670 = vsub.f32 %v652, %v667
        %v671 = vsub.f32 %v653, %v668
        %v672 = vsub.f32 %v654, %v669
        %v673 = vmul.f32 %v670, %v670
        %v674 = vmul.f32 %v671, %v671
        %v675 = vmul.f32 %v672, %v672
        %v676 = vsel %vm649, %v673, 0.0
        %677 = vadd.xlane.f32.xlu0 %v676
        %v678 = vpop.xlane.xlu0 %677
        %v679 = vsel %vm649, %v674, 0.0
        %680 = vadd.xlane.f32.xlu0 %v679
        %v681 = vpop.xlane.xlu0 %680
        %v682 = vsel %vm641, %v675, 0.0
        %683 = vadd.xlane.f32.xlu0 %v682
        %v684 = vpop.xlane.xlu0 %683
        %v685 = vmul.f32 %v678, %v666
        %v686 = vmul.f32 %v681, %v666
        %v687 = vmul.f32 %v684, %v666
        %v688 = vadd.f32 %v685, 1e-05
        %v689 = vadd.f32 %v686, 1e-05
        %v690 = vadd.f32 %v687, 1e-05
        %v691 = vrsqrt.pop %v688
        %v692 = vrsqrt.pop %v689
        %v693 = vrsqrt.pop %v690
        %v694 = vmul.f32 %v670, %v691
        %v695 = vmul.f32 %v671, %v692
        %v696 = vmul.f32 %v672, %v693
        %v698 = vlaneseq
        %v699 = vshrl.u32 %v698, 7
        %v700 = vsub.s32 0, %v699
        %v701 = vrot.slane %v655, %v700
        %v703 = vmul.f32 %v694, %v701
        %v704 = vmul.f32 %v695, %v701
        %v705 = vmul.f32 %v696, %v701
        %v707 = vlaneseq
        %v708 = vshrl.u32 %v707, 7
        %v709 = vsub.s32 0, %v708
        %v710 = vrot.slane %v656, %v709
        %v712 = vadd.f32 %v703, %v710
        %v713 = vadd.f32 %v704, %v710
        %v714 = vadd.f32 %v705, %v710
        %v715 = vld [vmem:[%s5] sm:$0xf]
        %v716 = vld [vmem:[%s5 + $0x4] sm:$0xf]
        %v717 = vld [vmem:[%s5 + $0x8] sm:$0xf]
        %v718 = vld [vmem:[%s5 + $0xc] sm:$0xf]
        %v719 = vpack.c.bf16 %v713, %v712
        %v720 = vpack.c.bf16 %v714, %v714
        %v721 = vld [vmem:[%s6] sm:$0x1]
        %v723 = vlaneseq
        %v724 = vshrl.u32 %v723, 7
        %v725 = vsub.s32 0, %v724
        %v726 = vrot.slane %v721, %v725
        %v732 = vunpack.c.l.b16 %v715
        %v733 = vunpack.c.l.b16 %v716
        %v734 = vunpack.c.l.b16 %v717
        %v735 = vunpack.c.l.b16 %v718
        %v736 = vpack.c.b16 %v733, %v732
        %v737 = vpack.c.b16 %v735, %v734
        %v741 = vsel %vm649, %v719, 0
        %v744 = vsel %vm649, %v720, 0
        %746 = vmatprep.subr.bf16.mxu0 0
        %747 = vmatpush1.bf16.msra.mxu0 %v736
        %748 = vmatprep.subr.bf16.mxu0 0
        %749 = vmatpush1.bf16.msra.mxu0 %v737
        %750 = vmatprep.subr.bf16.mxu0 0
        %751 = vmatpush1.bf16.msra.mxu0 0
        %752 = vmatprep.subr.bf16.mxu0 0
        %753 = vmatpush1.bf16.msra.mxu0 0
        %754 = vmatprep.subr.bf16.mxu0 0
        %755 = vmatpush1.bf16.msra.mxu0 0
        %756 = vmatprep.subr.bf16.mxu0 0
        %757 = vmatpush1.bf16.msra.mxu0 0
        %758 = vmatprep.subr.bf16.mxu0 0
        %759 = vmatpush1.bf16.msra.mxu0 0
        %760 = vmatprep.subr.bf16.mxu0 0
        %761 = vmatpush1.bf16.msra.mxu0 0
        %762 = vmatprep.subr.bf16.mxu0 0
        %763 = vmatpush1.bf16.msra.mxu0 0
        %764 = vmatprep.subr.bf16.mxu0 0
        %765 = vmatpush1.bf16.msra.mxu0 0
        %766 = vmatprep.subr.bf16.mxu0 0
        %767 = vmatpush1.bf16.msra.mxu0 0
        %768 = vmatprep.subr.bf16.mxu0 0
        %769 = vmatpush1.bf16.msra.mxu0 0
        %770 = vmatprep.subr.bf16.mxu0 0
        %771 = vmatpush1.bf16.msra.mxu0 0
        %772 = vmatprep.subr.bf16.mxu0 0
        %773 = vmatpush1.bf16.msra.mxu0 0
        %774 = vmatprep.subr.bf16.mxu0 0
        %775 = vmatpush1.bf16.msra.mxu0 0
        %776 = vmatprep.subr.bf16.mxu0 0
        %777 = vmatpush1.bf16.msra.mxu0 0
        %778 = vmatprep.mubr.bf16.mxu0 0
        %779 = vmatmul.mubr.bf16.gmra.mrb[0].mxu0 %v741
        %v780 = vpop.f32.mrb[0].mxu0
        %v781 = vadd.f32 %v726, %v780
        %v782 = vpop.f32.mrb[0].mxu0
        %v783 = vpop.f32.mrb[0].mxu0
        %v784 = vadd.f32 %v726, %v783
        %v785 = vpop.f32.mrb[0].mxu0
        %786 = vmatprep.mubr.bf16.mxu0 0
        %787 = vmatmul.mubr.bf16.gmra.mrb[0].mxu0 %v744
        %v788 = vpop.f32.mrb[0].mxu0
        %v789 = vadd.f32 %v726, %v788
        %v790 = vpop.f32.mrb[0].mxu0
        %v791 = vpop.f32.mrb[0].mxu0
        %v792 = vpop.f32.mrb[0].mxu0
        %793 = vdwg.mxu0
        %v794 = vld [vmem:[%s7] sm:$0xf]
        %v795 = vld [vmem:[%s7 + $0x4] sm:$0xf]
        %v796 = vld [vmem:[%s7 + $0x8] sm:$0xf]
        %v797 = vld [vmem:[%s7 + $0xc] sm:$0xf]
        %v798 = vld [vmem:[%s8] sm:$0x1]
        %v800 = vlaneseq
        %v801 = vshrl.u32 %v800, 7
        %v802 = vsub.s32 0, %v801
        %v803 = vrot.slane %v798, %v802
        %v809 = vunpack.c.l.b16 %v794
        %v810 = vunpack.c.l.b16 %v795
        %v811 = vunpack.c.l.b16 %v796
        %v812 = vunpack.c.l.b16 %v797
        %v813 = vpack.c.b16 %v810, %v809
        %v814 = vpack.c.b16 %v812, %v811
        %817 = vmatprep.subr.bf16.mxu0 0
        %818 = vmatpush1.bf16.msra.mxu0 %v813
        %819 = vmatprep.subr.bf16.mxu0 0
        %820 = vmatpush1.bf16.msra.mxu0 %v814
        %821 = vmatprep.subr.bf16.mxu0 0
        %822 = vmatpush1.bf16.msra.mxu0 0
        %823 = vmatprep.subr.bf16.mxu0 0
        %824 = vmatpush1.bf16.msra.mxu0 0
        %825 = vmatprep.subr.bf16.mxu0 0
        %826 = vmatpush1.bf16.msra.mxu0 0
        %827 = vmatprep.subr.bf16.mxu0 0
        %828 = vmatpush1.bf16.msra.mxu0 0
        %829 = vmatprep.subr.bf16.mxu0 0
        %830 = vmatpush1.bf16.msra.mxu0 0
        %831 = vmatprep.subr.bf16.mxu0 0
        %832 = vmatpush1.bf16.msra.mxu0 0
        %833 = vmatprep.subr.bf16.mxu0 0
        %834 = vmatpush1.bf16.msra.mxu0 0
        %835 = vmatprep.subr.bf16.mxu0 0
        %836 = vmatpush1.bf16.msra.mxu0 0
        %837 = vmatprep.subr.bf16.mxu0 0
        %838 = vmatpush1.bf16.msra.mxu0 0
        %839 = vmatprep.subr.bf16.mxu0 0
        %840 = vmatpush1.bf16.msra.mxu0 0
        %841 = vmatprep.subr.bf16.mxu0 0
        %842 = vmatpush1.bf16.msra.mxu0 0
        %843 = vmatprep.subr.bf16.mxu0 0
        %844 = vmatpush1.bf16.msra.mxu0 0
        %845 = vmatprep.subr.bf16.mxu0 0
        %846 = vmatpush1.bf16.msra.mxu0 0
        %847 = vmatprep.subr.bf16.mxu0 0
        %848 = vmatpush1.bf16.msra.mxu0 0
        %849 = vmatprep.mubr.bf16.mxu0 0
        %850 = vmatmul.mubr.bf16.gmra.mrb[0].mxu0 %v741
        %v851 = vpop.f32.mrb[0].mxu0
        %v852 = vadd.f32 %v803, %v851
        %v853 = vpop.f32.mrb[0].mxu0
        %v854 = vpop.f32.mrb[0].mxu0
        %v855 = vadd.f32 %v803, %v854
        %v856 = vpop.f32.mrb[0].mxu0
        %857 = vmatprep.mubr.bf16.mxu0 0
        %858 = vmatmul.mubr.bf16.gmra.mrb[0].mxu0 %v744
        %v859 = vpop.f32.mrb[0].mxu0
        %v860 = vadd.f32 %v803, %v859
        %v861 = vpop.f32.mrb[0].mxu0
        %v862 = vpop.f32.mrb[0].mxu0
        %v863 = vpop.f32.mrb[0].mxu0
        %864 = vdwg.mxu0
        %v865 = vld [vmem:[%s9] sm:$0xf]
        %v866 = vld [vmem:[%s9 + $0x4] sm:$0xf]
        %v867 = vld [vmem:[%s9 + $0x8] sm:$0xf]
        %v868 = vld [vmem:[%s9 + $0xc] sm:$0xf]
        %v869 = vld [vmem:[%s10] sm:$0x1]
        %v871 = vlaneseq
        %v872 = vshrl.u32 %v871, 7
        %v873 = vsub.s32 0, %v872
        %v874 = vrot.slane %v869, %v873
        %v880 = vunpack.c.l.b16 %v865
        %v881 = vunpack.c.l.b16 %v866
        %v882 = vunpack.c.l.b16 %v867
        %v883 = vunpack.c.l.b16 %v868
        %v884 = vpack.c.b16 %v881, %v880
        %v885 = vpack.c.b16 %v883, %v882
        %888 = vmatprep.subr.bf16.mxu0 0
        %889 = vmatpush1.bf16.msra.mxu0 %v884
        %890 = vmatprep.subr.bf16.mxu0 0
        %891 = vmatpush1.bf16.msra.mxu0 %v885
        %892 = vmatprep.subr.bf16.mxu0 0
        %893 = vmatpush1.bf16.msra.mxu0 0
        %894 = vmatprep.subr.bf16.mxu0 0
        %895 = vmatpush1.bf16.msra.mxu0 0
        %896 = vmatprep.subr.bf16.mxu0 0
        %897 = vmatpush1.bf16.msra.mxu0 0
        %898 = vmatprep.subr.bf16.mxu0 0
        %899 = vmatpush1.bf16.msra.mxu0 0
        %900 = vmatprep.subr.bf16.mxu0 0
        %901 = vmatpush1.bf16.msra.mxu0 0
        %902 = vmatprep.subr.bf16.mxu0 0
        %903 = vmatpush1.bf16.msra.mxu0 0
        %904 = vmatprep.subr.bf16.mxu0 0
        %905 = vmatpush1.bf16.msra.mxu0 0
        %906 = vmatprep.subr.bf16.mxu0 0
        %907 = vmatpush1.bf16.msra.mxu0 0
        %908 = vmatprep.subr.bf16.mxu0 0
        %909 = vmatpush1.bf16.msra.mxu0 0
        %910 = vmatprep.subr.bf16.mxu0 0
        %911 = vmatpush1.bf16.msra.mxu0 0
        %912 = vmatprep.subr.bf16.mxu0 0
        %913 = vmatpush1.bf16.msra.mxu0 0
        %914 = vmatprep.subr.bf16.mxu0 0
        %915 = vmatpush1.bf16.msra.mxu0 0
        %916 = vmatprep.subr.bf16.mxu0 0
        %917 = vmatpush1.bf16.msra.mxu0 0
        %918 = vmatprep.subr.bf16.mxu0 0
        %919 = vmatpush1.bf16.msra.mxu0 0
        %920 = vmatprep.mubr.bf16.mxu0 0
        %921 = vmatmul.mubr.bf16.gmra.mrb[0].mxu0 %v741
        %v922 = vpop.f32.mrb[0].mxu0
        %v923 = vadd.f32 %v874, %v922
        %v924 = vpop.f32.mrb[0].mxu0
        %v925 = vpop.f32.mrb[0].mxu0
        %v926 = vadd.f32 %v874, %v925
        %v927 = vpop.f32.mrb[0].mxu0
        %928 = vmatprep.mubr.bf16.mxu0 0
        %929 = vmatmul.mubr.bf16.gmra.mrb[0].mxu0 %v744
        %v930 = vpop.f32.mrb[0].mxu0
        %v931 = vadd.f32 %v874, %v930
        %v932 = vpop.f32.mrb[0].mxu0
        %v933 = vpop.f32.mrb[0].mxu0
        %v934 = vpop.f32.mrb[0].mxu0
        %935 = vdwg.mxu0
        %v936 = vpack.c.bf16 %v784, %v781
        %v937 = vpack.c.bf16 %v789, %v789
        %v938 = vpack.c.bf16 %v855, %v852
        %v939 = vpack.c.bf16 %v860, %v860
        %vm940 = vcmask 64512
        %v942 = vsel %vm940, %v936, 0
        %v945 = vsel %vm940, %v937, 0
        %v948 = vsel %vm940, %v938, 0
        %v951 = vsel %vm940, %v939, 0
        %953 = vmatprep.subr.bf16.mxu0 0
        %954 = vmatpush1.bf16.xpose.msra.mxu0 %v948
        %955 = vmatprep.subr.bf16.mxu0 0
        %956 = vmatpush1.bf16.xpose.msra.mxu0 %v951
        %957 = vmatprep.subr.bf16.mxu0 0
        %958 = vmatpush1.bf16.xpose.msra.mxu0 0
        %959 = vmatprep.subr.bf16.mxu0 0
        %960 = vmatpush1.bf16.xpose.msra.mxu0 0
        %961 = vmatprep.subr.bf16.mxu0 0
        %962 = vmatpush1.bf16.xpose.msra.mxu0 0
        %963 = vmatprep.subr.bf16.mxu0 0
        %964 = vmatpush1.bf16.xpose.msra.mxu0 0
        %965 = vmatprep.subr.bf16.mxu0 0
        %966 = vmatpush1.bf16.xpose.msra.mxu0 0
        %967 = vmatprep.subr.bf16.mxu0 0
        %968 = vmatpush1.bf16.xpose.msra.mxu0 0
        %969 = vmatprep.subr.bf16.mxu0 0
        %970 = vmatpush1.bf16.xpose.msra.mxu0 0
        %971 = vmatprep.subr.bf16.mxu0 0
        %972 = vmatpush1.bf16.xpose.msra.mxu0 0
        %973 = vmatprep.subr.bf16.mxu0 0
        %974 = vmatpush1.bf16.xpose.msra.mxu0 0
        %975 = vmatprep.subr.bf16.mxu0 0
        %976 = vmatpush1.bf16.xpose.msra.mxu0 0
        %977 = vmatprep.subr.bf16.mxu0 0
        %978 = vmatpush1.bf16.xpose.msra.mxu0 0
        %979 = vmatprep.subr.bf16.mxu0 0
        %980 = vmatpush1.bf16.xpose.msra.mxu0 0
        %981 = vmatprep.subr.bf16.mxu0 0
        %982 = vmatpush1.bf16.xpose.msra.mxu0 0
        %983 = vmatprep.subr.bf16.mxu0 0
        %984 = vmatpush1.bf16.xpose.msra.mxu0 0
        %985 = vmatprep.mubr.bf16.mxu0 0
        %986 = vmatmul.mubr.bf16.gmra.mrb[0].mxu0 %v942
        %v987 = vpop.f32.mrb[0].mxu0
        %v988 = vadd.f32 0.0, %v987
        %v989 = vpop.f32.mrb[0].mxu0
        %v990 = vpop.f32.mrb[0].mxu0
        %v991 = vadd.f32 0.0, %v990
        %v992 = vpop.f32.mrb[0].mxu0
        %993 = vmatprep.mubr.bf16.mxu0 0
        %994 = vmatmul.mubr.bf16.gmra.mrb[0].mxu0 %v945
        %v995 = vpop.f32.mrb[0].mxu0
        %v996 = vadd.f32 0.0, %v995
        %v997 = vpop.f32.mrb[0].mxu0
        %v998 = vpop.f32.mrb[0].mxu0
        %v999 = vpop.f32.mrb[0].mxu0
        %1000 = vdwg.mxu0
        %v1001 = vmul.f32 %v988, 0.35355338
        %v1002 = vmul.f32 %v991, 0.35355338
        %v1003 = vmul.f32 %v996, 0.35355338
        %vm1004 = vcmask 138240
        %v1005 = vsel %vm1004, %v1001, -inf
        %1006 = vmax.xlane.f32.xlu0 %v1005
        %v1007 = vpop.xlane.xlu0 %1006
        %v1008 = vsel %vm1004, %v1002, -inf
        %1009 = vmax.xlane.f32.xlu0 %v1008
        %v1010 = vpop.xlane.xlu0 %1009
        %vm1011 = vcmask 131072
        %v1012 = vsel %vm1011, %v1003, -inf
        %1013 = vmax.xlane.f32.xlu0 %v1012
        %v1014 = vpop.xlane.xlu0 %1013
        %v1015 = vsub.f32 %v1001, %v1007
        %v1016 = vsub.f32 %v1002, %v1010
        %v1017 = vsub.f32 %v1003, %v1014
        %v1018 = vmul.f32 %v1015, 1.442695
        %v1019 = vpow.pop %v1018
        %v1020 = vmul.f32 %v1016, 1.442695
        %v1021 = vpow.pop %v1020
        %v1022 = vmul.f32 %v1017, 1.442695
        %v1023 = vpow.pop %v1022
        %v1024 = vsel %vm1004, %v1019, 0.0
        %1025 = vadd.xlane.f32.xlu0 %v1024
        %v1026 = vpop.xlane.xlu0 %1025
        %v1027 = vsel %vm1004, %v1021, 0.0
        %1028 = vadd.xlane.f32.xlu0 %v1027
        %v1029 = vpop.xlane.xlu0 %1028
        %v1030 = vsel %vm1011, %v1023, 0.0
        %1031 = vadd.xlane.f32.xlu0 %v1030
        %v1032 = vpop.xlane.xlu0 %1031
        %v1033 = vrcp.pop %v1026
        %v1034 = vmul.f32 %v1019, %v1033
        %v1035 = vrcp.pop %v1029
        %v1036 = vmul.f32 %v1021, %v1035
        %v1037 = vrcp.pop %v1032
        %v1038 = vmul.f32 %v1023, %v1037
        %v1039 = vpack.c.bf16 %v1036, %v1034
        %v1040 = vpack.c.bf16 %v1038, %v1038
        %v1041 = vpack.c.bf16 %v926, %v923
        %v1042 = vpack.c.bf16 %v931, %v931
        %v1044 = vsel %vm1004, %v1039, 0
        %v1047 = vsel %vm1004, %v1040, 0
        %vm1049 = vcmask 1040384
        %v1050 = vsel 0, 4294967295, 65535
        %v1051 = vsel %vm1049, %v1050, 0
        %v1053 = vand.u32 %v1042, %v1051
        %1055 = vmatprep.subr.bf16.mxu0 0
        %1056 = vmatpush1.bf16.msra.mxu0 %v1041
        %1057 = vmatprep.subr.bf16.mxu0 0
        %1058 = vmatpush1.bf16.msra.mxu0 %v1053
        %1059 = vmatprep.subr.bf16.mxu0 0
        %1060 = vmatpush1.bf16.msra.mxu0 0
        %1061 = vmatprep.subr.bf16.mxu0 0
        %1062 = vmatpush1.bf16.msra.mxu0 0
        %1063 = vmatprep.subr.bf16.mxu0 0
        %1064 = vmatpush1.bf16.msra.mxu0 0
        %1065 = vmatprep.subr.bf16.mxu0 0
        %1066 = vmatpush1.bf16.msra.mxu0 0
        %1067 = vmatprep.subr.bf16.mxu0 0
        %1068 = vmatpush1.bf16.msra.mxu0 0
        %1069 = vmatprep.subr.bf16.mxu0 0
        %1070 = vmatpush1.bf16.msra.mxu0 0
        %1071 = vmatprep.subr.bf16.mxu0 0
        %1072 = vmatpush1.bf16.msra.mxu0 0
        %1073 = vmatprep.subr.bf16.mxu0 0
        %1074 = vmatpush1.bf16.msra.mxu0 0
        %1075 = vmatprep.subr.bf16.mxu0 0
        %1076 = vmatpush1.bf16.msra.mxu0 0
        %1077 = vmatprep.subr.bf16.mxu0 0
        %1078 = vmatpush1.bf16.msra.mxu0 0
        %1079 = vmatprep.subr.bf16.mxu0 0
        %1080 = vmatpush1.bf16.msra.mxu0 0
        %1081 = vmatprep.subr.bf16.mxu0 0
        %1082 = vmatpush1.bf16.msra.mxu0 0
        %1083 = vmatprep.subr.bf16.mxu0 0
        %1084 = vmatpush1.bf16.msra.mxu0 0
        %1085 = vmatprep.subr.bf16.mxu0 0
        %1086 = vmatpush1.bf16.msra.mxu0 0
        %1087 = vmatprep.mubr.bf16.mxu0 0
        %1088 = vmatmul.mubr.bf16.gmra.mrb[0].mxu0 %v1044
        %v1089 = vpop.f32.mrb[0].mxu0
        %v1090 = vadd.f32 0.0, %v1089
        %v1091 = vpop.f32.mrb[0].mxu0
        %v1092 = vpop.f32.mrb[0].mxu0
        %v1093 = vadd.f32 0.0, %v1092
        %v1094 = vpop.f32.mrb[0].mxu0
        %1095 = vmatprep.mubr.bf16.mxu0 0
        %1096 = vmatmul.mubr.bf16.gmra.mrb[0].mxu0 %v1047
        %v1097 = vpop.f32.mrb[0].mxu0
        %v1098 = vadd.f32 0.0, %v1097
        %v1099 = vpop.f32.mrb[0].mxu0
        %v1100 = vpop.f32.mrb[0].mxu0
        %v1101 = vpop.f32.mrb[0].mxu0
        %1102 = vdwg.mxu0
        %v1103 = vld [vmem:[%s11] sm:$0xf]
        %v1104 = vpack.c.bf16 %v1093, %v1090
        %v1105 = vpack.c.bf16 %v1098, %v1098
        %s1106 = scalar_lea.vmem %s5, 16
        %v1107 = vld [vmem:[%s1106] sm:$0xf]
        %v1108 = vld [vmem:[%s1106 + $0x4] sm:$0xf]
        %v1109 = vld [vmem:[%s1106 + $0x8] sm:$0xf]
        %v1110 = vld [vmem:[%s1106 + $0xc] sm:$0xf]
        %s1111 = scalar_lea.vmem %s6, 1
        %v1112 = vld [vmem:[%s1111] sm:$0x1]
        %v1114 = vlaneseq
        %v1115 = vshrl.u32 %v1114, 7
        %v1116 = vsub.s32 0, %v1115
        %v1117 = vrot.slane %v1112, %v1116
        %v1123 = vunpack.c.l.b16 %v1107
        %v1124 = vunpack.c.l.b16 %v1108
        %v1125 = vunpack.c.l.b16 %v1109
        %v1126 = vunpack.c.l.b16 %v1110
        %v1127 = vpack.c.b16 %v1124, %v1123
        %v1128 = vpack.c.b16 %v1126, %v1125
        %1131 = vmatprep.subr.bf16.mxu0 0
        %1132 = vmatpush1.bf16.msra.mxu0 %v1127
        %1133 = vmatprep.subr.bf16.mxu0 0
        %1134 = vmatpush1.bf16.msra.mxu0 %v1128
        %1135 = vmatprep.subr.bf16.mxu0 0
        %1136 = vmatpush1.bf16.msra.mxu0 0
        %1137 = vmatprep.subr.bf16.mxu0 0
        %1138 = vmatpush1.bf16.msra.mxu0 0
        %1139 = vmatprep.subr.bf16.mxu0 0
        %1140 = vmatpush1.bf16.msra.mxu0 0
        %1141 = vmatprep.subr.bf16.mxu0 0
        %1142 = vmatpush1.bf16.msra.mxu0 0
        %1143 = vmatprep.subr.bf16.mxu0 0
        %1144 = vmatpush1.bf16.msra.mxu0 0
        %1145 = vmatprep.subr.bf16.mxu0 0
        %1146 = vmatpush1.bf16.msra.mxu0 0
        %1147 = vmatprep.subr.bf16.mxu0 0
        %1148 = vmatpush1.bf16.msra.mxu0 0
        %1149 = vmatprep.subr.bf16.mxu0 0
        %1150 = vmatpush1.bf16.msra.mxu0 0
        %1151 = vmatprep.subr.bf16.mxu0 0
        %1152 = vmatpush1.bf16.msra.mxu0 0
        %1153 = vmatprep.subr.bf16.mxu0 0
        %1154 = vmatpush1.bf16.msra.mxu0 0
        %1155 = vmatprep.subr.bf16.mxu0 0
        %1156 = vmatpush1.bf16.msra.mxu0 0
        %1157 = vmatprep.subr.bf16.mxu0 0
        %1158 = vmatpush1.bf16.msra.mxu0 0
        %1159 = vmatprep.subr.bf16.mxu0 0
        %1160 = vmatpush1.bf16.msra.mxu0 0
        %1161 = vmatprep.subr.bf16.mxu0 0
        %1162 = vmatpush1.bf16.msra.mxu0 0
        %1163 = vmatprep.mubr.bf16.mxu0 0
        %1164 = vmatmul.mubr.bf16.gmra.mrb[0].mxu0 %v741
        %v1165 = vpop.f32.mrb[0].mxu0
        %v1166 = vadd.f32 %v1117, %v1165
        %v1167 = vpop.f32.mrb[0].mxu0
        %v1168 = vpop.f32.mrb[0].mxu0
        %v1169 = vadd.f32 %v1117, %v1168
        %v1170 = vpop.f32.mrb[0].mxu0
        %1171 = vmatprep.mubr.bf16.mxu0 0
        %1172 = vmatmul.mubr.bf16.gmra.mrb[0].mxu0 %v744
        %v1173 = vpop.f32.mrb[0].mxu0
        %v1174 = vadd.f32 %v1117, %v1173
        %v1175 = vpop.f32.mrb[0].mxu0
        %v1176 = vpop.f32.mrb[0].mxu0
        %v1177 = vpop.f32.mrb[0].mxu0
        %1178 = vdwg.mxu0
        %s1179 = scalar_lea.vmem %s7, 16
        %v1180 = vld [vmem:[%s1179] sm:$0xf]
        %v1181 = vld [vmem:[%s1179 + $0x4] sm:$0xf]
        %v1182 = vld [vmem:[%s1179 + $0x8] sm:$0xf]
        %v1183 = vld [vmem:[%s1179 + $0xc] sm:$0xf]
        %s1184 = scalar_lea.vmem %s8, 1
        %v1185 = vld [vmem:[%s1184] sm:$0x1]
        %v1187 = vlaneseq
        %v1188 = vshrl.u32 %v1187, 7
        %v1189 = vsub.s32 0, %v1188
        %v1190 = vrot.slane %v1185, %v1189
        %v1196 = vunpack.c.l.b16 %v1180
        %v1197 = vunpack.c.l.b16 %v1181
        %v1198 = vunpack.c.l.b16 %v1182
        %v1199 = vunpack.c.l.b16 %v1183
        %v1200 = vpack.c.b16 %v1197, %v1196
        %v1201 = vpack.c.b16 %v1199, %v1198
        %1204 = vmatprep.subr.bf16.mxu0 0
        %1205 = vmatpush1.bf16.msra.mxu0 %v1200
        %1206 = vmatprep.subr.bf16.mxu0 0
        %1207 = vmatpush1.bf16.msra.mxu0 %v1201
        %1208 = vmatprep.subr.bf16.mxu0 0
        %1209 = vmatpush1.bf16.msra.mxu0 0
        %1210 = vmatprep.subr.bf16.mxu0 0
        %1211 = vmatpush1.bf16.msra.mxu0 0
        %1212 = vmatprep.subr.bf16.mxu0 0
        %1213 = vmatpush1.bf16.msra.mxu0 0
        %1214 = vmatprep.subr.bf16.mxu0 0
        %1215 = vmatpush1.bf16.msra.mxu0 0
        %1216 = vmatprep.subr.bf16.mxu0 0
        %1217 = vmatpush1.bf16.msra.mxu0 0
        %1218 = vmatprep.subr.bf16.mxu0 0
        %1219 = vmatpush1.bf16.msra.mxu0 0
        %1220 = vmatprep.subr.bf16.mxu0 0
        %1221 = vmatpush1.bf16.msra.mxu0 0
        %1222 = vmatprep.subr.bf16.mxu0 0
        %1223 = vmatpush1.bf16.msra.mxu0 0
        %1224 = vmatprep.subr.bf16.mxu0 0
        %1225 = vmatpush1.bf16.msra.mxu0 0
        %1226 = vmatprep.subr.bf16.mxu0 0
        %1227 = vmatpush1.bf16.msra.mxu0 0
        %1228 = vmatprep.subr.bf16.mxu0 0
        %1229 = vmatpush1.bf16.msra.mxu0 0
        %1230 = vmatprep.subr.bf16.mxu0 0
        %1231 = vmatpush1.bf16.msra.mxu0 0
        %1232 = vmatprep.subr.bf16.mxu0 0
        %1233 = vmatpush1.bf16.msra.mxu0 0
        %1234 = vmatprep.subr.bf16.mxu0 0
        %1235 = vmatpush1.bf16.msra.mxu0 0
        %1236 = vmatprep.mubr.bf16.mxu0 0
        %1237 = vmatmul.mubr.bf16.gmra.mrb[0].mxu0 %v741
        %v1238 = vpop.f32.mrb[0].mxu0
        %v1239 = vadd.f32 %v1190, %v1238
        %v1240 = vpop.f32.mrb[0].mxu0
        %v1241 = vpop.f32.mrb[0].mxu0
        %v1242 = vadd.f32 %v1190, %v1241
        %v1243 = vpop.f32.mrb[0].mxu0
        %1244 = vmatprep.mubr.bf16.mxu0 0
        %1245 = vmatmul.mubr.bf16.gmra.mrb[0].mxu0 %v744
        %v1246 = vpop.f32.mrb[0].mxu0
        %v1247 = vadd.f32 %v1190, %v1246
        %v1248 = vpop.f32.mrb[0].mxu0
        %v1249 = vpop.f32.mrb[0].mxu0
        %v1250 = vpop.f32.mrb[0].mxu0
        %1251 = vdwg.mxu0
        %s1252 = scalar_lea.vmem %s9, 16
        %v1253 = vld [vmem:[%s1252] sm:$0xf]
        %v1254 = vld [vmem:[%s1252 + $0x4] sm:$0xf]
        %v1255 = vld [vmem:[%s1252 + $0x8] sm:$0xf]
        %v1256 = vld [vmem:[%s1252 + $0xc] sm:$0xf]
        %s1257 = scalar_lea.vmem %s10, 1
        %v1258 = vld [vmem:[%s1257] sm:$0x1]
        %v1260 = vlaneseq
        %v1261 = vshrl.u32 %v1260, 7
        %v1262 = vsub.s32 0, %v1261
        %v1263 = vrot.slane %v1258, %v1262
        %v1269 = vunpack.c.l.b16 %v1253
        %v1270 = vunpack.c.l.b16 %v1254
        %v1271 = vunpack.c.l.b16 %v1255
        %v1272 = vunpack.c.l.b16 %v1256
        %v1273 = vpack.c.b16 %v1270, %v1269
        %v1274 = vpack.c.b16 %v1272, %v1271
        %1277 = vmatprep.subr.bf16.mxu0 0
        %1278 = vmatpush1.bf16.msra.mxu0 %v1273
        %1279 = vmatprep.subr.bf16.mxu0 0
        %1280 = vmatpush1.bf16.msra.mxu0 %v1274
        %1281 = vmatprep.subr.bf16.mxu0 0
        %1282 = vmatpush1.bf16.msra.mxu0 0
        %1283 = vmatprep.subr.bf16.mxu0 0
        %1284 = vmatpush1.bf16.msra.mxu0 0
        %1285 = vmatprep.subr.bf16.mxu0 0
        %1286 = vmatpush1.bf16.msra.mxu0 0
        %1287 = vmatprep.subr.bf16.mxu0 0
        %1288 = vmatpush1.bf16.msra.mxu0 0
        %1289 = vmatprep.subr.bf16.mxu0 0
        %1290 = vmatpush1.bf16.msra.mxu0 0
        %1291 = vmatprep.subr.bf16.mxu0 0
        %1292 = vmatpush1.bf16.msra.mxu0 0
        %1293 = vmatprep.subr.bf16.mxu0 0
        %1294 = vmatpush1.bf16.msra.mxu0 0
        %1295 = vmatprep.subr.bf16.mxu0 0
        %1296 = vmatpush1.bf16.msra.mxu0 0
        %1297 = vmatprep.subr.bf16.mxu0 0
        %1298 = vmatpush1.bf16.msra.mxu0 0
        %1299 = vmatprep.subr.bf16.mxu0 0
        %1300 = vmatpush1.bf16.msra.mxu0 0
        %1301 = vmatprep.subr.bf16.mxu0 0
        %1302 = vmatpush1.bf16.msra.mxu0 0
        %1303 = vmatprep.subr.bf16.mxu0 0
        %1304 = vmatpush1.bf16.msra.mxu0 0
        %1305 = vmatprep.subr.bf16.mxu0 0
        %1306 = vmatpush1.bf16.msra.mxu0 0
        %1307 = vmatprep.subr.bf16.mxu0 0
        %1308 = vmatpush1.bf16.msra.mxu0 0
        %1309 = vmatprep.mubr.bf16.mxu0 0
        %1310 = vmatmul.mubr.bf16.gmra.mrb[0].mxu0 %v741
        %v1311 = vpop.f32.mrb[0].mxu0
        %v1312 = vadd.f32 %v1263, %v1311
        %v1313 = vpop.f32.mrb[0].mxu0
        %v1314 = vpop.f32.mrb[0].mxu0
        %v1315 = vadd.f32 %v1263, %v1314
        %v1316 = vpop.f32.mrb[0].mxu0
        %1317 = vmatprep.mubr.bf16.mxu0 0
        %1318 = vmatmul.mubr.bf16.gmra.mrb[0].mxu0 %v744
        %v1319 = vpop.f32.mrb[0].mxu0
        %v1320 = vadd.f32 %v1263, %v1319
        %v1321 = vpop.f32.mrb[0].mxu0
        %v1322 = vpop.f32.mrb[0].mxu0
        %v1323 = vpop.f32.mrb[0].mxu0
        %1324 = vdwg.mxu0
        %v1325 = vpack.c.bf16 %v1169, %v1166
        %v1326 = vpack.c.bf16 %v1174, %v1174
        %v1327 = vpack.c.bf16 %v1242, %v1239
        %v1328 = vpack.c.bf16 %v1247, %v1247
        %v1330 = vsel %vm940, %v1325, 0
        %v1333 = vsel %vm940, %v1326, 0
        %v1336 = vsel %vm940, %v1327, 0
        %v1339 = vsel %vm940, %v1328, 0
        %1341 = vmatprep.subr.bf16.mxu0 0
        %1342 = vmatpush1.bf16.xpose.msra.mxu0 %v1336
        %1343 = vmatprep.subr.bf16.mxu0 0
        %1344 = vmatpush1.bf16.xpose.msra.mxu0 %v1339
        %1345 = vmatprep.subr.bf16.mxu0 0
        %1346 = vmatpush1.bf16.xpose.msra.mxu0 0
        %1347 = vmatprep.subr.bf16.mxu0 0
        %1348 = vmatpush1.bf16.xpose.msra.mxu0 0
        %1349 = vmatprep.subr.bf16.mxu0 0
        %1350 = vmatpush1.bf16.xpose.msra.mxu0 0
        %1351 = vmatprep.subr.bf16.mxu0 0
        %1352 = vmatpush1.bf16.xpose.msra.mxu0 0
        %1353 = vmatprep.subr.bf16.mxu0 0
        %1354 = vmatpush1.bf16.xpose.msra.mxu0 0
        %1355 = vmatprep.subr.bf16.mxu0 0
        %1356 = vmatpush1.bf16.xpose.msra.mxu0 0
        %1357 = vmatprep.subr.bf16.mxu0 0
        %1358 = vmatpush1.bf16.xpose.msra.mxu0 0
        %1359 = vmatprep.subr.bf16.mxu0 0
        %1360 = vmatpush1.bf16.xpose.msra.mxu0 0
        %1361 = vmatprep.subr.bf16.mxu0 0
        %1362 = vmatpush1.bf16.xpose.msra.mxu0 0
        %1363 = vmatprep.subr.bf16.mxu0 0
        %1364 = vmatpush1.bf16.xpose.msra.mxu0 0
        %1365 = vmatprep.subr.bf16.mxu0 0
        %1366 = vmatpush1.bf16.xpose.msra.mxu0 0
        %1367 = vmatprep.subr.bf16.mxu0 0
        %1368 = vmatpush1.bf16.xpose.msra.mxu0 0
        %1369 = vmatprep.subr.bf16.mxu0 0
        %1370 = vmatpush1.bf16.xpose.msra.mxu0 0
        %1371 = vmatprep.subr.bf16.mxu0 0
        %1372 = vmatpush1.bf16.xpose.msra.mxu0 0
        %1373 = vmatprep.mubr.bf16.mxu0 0
        %1374 = vmatmul.mubr.bf16.gmra.mrb[0].mxu0 %v1330
        %v1375 = vpop.f32.mrb[0].mxu0
        %v1376 = vadd.f32 0.0, %v1375
        %v1377 = vpop.f32.mrb[0].mxu0
        %v1378 = vpop.f32.mrb[0].mxu0
        %v1379 = vadd.f32 0.0, %v1378
        %v1380 = vpop.f32.mrb[0].mxu0
        %1381 = vmatprep.mubr.bf16.mxu0 0
        %1382 = vmatmul.mubr.bf16.gmra.mrb[0].mxu0 %v1333
        %v1383 = vpop.f32.mrb[0].mxu0
        %v1384 = vadd.f32 0.0, %v1383
        %v1385 = vpop.f32.mrb[0].mxu0
        %v1386 = vpop.f32.mrb[0].mxu0
        %v1387 = vpop.f32.mrb[0].mxu0
        %1388 = vdwg.mxu0
        %v1389 = vmul.f32 %v1376, 0.35355338
        %v1390 = vmul.f32 %v1379, 0.35355338
        %v1391 = vmul.f32 %v1384, 0.35355338
        %v1392 = vsel %vm1004, %v1389, -inf
        %1393 = vmax.xlane.f32.xlu0 %v1392
        %v1394 = vpop.xlane.xlu0 %1393
        %v1395 = vsel %vm1004, %v1390, -inf
        %1396 = vmax.xlane.f32.xlu0 %v1395
        %v1397 = vpop.xlane.xlu0 %1396
        %v1398 = vsel %vm1011, %v1391, -inf
        %1399 = vmax.xlane.f32.xlu0 %v1398
        %v1400 = vpop.xlane.xlu0 %1399
        %v1401 = vsub.f32 %v1389, %v1394
        %v1402 = vsub.f32 %v1390, %v1397
        %v1403 = vsub.f32 %v1391, %v1400
        %v1404 = vmul.f32 %v1401, 1.442695
        %v1405 = vpow.pop %v1404
        %v1406 = vmul.f32 %v1402, 1.442695
        %v1407 = vpow.pop %v1406
        %v1408 = vmul.f32 %v1403, 1.442695
        %v1409 = vpow.pop %v1408
        %v1410 = vsel %vm1004, %v1405, 0.0
        %1411 = vadd.xlane.f32.xlu0 %v1410
        %v1412 = vpop.xlane.xlu0 %1411
        %v1413 = vsel %vm1004, %v1407, 0.0
        %1414 = vadd.xlane.f32.xlu0 %v1413
        %v1415 = vpop.xlane.xlu0 %1414
        %v1416 = vsel %vm1011, %v1409, 0.0
        %1417 = vadd.xlane.f32.xlu0 %v1416
        %v1418 = vpop.xlane.xlu0 %1417
        %v1419 = vrcp.pop %v1412
        %v1420 = vmul.f32 %v1405, %v1419
        %v1421 = vrcp.pop %v1415
        %v1422 = vmul.f32 %v1407, %v1421
        %v1423 = vrcp.pop %v1418
        %v1424 = vmul.f32 %v1409, %v1423
        %v1425 = vpack.c.bf16 %v1422, %v1420
        %v1426 = vpack.c.bf16 %v1424, %v1424
        %v1427 = vpack.c.bf16 %v1315, %v1312
        %v1428 = vpack.c.bf16 %v1320, %v1320
        %v1430 = vsel %vm1004, %v1425, 0
        %v1433 = vsel %vm1004, %v1426, 0
        %v1436 = vand.u32 %v1428, %v1051
        %1438 = vmatprep.subr.bf16.mxu0 0
        %1439 = vmatpush1.bf16.msra.mxu0 %v1427
        %1440 = vmatprep.subr.bf16.mxu0 0
        %1441 = vmatpush1.bf16.msra.mxu0 %v1436
        %1442 = vmatprep.subr.bf16.mxu0 0
        %1443 = vmatpush1.bf16.msra.mxu0 0
        %1444 = vmatprep.subr.bf16.mxu0 0
        %1445 = vmatpush1.bf16.msra.mxu0 0
        %1446 = vmatprep.subr.bf16.mxu0 0
        %1447 = vmatpush1.bf16.msra.mxu0 0
        %1448 = vmatprep.subr.bf16.mxu0 0
        %1449 = vmatpush1.bf16.msra.mxu0 0
        %1450 = vmatprep.subr.bf16.mxu0 0
        %1451 = vmatpush1.bf16.msra.mxu0 0
        %1452 = vmatprep.subr.bf16.mxu0 0
        %1453 = vmatpush1.bf16.msra.mxu0 0
        %1454 = vmatprep.subr.bf16.mxu0 0
        %1455 = vmatpush1.bf16.msra.mxu0 0
        %1456 = vmatprep.subr.bf16.mxu0 0
        %1457 = vmatpush1.bf16.msra.mxu0 0
        %1458 = vmatprep.subr.bf16.mxu0 0
        %1459 = vmatpush1.bf16.msra.mxu0 0
        %1460 = vmatprep.subr.bf16.mxu0 0
        %1461 = vmatpush1.bf16.msra.mxu0 0
        %1462 = vmatprep.subr.bf16.mxu0 0
        %1463 = vmatpush1.bf16.msra.mxu0 0
        %1464 = vmatprep.subr.bf16.mxu0 0
        %1465 = vmatpush1.bf16.msra.mxu0 0
        %1466 = vmatprep.subr.bf16.mxu0 0
        %1467 = vmatpush1.bf16.msra.mxu0 0
        %1468 = vmatprep.subr.bf16.mxu0 0
        %1469 = vmatpush1.bf16.msra.mxu0 0
        %1470 = vmatprep.mubr.bf16.mxu0 0
        %1471 = vmatmul.mubr.bf16.gmra.mrb[0].mxu0 %v1430
        %v1472 = vpop.f32.mrb[0].mxu0
        %v1473 = vadd.f32 0.0, %v1472
        %v1474 = vpop.f32.mrb[0].mxu0
        %v1475 = vpop.f32.mrb[0].mxu0
        %v1476 = vadd.f32 0.0, %v1475
        %v1477 = vpop.f32.mrb[0].mxu0
        %1478 = vmatprep.mubr.bf16.mxu0 0
        %1479 = vmatmul.mubr.bf16.gmra.mrb[0].mxu0 %v1433
        %v1480 = vpop.f32.mrb[0].mxu0
        %v1481 = vadd.f32 0.0, %v1480
        %v1482 = vpop.f32.mrb[0].mxu0
        %v1483 = vpop.f32.mrb[0].mxu0
        %v1484 = vpop.f32.mrb[0].mxu0
        %1485 = vdwg.mxu0
        %s1486 = scalar_lea.vmem %s11, 4
        %v1487 = vld [vmem:[%s1486] sm:$0xf]
        %v1488 = vpack.c.bf16 %v1476, %v1473
        %v1489 = vpack.c.bf16 %v1481, %v1481
        %v1491 = vsel %vm940, %v1488, 0
        %v1494 = vsel %vm940, %v1489, 0
        %vm1496 = vcmask 1043456
        %v1498 = vsel %vm1496, %v1487, 0
        %1500 = vmatprep.subr.bf16.mxu0 0
        %1501 = vmatpush1.bf16.msra.mxu0 %v1498
        %1502 = vmatprep.subr.bf16.mxu0 0
        %1503 = vmatpush1.bf16.msra.mxu0 0
        %1504 = vmatprep.subr.bf16.mxu0 0
        %1505 = vmatpush1.bf16.msra.mxu0 0
        %1506 = vmatprep.subr.bf16.mxu0 0
        %1507 = vmatpush1.bf16.msra.mxu0 0
        %1508 = vmatprep.subr.bf16.mxu0 0
        %1509 = vmatpush1.bf16.msra.mxu0 0
        %1510 = vmatprep.subr.bf16.mxu0 0
        %1511 = vmatpush1.bf16.msra.mxu0 0
        %1512 = vmatprep.subr.bf16.mxu0 0
        %1513 = vmatpush1.bf16.msra.mxu0 0
        %1514 = vmatprep.subr.bf16.mxu0 0
        %1515 = vmatpush1.bf16.msra.mxu0 0
        %1516 = vmatprep.subr.bf16.mxu0 0
        %1517 = vmatpush1.bf16.msra.mxu0 0
        %1518 = vmatprep.subr.bf16.mxu0 0
        %1519 = vmatpush1.bf16.msra.mxu0 0
        %1520 = vmatprep.subr.bf16.mxu0 0
        %1521 = vmatpush1.bf16.msra.mxu0 0
        %1522 = vmatprep.subr.bf16.mxu0 0
        %1523 = vmatpush1.bf16.msra.mxu0 0
        %1524 = vmatprep.subr.bf16.mxu0 0
        %1525 = vmatpush1.bf16.msra.mxu0 0
        %1526 = vmatprep.subr.bf16.mxu0 0
        %1527 = vmatpush1.bf16.msra.mxu0 0
        %1528 = vmatprep.subr.bf16.mxu0 0
        %1529 = vmatpush1.bf16.msra.mxu0 0
        %1530 = vmatprep.subr.bf16.mxu0 0
        %1531 = vmatpush1.bf16.msra.mxu0 0
        %1532 = vmatprep.mubr.bf16.mxu0 0
        %1533 = vmatmul.mubr.bf16.gmra.mrb[0].mxu0 %v1491
        %v1534 = vpop.f32.mrb[0].mxu0
        %v1535 = vadd.f32 0.0, %v1534
        %v1536 = vpop.f32.mrb[0].mxu0
        %v1537 = vpop.f32.mrb[0].mxu0
        %v1538 = vadd.f32 0.0, %v1537
        %v1539 = vpop.f32.mrb[0].mxu0
        %1540 = vmatprep.mubr.bf16.mxu0 0
        %1541 = vmatmul.mubr.bf16.gmra.mrb[0].mxu0 %v1494
        %v1542 = vpop.f32.mrb[0].mxu0
        %v1543 = vadd.f32 0.0, %v1542
        %v1544 = vpop.f32.mrb[0].mxu0
        %v1545 = vpop.f32.mrb[0].mxu0
        %v1546 = vpop.f32.mrb[0].mxu0
        %1547 = vdwg.mxu0
        %v1549 = vsel %vm940, %v1104, 0
        %v1552 = vsel %vm940, %v1105, 0
        %v1555 = vsel %vm1496, %v1103, 0
        %1557 = vmatprep.subr.bf16.mxu0 0
        %1558 = vmatpush1.bf16.msra.mxu0 %v1555
        %1559 = vmatprep.subr.bf16.mxu0 0
        %1560 = vmatpush1.bf16.msra.mxu0 0
        %1561 = vmatprep.subr.bf16.mxu0 0
        %1562 = vmatpush1.bf16.msra.mxu0 0
        %1563 = vmatprep.subr.bf16.mxu0 0
        %1564 = vmatpush1.bf16.msra.mxu0 0
        %1565 = vmatprep.subr.bf16.mxu0 0
        %1566 = vmatpush1.bf16.msra.mxu0 0
        %1567 = vmatprep.subr.bf16.mxu0 0
        %1568 = vmatpush1.bf16.msra.mxu0 0
        %1569 = vmatprep.subr.bf16.mxu0 0
        %1570 = vmatpush1.bf16.msra.mxu0 0
        %1571 = vmatprep.subr.bf16.mxu0 0
        %1572 = vmatpush1.bf16.msra.mxu0 0
        %1573 = vmatprep.subr.bf16.mxu0 0
        %1574 = vmatpush1.bf16.msra.mxu0 0
        %1575 = vmatprep.subr.bf16.mxu0 0
        %1576 = vmatpush1.bf16.msra.mxu0 0
        %1577 = vmatprep.subr.bf16.mxu0 0
        %1578 = vmatpush1.bf16.msra.mxu0 0
        %1579 = vmatprep.subr.bf16.mxu0 0
        %1580 = vmatpush1.bf16.msra.mxu0 0
        %1581 = vmatprep.subr.bf16.mxu0 0
        %1582 = vmatpush1.bf16.msra.mxu0 0
        %1583 = vmatprep.subr.bf16.mxu0 0
        %1584 = vmatpush1.bf16.msra.mxu0 0
        %1585 = vmatprep.subr.bf16.mxu0 0
        %1586 = vmatpush1.bf16.msra.mxu0 0
        %1587 = vmatprep.subr.bf16.mxu0 0
        %1588 = vmatpush1.bf16.msra.mxu0 0
        %1589 = vmatprep.mubr.bf16.mxu0 0
        %1590 = vmatmul.mubr.bf16.gmra.mrb[0].mxu0 %v1549
        %v1591 = vpop.f32.mrb[0].mxu0
        %v1592 = vadd.f32 %v1535, %v1591
        %v1593 = vpop.f32.mrb[0].mxu0
        %v1594 = vpop.f32.mrb[0].mxu0
        %v1595 = vadd.f32 %v1538, %v1594
        %v1596 = vpop.f32.mrb[0].mxu0
        %1597 = vmatprep.mubr.bf16.mxu0 0
        %1598 = vmatmul.mubr.bf16.gmra.mrb[0].mxu0 %v1552
        %v1599 = vpop.f32.mrb[0].mxu0
        %v1600 = vadd.f32 %v1543, %v1599
        %v1601 = vpop.f32.mrb[0].mxu0
        %v1602 = vpop.f32.mrb[0].mxu0
        %v1603 = vpop.f32.mrb[0].mxu0
        %1604 = vdwg.mxu0
        %s1605 = scalar_lea.vmem %s5, 32
        %v1606 = vld [vmem:[%s1605] sm:$0xf]
        %v1607 = vld [vmem:[%s1605 + $0x4] sm:$0xf]
        %v1608 = vld [vmem:[%s1605 + $0x8] sm:$0xf]
        %v1609 = vld [vmem:[%s1605 + $0xc] sm:$0xf]
        %s1610 = scalar_lea.vmem %s6, 2
        %v1611 = vld [vmem:[%s1610] sm:$0x1]
        %v1613 = vlaneseq
        %v1614 = vshrl.u32 %v1613, 7
        %v1615 = vsub.s32 0, %v1614
        %v1616 = vrot.slane %v1611, %v1615
        %v1622 = vunpack.c.l.b16 %v1606
        %v1623 = vunpack.c.l.b16 %v1607
        %v1624 = vunpack.c.l.b16 %v1608
        %v1625 = vunpack.c.l.b16 %v1609
        %v1626 = vpack.c.b16 %v1623, %v1622
        %v1627 = vpack.c.b16 %v1625, %v1624
        %1630 = vmatprep.subr.bf16.mxu0 0
        %1631 = vmatpush1.bf16.msra.mxu0 %v1626
        %1632 = vmatprep.subr.bf16.mxu0 0
        %1633 = vmatpush1.bf16.msra.mxu0 %v1627
        %1634 = vmatprep.subr.bf16.mxu0 0
        %1635 = vmatpush1.bf16.msra.mxu0 0
        %1636 = vmatprep.subr.bf16.mxu0 0
        %1637 = vmatpush1.bf16.msra.mxu0 0
        %1638 = vmatprep.subr.bf16.mxu0 0
        %1639 = vmatpush1.bf16.msra.mxu0 0
        %1640 = vmatprep.subr.bf16.mxu0 0
        %1641 = vmatpush1.bf16.msra.mxu0 0
        %1642 = vmatprep.subr.bf16.mxu0 0
        %1643 = vmatpush1.bf16.msra.mxu0 0
        %1644 = vmatprep.subr.bf16.mxu0 0
        %1645 = vmatpush1.bf16.msra.mxu0 0
        %1646 = vmatprep.subr.bf16.mxu0 0
        %1647 = vmatpush1.bf16.msra.mxu0 0
        %1648 = vmatprep.subr.bf16.mxu0 0
        %1649 = vmatpush1.bf16.msra.mxu0 0
        %1650 = vmatprep.subr.bf16.mxu0 0
        %1651 = vmatpush1.bf16.msra.mxu0 0
        %1652 = vmatprep.subr.bf16.mxu0 0
        %1653 = vmatpush1.bf16.msra.mxu0 0
        %1654 = vmatprep.subr.bf16.mxu0 0
        %1655 = vmatpush1.bf16.msra.mxu0 0
        %1656 = vmatprep.subr.bf16.mxu0 0
        %1657 = vmatpush1.bf16.msra.mxu0 0
        %1658 = vmatprep.subr.bf16.mxu0 0
        %1659 = vmatpush1.bf16.msra.mxu0 0
        %1660 = vmatprep.subr.bf16.mxu0 0
        %1661 = vmatpush1.bf16.msra.mxu0 0
        %1662 = vmatprep.mubr.bf16.mxu0 0
        %1663 = vmatmul.mubr.bf16.gmra.mrb[0].mxu0 %v741
        %v1664 = vpop.f32.mrb[0].mxu0
        %v1665 = vadd.f32 %v1616, %v1664
        %v1666 = vpop.f32.mrb[0].mxu0
        %v1667 = vpop.f32.mrb[0].mxu0
        %v1668 = vadd.f32 %v1616, %v1667
        %v1669 = vpop.f32.mrb[0].mxu0
        %1670 = vmatprep.mubr.bf16.mxu0 0
        %1671 = vmatmul.mubr.bf16.gmra.mrb[0].mxu0 %v744
        %v1672 = vpop.f32.mrb[0].mxu0
        %v1673 = vadd.f32 %v1616, %v1672
        %v1674 = vpop.f32.mrb[0].mxu0
        %v1675 = vpop.f32.mrb[0].mxu0
        %v1676 = vpop.f32.mrb[0].mxu0
        %1677 = vdwg.mxu0
        %s1678 = scalar_lea.vmem %s7, 32
        %v1679 = vld [vmem:[%s1678] sm:$0xf]
        %v1680 = vld [vmem:[%s1678 + $0x4] sm:$0xf]
        %v1681 = vld [vmem:[%s1678 + $0x8] sm:$0xf]
        %v1682 = vld [vmem:[%s1678 + $0xc] sm:$0xf]
        %s1683 = scalar_lea.vmem %s8, 2
        %v1684 = vld [vmem:[%s1683] sm:$0x1]
        %v1686 = vlaneseq
        %v1687 = vshrl.u32 %v1686, 7
        %v1688 = vsub.s32 0, %v1687
        %v1689 = vrot.slane %v1684, %v1688
        %v1695 = vunpack.c.l.b16 %v1679
        %v1696 = vunpack.c.l.b16 %v1680
        %v1697 = vunpack.c.l.b16 %v1681
        %v1698 = vunpack.c.l.b16 %v1682
        %v1699 = vpack.c.b16 %v1696, %v1695
        %v1700 = vpack.c.b16 %v1698, %v1697
        %1703 = vmatprep.subr.bf16.mxu0 0
        %1704 = vmatpush1.bf16.msra.mxu0 %v1699
        %1705 = vmatprep.subr.bf16.mxu0 0
        %1706 = vmatpush1.bf16.msra.mxu0 %v1700
        %1707 = vmatprep.subr.bf16.mxu0 0
        %1708 = vmatpush1.bf16.msra.mxu0 0
        %1709 = vmatprep.subr.bf16.mxu0 0
        %1710 = vmatpush1.bf16.msra.mxu0 0
        %1711 = vmatprep.subr.bf16.mxu0 0
        %1712 = vmatpush1.bf16.msra.mxu0 0
        %1713 = vmatprep.subr.bf16.mxu0 0
        %1714 = vmatpush1.bf16.msra.mxu0 0
        %1715 = vmatprep.subr.bf16.mxu0 0
        %1716 = vmatpush1.bf16.msra.mxu0 0
        %1717 = vmatprep.subr.bf16.mxu0 0
        %1718 = vmatpush1.bf16.msra.mxu0 0
        %1719 = vmatprep.subr.bf16.mxu0 0
        %1720 = vmatpush1.bf16.msra.mxu0 0
        %1721 = vmatprep.subr.bf16.mxu0 0
        %1722 = vmatpush1.bf16.msra.mxu0 0
        %1723 = vmatprep.subr.bf16.mxu0 0
        %1724 = vmatpush1.bf16.msra.mxu0 0
        %1725 = vmatprep.subr.bf16.mxu0 0
        %1726 = vmatpush1.bf16.msra.mxu0 0
        %1727 = vmatprep.subr.bf16.mxu0 0
        %1728 = vmatpush1.bf16.msra.mxu0 0
        %1729 = vmatprep.subr.bf16.mxu0 0
        %1730 = vmatpush1.bf16.msra.mxu0 0
        %1731 = vmatprep.subr.bf16.mxu0 0
        %1732 = vmatpush1.bf16.msra.mxu0 0
        %1733 = vmatprep.subr.bf16.mxu0 0
        %1734 = vmatpush1.bf16.msra.mxu0 0
        %1735 = vmatprep.mubr.bf16.mxu0 0
        %1736 = vmatmul.mubr.bf16.gmra.mrb[0].mxu0 %v741
        %v1737 = vpop.f32.mrb[0].mxu0
        %v1738 = vadd.f32 %v1689, %v1737
        %v1739 = vpop.f32.mrb[0].mxu0
        %v1740 = vpop.f32.mrb[0].mxu0
        %v1741 = vadd.f32 %v1689, %v1740
        %v1742 = vpop.f32.mrb[0].mxu0
        %1743 = vmatprep.mubr.bf16.mxu0 0
        %1744 = vmatmul.mubr.bf16.gmra.mrb[0].mxu0 %v744
        %v1745 = vpop.f32.mrb[0].mxu0
        %v1746 = vadd.f32 %v1689, %v1745
        %v1747 = vpop.f32.mrb[0].mxu0
        %v1748 = vpop.f32.mrb[0].mxu0
        %v1749 = vpop.f32.mrb[0].mxu0
        %1750 = vdwg.mxu0
        %s1751 = scalar_lea.vmem %s9, 32
        %v1752 = vld [vmem:[%s1751] sm:$0xf]
        %v1753 = vld [vmem:[%s1751 + $0x4] sm:$0xf]
        %v1754 = vld [vmem:[%s1751 + $0x8] sm:$0xf]
        %v1755 = vld [vmem:[%s1751 + $0xc] sm:$0xf]
        %s1756 = scalar_lea.vmem %s10, 2
        %v1757 = vld [vmem:[%s1756] sm:$0x1]
        %v1759 = vlaneseq
        %v1760 = vshrl.u32 %v1759, 7
        %v1761 = vsub.s32 0, %v1760
        %v1762 = vrot.slane %v1757, %v1761
        %v1768 = vunpack.c.l.b16 %v1752
        %v1769 = vunpack.c.l.b16 %v1753
        %v1770 = vunpack.c.l.b16 %v1754
        %v1771 = vunpack.c.l.b16 %v1755
        %v1772 = vpack.c.b16 %v1769, %v1768
        %v1773 = vpack.c.b16 %v1771, %v1770
        %1776 = vmatprep.subr.bf16.mxu0 0
        %1777 = vmatpush1.bf16.msra.mxu0 %v1772
        %1778 = vmatprep.subr.bf16.mxu0 0
        %1779 = vmatpush1.bf16.msra.mxu0 %v1773
        %1780 = vmatprep.subr.bf16.mxu0 0
        %1781 = vmatpush1.bf16.msra.mxu0 0
        %1782 = vmatprep.subr.bf16.mxu0 0
        %1783 = vmatpush1.bf16.msra.mxu0 0
        %1784 = vmatprep.subr.bf16.mxu0 0
        %1785 = vmatpush1.bf16.msra.mxu0 0
        %1786 = vmatprep.subr.bf16.mxu0 0
        %1787 = vmatpush1.bf16.msra.mxu0 0
        %1788 = vmatprep.subr.bf16.mxu0 0
        %1789 = vmatpush1.bf16.msra.mxu0 0
        %1790 = vmatprep.subr.bf16.mxu0 0
        %1791 = vmatpush1.bf16.msra.mxu0 0
        %1792 = vmatprep.subr.bf16.mxu0 0
        %1793 = vmatpush1.bf16.msra.mxu0 0
        %1794 = vmatprep.subr.bf16.mxu0 0
        %1795 = vmatpush1.bf16.msra.mxu0 0
        %1796 = vmatprep.subr.bf16.mxu0 0
        %1797 = vmatpush1.bf16.msra.mxu0 0
        %1798 = vmatprep.subr.bf16.mxu0 0
        %1799 = vmatpush1.bf16.msra.mxu0 0
        %1800 = vmatprep.subr.bf16.mxu0 0
        %1801 = vmatpush1.bf16.msra.mxu0 0
        %1802 = vmatprep.subr.bf16.mxu0 0
        %1803 = vmatpush1.bf16.msra.mxu0 0
        %1804 = vmatprep.subr.bf16.mxu0 0
        %1805 = vmatpush1.bf16.msra.mxu0 0
        %1806 = vmatprep.subr.bf16.mxu0 0
        %1807 = vmatpush1.bf16.msra.mxu0 0
        %1808 = vmatprep.mubr.bf16.mxu0 0
        %1809 = vmatmul.mubr.bf16.gmra.mrb[0].mxu0 %v741
        %v1810 = vpop.f32.mrb[0].mxu0
        %v1811 = vadd.f32 %v1762, %v1810
        %v1812 = vpop.f32.mrb[0].mxu0
        %v1813 = vpop.f32.mrb[0].mxu0
        %v1814 = vadd.f32 %v1762, %v1813
        %v1815 = vpop.f32.mrb[0].mxu0
        %1816 = vmatprep.mubr.bf16.mxu0 0
        %1817 = vmatmul.mubr.bf16.gmra.mrb[0].mxu0 %v744
        %v1818 = vpop.f32.mrb[0].mxu0
        %v1819 = vadd.f32 %v1762, %v1818
        %v1820 = vpop.f32.mrb[0].mxu0
        %v1821 = vpop.f32.mrb[0].mxu0
        %v1822 = vpop.f32.mrb[0].mxu0
        %1823 = vdwg.mxu0
        %v1824 = vpack.c.bf16 %v1668, %v1665
        %v1825 = vpack.c.bf16 %v1673, %v1673
        %v1826 = vpack.c.bf16 %v1741, %v1738
        %v1827 = vpack.c.bf16 %v1746, %v1746
        %v1829 = vsel %vm940, %v1824, 0
        %v1832 = vsel %vm940, %v1825, 0
        %v1835 = vsel %vm940, %v1826, 0
        %v1838 = vsel %vm940, %v1827, 0
        %1840 = vmatprep.subr.bf16.mxu0 0
        %1841 = vmatpush1.bf16.xpose.msra.mxu0 %v1835
        %1842 = vmatprep.subr.bf16.mxu0 0
        %1843 = vmatpush1.bf16.xpose.msra.mxu0 %v1838
        %1844 = vmatprep.subr.bf16.mxu0 0
        %1845 = vmatpush1.bf16.xpose.msra.mxu0 0
        %1846 = vmatprep.subr.bf16.mxu0 0
        %1847 = vmatpush1.bf16.xpose.msra.mxu0 0
        %1848 = vmatprep.subr.bf16.mxu0 0
        %1849 = vmatpush1.bf16.xpose.msra.mxu0 0
        %1850 = vmatprep.subr.bf16.mxu0 0
        %1851 = vmatpush1.bf16.xpose.msra.mxu0 0
        %1852 = vmatprep.subr.bf16.mxu0 0
        %1853 = vmatpush1.bf16.xpose.msra.mxu0 0
        %1854 = vmatprep.subr.bf16.mxu0 0
        %1855 = vmatpush1.bf16.xpose.msra.mxu0 0
        %1856 = vmatprep.subr.bf16.mxu0 0
        %1857 = vmatpush1.bf16.xpose.msra.mxu0 0
        %1858 = vmatprep.subr.bf16.mxu0 0
        %1859 = vmatpush1.bf16.xpose.msra.mxu0 0
        %1860 = vmatprep.subr.bf16.mxu0 0
        %1861 = vmatpush1.bf16.xpose.msra.mxu0 0
        %1862 = vmatprep.subr.bf16.mxu0 0
        %1863 = vmatpush1.bf16.xpose.msra.mxu0 0
        %1864 = vmatprep.subr.bf16.mxu0 0
        %1865 = vmatpush1.bf16.xpose.msra.mxu0 0
        %1866 = vmatprep.subr.bf16.mxu0 0
        %1867 = vmatpush1.bf16.xpose.msra.mxu0 0
        %1868 = vmatprep.subr.bf16.mxu0 0
        %1869 = vmatpush1.bf16.xpose.msra.mxu0 0
        %1870 = vmatprep.subr.bf16.mxu0 0
        %1871 = vmatpush1.bf16.xpose.msra.mxu0 0
        %1872 = vmatprep.mubr.bf16.mxu0 0
        %1873 = vmatmul.mubr.bf16.gmra.mrb[0].mxu0 %v1829
        %v1874 = vpop.f32.mrb[0].mxu0
        %v1875 = vadd.f32 0.0, %v1874
        %v1876 = vpop.f32.mrb[0].mxu0
        %v1877 = vpop.f32.mrb[0].mxu0
        %v1878 = vadd.f32 0.0, %v1877
        %v1879 = vpop.f32.mrb[0].mxu0
        %1880 = vmatprep.mubr.bf16.mxu0 0
        %1881 = vmatmul.mubr.bf16.gmra.mrb[0].mxu0 %v1832
        %v1882 = vpop.f32.mrb[0].mxu0
        %v1883 = vadd.f32 0.0, %v1882
        %v1884 = vpop.f32.mrb[0].mxu0
        %v1885 = vpop.f32.mrb[0].mxu0
        %v1886 = vpop.f32.mrb[0].mxu0
        %1887 = vdwg.mxu0
        %v1888 = vmul.f32 %v1875, 0.35355338
        %v1889 = vmul.f32 %v1878, 0.35355338
        %v1890 = vmul.f32 %v1883, 0.35355338
        %v1891 = vsel %vm1004, %v1888, -inf
        %1892 = vmax.xlane.f32.xlu0 %v1891
        %v1893 = vpop.xlane.xlu0 %1892
        %v1894 = vsel %vm1004, %v1889, -inf
        %1895 = vmax.xlane.f32.xlu0 %v1894
        %v1896 = vpop.xlane.xlu0 %1895
        %v1897 = vsel %vm1011, %v1890, -inf
        %1898 = vmax.xlane.f32.xlu0 %v1897
        %v1899 = vpop.xlane.xlu0 %1898
        %v1900 = vsub.f32 %v1888, %v1893
        %v1901 = vsub.f32 %v1889, %v1896
        %v1902 = vsub.f32 %v1890, %v1899
        %v1903 = vmul.f32 %v1900, 1.442695
        %v1904 = vpow.pop %v1903
        %v1905 = vmul.f32 %v1901, 1.442695
        %v1906 = vpow.pop %v1905
        %v1907 = vmul.f32 %v1902, 1.442695
        %v1908 = vpow.pop %v1907
        %v1909 = vsel %vm1004, %v1904, 0.0
        %1910 = vadd.xlane.f32.xlu0 %v1909
        %v1911 = vpop.xlane.xlu0 %1910
        %v1912 = vsel %vm1004, %v1906, 0.0
        %1913 = vadd.xlane.f32.xlu0 %v1912
        %v1914 = vpop.xlane.xlu0 %1913
        %v1915 = vsel %vm1011, %v1908, 0.0
        %1916 = vadd.xlane.f32.xlu0 %v1915
        %v1917 = vpop.xlane.xlu0 %1916
        %v1918 = vrcp.pop %v1911
        %v1919 = vmul.f32 %v1904, %v1918
        %v1920 = vrcp.pop %v1914
        %v1921 = vmul.f32 %v1906, %v1920
        %v1922 = vrcp.pop %v1917
        %v1923 = vmul.f32 %v1908, %v1922
        %v1924 = vpack.c.bf16 %v1921, %v1919
        %v1925 = vpack.c.bf16 %v1923, %v1923
        %v1926 = vpack.c.bf16 %v1814, %v1811
        %v1927 = vpack.c.bf16 %v1819, %v1819
        %v1929 = vsel %vm1004, %v1924, 0
        %v1932 = vsel %vm1004, %v1925, 0
        %v1935 = vand.u32 %v1927, %v1051
        %1937 = vmatprep.subr.bf16.mxu0 0
        %1938 = vmatpush1.bf16.msra.mxu0 %v1926
        %1939 = vmatprep.subr.bf16.mxu0 0
        %1940 = vmatpush1.bf16.msra.mxu0 %v1935
        %1941 = vmatprep.subr.bf16.mxu0 0
        %1942 = vmatpush1.bf16.msra.mxu0 0
        %1943 = vmatprep.subr.bf16.mxu0 0
        %1944 = vmatpush1.bf16.msra.mxu0 0
        %1945 = vmatprep.subr.bf16.mxu0 0
        %1946 = vmatpush1.bf16.msra.mxu0 0
        %1947 = vmatprep.subr.bf16.mxu0 0
        %1948 = vmatpush1.bf16.msra.mxu0 0
        %1949 = vmatprep.subr.bf16.mxu0 0
        %1950 = vmatpush1.bf16.msra.mxu0 0
        %1951 = vmatprep.subr.bf16.mxu0 0
        %1952 = vmatpush1.bf16.msra.mxu0 0
        %1953 = vmatprep.subr.bf16.mxu0 0
        %1954 = vmatpush1.bf16.msra.mxu0 0
        %1955 = vmatprep.subr.bf16.mxu0 0
        %1956 = vmatpush1.bf16.msra.mxu0 0
        %1957 = vmatprep.subr.bf16.mxu0 0
        %1958 = vmatpush1.bf16.msra.mxu0 0
        %1959 = vmatprep.subr.bf16.mxu0 0
        %1960 = vmatpush1.bf16.msra.mxu0 0
        %1961 = vmatprep.subr.bf16.mxu0 0
        %1962 = vmatpush1.bf16.msra.mxu0 0
        %1963 = vmatprep.subr.bf16.mxu0 0
        %1964 = vmatpush1.bf16.msra.mxu0 0
        %1965 = vmatprep.subr.bf16.mxu0 0
        %1966 = vmatpush1.bf16.msra.mxu0 0
        %1967 = vmatprep.subr.bf16.mxu0 0
        %1968 = vmatpush1.bf16.msra.mxu0 0
        %1969 = vmatprep.mubr.bf16.mxu0 0
        %1970 = vmatmul.mubr.bf16.gmra.mrb[0].mxu0 %v1929
        %v1971 = vpop.f32.mrb[0].mxu0
        %v1972 = vadd.f32 0.0, %v1971
        %v1973 = vpop.f32.mrb[0].mxu0
        %v1974 = vpop.f32.mrb[0].mxu0
        %v1975 = vadd.f32 0.0, %v1974
        %v1976 = vpop.f32.mrb[0].mxu0
        %1977 = vmatprep.mubr.bf16.mxu0 0
        %1978 = vmatmul.mubr.bf16.gmra.mrb[0].mxu0 %v1932
        %v1979 = vpop.f32.mrb[0].mxu0
        %v1980 = vadd.f32 0.0, %v1979
        %v1981 = vpop.f32.mrb[0].mxu0
        %v1982 = vpop.f32.mrb[0].mxu0
        %v1983 = vpop.f32.mrb[0].mxu0
        %1984 = vdwg.mxu0
        %s1985 = scalar_lea.vmem %s11, 8
        %v1986 = vld [vmem:[%s1985] sm:$0xf]
        %v1987 = vpack.c.bf16 %v1975, %v1972
        %v1988 = vpack.c.bf16 %v1980, %v1980
        %v1990 = vsel %vm940, %v1987, 0
        %v1993 = vsel %vm940, %v1988, 0
        %v1996 = vsel %vm1496, %v1986, 0
        %1998 = vmatprep.subr.bf16.mxu0 0
        %1999 = vmatpush1.bf16.msra.mxu0 %v1996
        %2000 = vmatprep.subr.bf16.mxu0 0
        %2001 = vmatpush1.bf16.msra.mxu0 0
        %2002 = vmatprep.subr.bf16.mxu0 0
        %2003 = vmatpush1.bf16.msra.mxu0 0
        %2004 = vmatprep.subr.bf16.mxu0 0
        %2005 = vmatpush1.bf16.msra.mxu0 0
        %2006 = vmatprep.subr.bf16.mxu0 0
        %2007 = vmatpush1.bf16.msra.mxu0 0
        %2008 = vmatprep.subr.bf16.mxu0 0
        %2009 = vmatpush1.bf16.msra.mxu0 0
        %2010 = vmatprep.subr.bf16.mxu0 0
        %2011 = vmatpush1.bf16.msra.mxu0 0
        %2012 = vmatprep.subr.bf16.mxu0 0
        %2013 = vmatpush1.bf16.msra.mxu0 0
        %2014 = vmatprep.subr.bf16.mxu0 0
        %2015 = vmatpush1.bf16.msra.mxu0 0
        %2016 = vmatprep.subr.bf16.mxu0 0
        %2017 = vmatpush1.bf16.msra.mxu0 0
        %2018 = vmatprep.subr.bf16.mxu0 0
        %2019 = vmatpush1.bf16.msra.mxu0 0
        %2020 = vmatprep.subr.bf16.mxu0 0
        %2021 = vmatpush1.bf16.msra.mxu0 0
        %2022 = vmatprep.subr.bf16.mxu0 0
        %2023 = vmatpush1.bf16.msra.mxu0 0
        %2024 = vmatprep.subr.bf16.mxu0 0
        %2025 = vmatpush1.bf16.msra.mxu0 0
        %2026 = vmatprep.subr.bf16.mxu0 0
        %2027 = vmatpush1.bf16.msra.mxu0 0
        %2028 = vmatprep.subr.bf16.mxu0 0
        %2029 = vmatpush1.bf16.msra.mxu0 0
        %2030 = vmatprep.mubr.bf16.mxu0 0
        %2031 = vmatmul.mubr.bf16.gmra.mrb[0].mxu0 %v1990
        %v2032 = vpop.f32.mrb[0].mxu0
        %v2033 = vadd.f32 0.0, %v2032
        %v2034 = vpop.f32.mrb[0].mxu0
        %v2035 = vpop.f32.mrb[0].mxu0
        %v2036 = vadd.f32 0.0, %v2035
        %v2037 = vpop.f32.mrb[0].mxu0
        %2038 = vmatprep.mubr.bf16.mxu0 0
        %2039 = vmatmul.mubr.bf16.gmra.mrb[0].mxu0 %v1993
        %v2040 = vpop.f32.mrb[0].mxu0
        %v2041 = vadd.f32 0.0, %v2040
        %v2042 = vpop.f32.mrb[0].mxu0
        %v2043 = vpop.f32.mrb[0].mxu0
        %v2044 = vpop.f32.mrb[0].mxu0
        %2045 = vdwg.mxu0
        %v2046 = vadd.f32 %v1592, %v2033
        %v2047 = vadd.f32 %v1595, %v2036
        %v2048 = vadd.f32 %v1600, %v2041
        %s2049 = scalar_lea.vmem %s5, 48
        %v2050 = vld [vmem:[%s2049] sm:$0xf]
        %v2051 = vld [vmem:[%s2049 + $0x4] sm:$0xf]
        %v2052 = vld [vmem:[%s2049 + $0x8] sm:$0xf]
        %v2053 = vld [vmem:[%s2049 + $0xc] sm:$0xf]
        %s2054 = scalar_lea.vmem %s6, 3
        %v2055 = vld [vmem:[%s2054] sm:$0x1]
        %v2057 = vlaneseq
        %v2058 = vshrl.u32 %v2057, 7
        %v2059 = vsub.s32 0, %v2058
        %v2060 = vrot.slane %v2055, %v2059
        %v2066 = vunpack.c.l.b16 %v2050
        %v2067 = vunpack.c.l.b16 %v2051
        %v2068 = vunpack.c.l.b16 %v2052
        %v2069 = vunpack.c.l.b16 %v2053
        %v2070 = vpack.c.b16 %v2067, %v2066
        %v2071 = vpack.c.b16 %v2069, %v2068
        %2074 = vmatprep.subr.bf16.mxu0 0
        %2075 = vmatpush1.bf16.msra.mxu0 %v2070
        %2076 = vmatprep.subr.bf16.mxu0 0
        %2077 = vmatpush1.bf16.msra.mxu0 %v2071
        %2078 = vmatprep.subr.bf16.mxu0 0
        %2079 = vmatpush1.bf16.msra.mxu0 0
        %2080 = vmatprep.subr.bf16.mxu0 0
        %2081 = vmatpush1.bf16.msra.mxu0 0
        %2082 = vmatprep.subr.bf16.mxu0 0
        %2083 = vmatpush1.bf16.msra.mxu0 0
        %2084 = vmatprep.subr.bf16.mxu0 0
        %2085 = vmatpush1.bf16.msra.mxu0 0
        %2086 = vmatprep.subr.bf16.mxu0 0
        %2087 = vmatpush1.bf16.msra.mxu0 0
        %2088 = vmatprep.subr.bf16.mxu0 0
        %2089 = vmatpush1.bf16.msra.mxu0 0
        %2090 = vmatprep.subr.bf16.mxu0 0
        %2091 = vmatpush1.bf16.msra.mxu0 0
        %2092 = vmatprep.subr.bf16.mxu0 0
        %2093 = vmatpush1.bf16.msra.mxu0 0
        %2094 = vmatprep.subr.bf16.mxu0 0
        %2095 = vmatpush1.bf16.msra.mxu0 0
        %2096 = vmatprep.subr.bf16.mxu0 0
        %2097 = vmatpush1.bf16.msra.mxu0 0
        %2098 = vmatprep.subr.bf16.mxu0 0
        %2099 = vmatpush1.bf16.msra.mxu0 0
        %2100 = vmatprep.subr.bf16.mxu0 0
        %2101 = vmatpush1.bf16.msra.mxu0 0
        %2102 = vmatprep.subr.bf16.mxu0 0
        %2103 = vmatpush1.bf16.msra.mxu0 0
        %2104 = vmatprep.subr.bf16.mxu0 0
        %2105 = vmatpush1.bf16.msra.mxu0 0
        %2106 = vmatprep.mubr.bf16.mxu0 0
        %2107 = vmatmul.mubr.bf16.gmra.mrb[0].mxu0 %v741
        %v2108 = vpop.f32.mrb[0].mxu0
        %v2109 = vadd.f32 %v2060, %v2108
        %v2110 = vpop.f32.mrb[0].mxu0
        %v2111 = vpop.f32.mrb[0].mxu0
        %v2112 = vadd.f32 %v2060, %v2111
        %v2113 = vpop.f32.mrb[0].mxu0
        %2114 = vmatprep.mubr.bf16.mxu0 0
        %2115 = vmatmul.mubr.bf16.gmra.mrb[0].mxu0 %v744
        %v2116 = vpop.f32.mrb[0].mxu0
        %v2117 = vadd.f32 %v2060, %v2116
        %v2118 = vpop.f32.mrb[0].mxu0
        %v2119 = vpop.f32.mrb[0].mxu0
        %v2120 = vpop.f32.mrb[0].mxu0
        %2121 = vdwg.mxu0
        %s2122 = scalar_lea.vmem %s7, 48
        %v2123 = vld [vmem:[%s2122] sm:$0xf]
        %v2124 = vld [vmem:[%s2122 + $0x4] sm:$0xf]
        %v2125 = vld [vmem:[%s2122 + $0x8] sm:$0xf]
        %v2126 = vld [vmem:[%s2122 + $0xc] sm:$0xf]
        %s2127 = scalar_lea.vmem %s8, 3
        %v2128 = vld [vmem:[%s2127] sm:$0x1]
        %v2130 = vlaneseq
        %v2131 = vshrl.u32 %v2130, 7
        %v2132 = vsub.s32 0, %v2131
        %v2133 = vrot.slane %v2128, %v2132
        %v2139 = vunpack.c.l.b16 %v2123
        %v2140 = vunpack.c.l.b16 %v2124
        %v2141 = vunpack.c.l.b16 %v2125
        %v2142 = vunpack.c.l.b16 %v2126
        %v2143 = vpack.c.b16 %v2140, %v2139
        %v2144 = vpack.c.b16 %v2142, %v2141
        %2147 = vmatprep.subr.bf16.mxu0 0
        %2148 = vmatpush1.bf16.msra.mxu0 %v2143
        %2149 = vmatprep.subr.bf16.mxu0 0
        %2150 = vmatpush1.bf16.msra.mxu0 %v2144
        %2151 = vmatprep.subr.bf16.mxu0 0
        %2152 = vmatpush1.bf16.msra.mxu0 0
        %2153 = vmatprep.subr.bf16.mxu0 0
        %2154 = vmatpush1.bf16.msra.mxu0 0
        %2155 = vmatprep.subr.bf16.mxu0 0
        %2156 = vmatpush1.bf16.msra.mxu0 0
        %2157 = vmatprep.subr.bf16.mxu0 0
        %2158 = vmatpush1.bf16.msra.mxu0 0
        %2159 = vmatprep.subr.bf16.mxu0 0
        %2160 = vmatpush1.bf16.msra.mxu0 0
        %2161 = vmatprep.subr.bf16.mxu0 0
        %2162 = vmatpush1.bf16.msra.mxu0 0
        %2163 = vmatprep.subr.bf16.mxu0 0
        %2164 = vmatpush1.bf16.msra.mxu0 0
        %2165 = vmatprep.subr.bf16.mxu0 0
        %2166 = vmatpush1.bf16.msra.mxu0 0
        %2167 = vmatprep.subr.bf16.mxu0 0
        %2168 = vmatpush1.bf16.msra.mxu0 0
        %2169 = vmatprep.subr.bf16.mxu0 0
        %2170 = vmatpush1.bf16.msra.mxu0 0
        %2171 = vmatprep.subr.bf16.mxu0 0
        %2172 = vmatpush1.bf16.msra.mxu0 0
        %2173 = vmatprep.subr.bf16.mxu0 0
        %2174 = vmatpush1.bf16.msra.mxu0 0
        %2175 = vmatprep.subr.bf16.mxu0 0
        %2176 = vmatpush1.bf16.msra.mxu0 0
        %2177 = vmatprep.subr.bf16.mxu0 0
        %2178 = vmatpush1.bf16.msra.mxu0 0
        %2179 = vmatprep.mubr.bf16.mxu0 0
        %2180 = vmatmul.mubr.bf16.gmra.mrb[0].mxu0 %v741
        %v2181 = vpop.f32.mrb[0].mxu0
        %v2182 = vadd.f32 %v2133, %v2181
        %v2183 = vpop.f32.mrb[0].mxu0
        %v2184 = vpop.f32.mrb[0].mxu0
        %v2185 = vadd.f32 %v2133, %v2184
        %v2186 = vpop.f32.mrb[0].mxu0
        %2187 = vmatprep.mubr.bf16.mxu0 0
        %2188 = vmatmul.mubr.bf16.gmra.mrb[0].mxu0 %v744
        %v2189 = vpop.f32.mrb[0].mxu0
        %v2190 = vadd.f32 %v2133, %v2189
        %v2191 = vpop.f32.mrb[0].mxu0
        %v2192 = vpop.f32.mrb[0].mxu0
        %v2193 = vpop.f32.mrb[0].mxu0
        %2194 = vdwg.mxu0
        %s2195 = scalar_lea.vmem %s9, 48
        %v2196 = vld [vmem:[%s2195] sm:$0xf]
        %v2197 = vld [vmem:[%s2195 + $0x4] sm:$0xf]
        %v2198 = vld [vmem:[%s2195 + $0x8] sm:$0xf]
        %v2199 = vld [vmem:[%s2195 + $0xc] sm:$0xf]
        %s2200 = scalar_lea.vmem %s10, 3
        %v2201 = vld [vmem:[%s2200] sm:$0x1]
        %v2203 = vlaneseq
        %v2204 = vshrl.u32 %v2203, 7
        %v2205 = vsub.s32 0, %v2204
        %v2206 = vrot.slane %v2201, %v2205
        %v2212 = vunpack.c.l.b16 %v2196
        %v2213 = vunpack.c.l.b16 %v2197
        %v2214 = vunpack.c.l.b16 %v2198
        %v2215 = vunpack.c.l.b16 %v2199
        %v2216 = vpack.c.b16 %v2213, %v2212
        %v2217 = vpack.c.b16 %v2215, %v2214
        %2220 = vmatprep.subr.bf16.mxu0 0
        %2221 = vmatpush1.bf16.msra.mxu0 %v2216
        %2222 = vmatprep.subr.bf16.mxu0 0
        %2223 = vmatpush1.bf16.msra.mxu0 %v2217
        %2224 = vmatprep.subr.bf16.mxu0 0
        %2225 = vmatpush1.bf16.msra.mxu0 0
        %2226 = vmatprep.subr.bf16.mxu0 0
        %2227 = vmatpush1.bf16.msra.mxu0 0
        %2228 = vmatprep.subr.bf16.mxu0 0
        %2229 = vmatpush1.bf16.msra.mxu0 0
        %2230 = vmatprep.subr.bf16.mxu0 0
        %2231 = vmatpush1.bf16.msra.mxu0 0
        %2232 = vmatprep.subr.bf16.mxu0 0
        %2233 = vmatpush1.bf16.msra.mxu0 0
        %2234 = vmatprep.subr.bf16.mxu0 0
        %2235 = vmatpush1.bf16.msra.mxu0 0
        %2236 = vmatprep.subr.bf16.mxu0 0
        %2237 = vmatpush1.bf16.msra.mxu0 0
        %2238 = vmatprep.subr.bf16.mxu0 0
        %2239 = vmatpush1.bf16.msra.mxu0 0
        %2240 = vmatprep.subr.bf16.mxu0 0
        %2241 = vmatpush1.bf16.msra.mxu0 0
        %2242 = vmatprep.subr.bf16.mxu0 0
        %2243 = vmatpush1.bf16.msra.mxu0 0
        %2244 = vmatprep.subr.bf16.mxu0 0
        %2245 = vmatpush1.bf16.msra.mxu0 0
        %2246 = vmatprep.subr.bf16.mxu0 0
        %2247 = vmatpush1.bf16.msra.mxu0 0
        %2248 = vmatprep.subr.bf16.mxu0 0
        %2249 = vmatpush1.bf16.msra.mxu0 0
        %2250 = vmatprep.subr.bf16.mxu0 0
        %2251 = vmatpush1.bf16.msra.mxu0 0
        %2252 = vmatprep.mubr.bf16.mxu0 0
        %2253 = vmatmul.mubr.bf16.gmra.mrb[0].mxu0 %v741
        %v2254 = vpop.f32.mrb[0].mxu0
        %v2255 = vadd.f32 %v2206, %v2254
        %v2256 = vpop.f32.mrb[0].mxu0
        %v2257 = vpop.f32.mrb[0].mxu0
        %v2258 = vadd.f32 %v2206, %v2257
        %v2259 = vpop.f32.mrb[0].mxu0
        %2260 = vmatprep.mubr.bf16.mxu0 0
        %2261 = vmatmul.mubr.bf16.gmra.mrb[0].mxu0 %v744
        %v2262 = vpop.f32.mrb[0].mxu0
        %v2263 = vadd.f32 %v2206, %v2262
        %v2264 = vpop.f32.mrb[0].mxu0
        %v2265 = vpop.f32.mrb[0].mxu0
        %v2266 = vpop.f32.mrb[0].mxu0
        %2267 = vdwg.mxu0
        %v2268 = vpack.c.bf16 %v2112, %v2109
        %v2269 = vpack.c.bf16 %v2117, %v2117
        %v2270 = vpack.c.bf16 %v2185, %v2182
        %v2271 = vpack.c.bf16 %v2190, %v2190
        %v2273 = vsel %vm940, %v2268, 0
        %v2276 = vsel %vm940, %v2269, 0
        %v2279 = vsel %vm940, %v2270, 0
        %v2282 = vsel %vm940, %v2271, 0
        %2284 = vmatprep.subr.bf16.mxu0 0
        %2285 = vmatpush1.bf16.xpose.msra.mxu0 %v2279
        %2286 = vmatprep.subr.bf16.mxu0 0
        %2287 = vmatpush1.bf16.xpose.msra.mxu0 %v2282
        %2288 = vmatprep.subr.bf16.mxu0 0
        %2289 = vmatpush1.bf16.xpose.msra.mxu0 0
        %2290 = vmatprep.subr.bf16.mxu0 0
        %2291 = vmatpush1.bf16.xpose.msra.mxu0 0
        %2292 = vmatprep.subr.bf16.mxu0 0
        %2293 = vmatpush1.bf16.xpose.msra.mxu0 0
        %2294 = vmatprep.subr.bf16.mxu0 0
        %2295 = vmatpush1.bf16.xpose.msra.mxu0 0
        %2296 = vmatprep.subr.bf16.mxu0 0
        %2297 = vmatpush1.bf16.xpose.msra.mxu0 0
        %2298 = vmatprep.subr.bf16.mxu0 0
        %2299 = vmatpush1.bf16.xpose.msra.mxu0 0
        %2300 = vmatprep.subr.bf16.mxu0 0
        %2301 = vmatpush1.bf16.xpose.msra.mxu0 0
        %2302 = vmatprep.subr.bf16.mxu0 0
        %2303 = vmatpush1.bf16.xpose.msra.mxu0 0
        %2304 = vmatprep.subr.bf16.mxu0 0
        %2305 = vmatpush1.bf16.xpose.msra.mxu0 0
        %2306 = vmatprep.subr.bf16.mxu0 0
        %2307 = vmatpush1.bf16.xpose.msra.mxu0 0
        %2308 = vmatprep.subr.bf16.mxu0 0
        %2309 = vmatpush1.bf16.xpose.msra.mxu0 0
        %2310 = vmatprep.subr.bf16.mxu0 0
        %2311 = vmatpush1.bf16.xpose.msra.mxu0 0
        %2312 = vmatprep.subr.bf16.mxu0 0
        %2313 = vmatpush1.bf16.xpose.msra.mxu0 0
        %2314 = vmatprep.subr.bf16.mxu0 0
        %2315 = vmatpush1.bf16.xpose.msra.mxu0 0
        %2316 = vmatprep.mubr.bf16.mxu0 0
        %2317 = vmatmul.mubr.bf16.gmra.mrb[0].mxu0 %v2273
        %v2318 = vpop.f32.mrb[0].mxu0
        %v2319 = vadd.f32 0.0, %v2318
        %v2320 = vpop.f32.mrb[0].mxu0
        %v2321 = vpop.f32.mrb[0].mxu0
        %v2322 = vadd.f32 0.0, %v2321
        %v2323 = vpop.f32.mrb[0].mxu0
        %2324 = vmatprep.mubr.bf16.mxu0 0
        %2325 = vmatmul.mubr.bf16.gmra.mrb[0].mxu0 %v2276
        %v2326 = vpop.f32.mrb[0].mxu0
        %v2327 = vadd.f32 0.0, %v2326
        %v2328 = vpop.f32.mrb[0].mxu0
        %v2329 = vpop.f32.mrb[0].mxu0
        %v2330 = vpop.f32.mrb[0].mxu0
        %2331 = vdwg.mxu0
        %v2332 = vmul.f32 %v2319, 0.35355338
        %v2333 = vmul.f32 %v2322, 0.35355338
        %v2334 = vmul.f32 %v2327, 0.35355338
        %v2335 = vsel %vm1004, %v2332, -inf
        %2336 = vmax.xlane.f32.xlu0 %v2335
        %v2337 = vpop.xlane.xlu0 %2336
        %v2338 = vsel %vm1004, %v2333, -inf
        %2339 = vmax.xlane.f32.xlu0 %v2338
        %v2340 = vpop.xlane.xlu0 %2339
        %v2341 = vsel %vm1011, %v2334, -inf
        %2342 = vmax.xlane.f32.xlu0 %v2341
        %v2343 = vpop.xlane.xlu0 %2342
        %v2344 = vsub.f32 %v2332, %v2337
        %v2345 = vsub.f32 %v2333, %v2340
        %v2346 = vsub.f32 %v2334, %v2343
        %v2347 = vmul.f32 %v2344, 1.442695
        %v2348 = vpow.pop %v2347
        %v2349 = vmul.f32 %v2345, 1.442695
        %v2350 = vpow.pop %v2349
        %v2351 = vmul.f32 %v2346, 1.442695
        %v2352 = vpow.pop %v2351
        %v2353 = vsel %vm1004, %v2348, 0.0
        %2354 = vadd.xlane.f32.xlu0 %v2353
        %v2355 = vpop.xlane.xlu0 %2354
        %v2356 = vsel %vm1004, %v2350, 0.0
        %2357 = vadd.xlane.f32.xlu0 %v2356
        %v2358 = vpop.xlane.xlu0 %2357
        %v2359 = vsel %vm1011, %v2352, 0.0
        %2360 = vadd.xlane.f32.xlu0 %v2359
        %v2361 = vpop.xlane.xlu0 %2360
        %v2362 = vrcp.pop %v2355
        %v2363 = vmul.f32 %v2348, %v2362
        %v2364 = vrcp.pop %v2358
        %v2365 = vmul.f32 %v2350, %v2364
        %v2366 = vrcp.pop %v2361
        %v2367 = vmul.f32 %v2352, %v2366
        %v2368 = vpack.c.bf16 %v2365, %v2363
        %v2369 = vpack.c.bf16 %v2367, %v2367
        %v2370 = vpack.c.bf16 %v2258, %v2255
        %v2371 = vpack.c.bf16 %v2263, %v2263
        %v2373 = vsel %vm1004, %v2368, 0
        %v2376 = vsel %vm1004, %v2369, 0
        %v2379 = vand.u32 %v2371, %v1051
        %2381 = vmatprep.subr.bf16.mxu0 0
        %2382 = vmatpush1.bf16.msra.mxu0 %v2370
        %2383 = vmatprep.subr.bf16.mxu0 0
        %2384 = vmatpush1.bf16.msra.mxu0 %v2379
        %2385 = vmatprep.subr.bf16.mxu0 0
        %2386 = vmatpush1.bf16.msra.mxu0 0
        %2387 = vmatprep.subr.bf16.mxu0 0
        %2388 = vmatpush1.bf16.msra.mxu0 0
        %2389 = vmatprep.subr.bf16.mxu0 0
        %2390 = vmatpush1.bf16.msra.mxu0 0
        %2391 = vmatprep.subr.bf16.mxu0 0
        %2392 = vmatpush1.bf16.msra.mxu0 0
        %2393 = vmatprep.subr.bf16.mxu0 0
        %2394 = vmatpush1.bf16.msra.mxu0 0
        %2395 = vmatprep.subr.bf16.mxu0 0
        %2396 = vmatpush1.bf16.msra.mxu0 0
        %2397 = vmatprep.subr.bf16.mxu0 0
        %2398 = vmatpush1.bf16.msra.mxu0 0
        %2399 = vmatprep.subr.bf16.mxu0 0
        %2400 = vmatpush1.bf16.msra.mxu0 0
        %2401 = vmatprep.subr.bf16.mxu0 0
        %2402 = vmatpush1.bf16.msra.mxu0 0
        %2403 = vmatprep.subr.bf16.mxu0 0
        %2404 = vmatpush1.bf16.msra.mxu0 0
        %2405 = vmatprep.subr.bf16.mxu0 0
        %2406 = vmatpush1.bf16.msra.mxu0 0
        %2407 = vmatprep.subr.bf16.mxu0 0
        %2408 = vmatpush1.bf16.msra.mxu0 0
        %2409 = vmatprep.subr.bf16.mxu0 0
        %2410 = vmatpush1.bf16.msra.mxu0 0
        %2411 = vmatprep.subr.bf16.mxu0 0
        %2412 = vmatpush1.bf16.msra.mxu0 0
        %2413 = vmatprep.mubr.bf16.mxu0 0
        %2414 = vmatmul.mubr.bf16.gmra.mrb[0].mxu0 %v2373
        %v2415 = vpop.f32.mrb[0].mxu0
        %v2416 = vadd.f32 0.0, %v2415
        %v2417 = vpop.f32.mrb[0].mxu0
        %v2418 = vpop.f32.mrb[0].mxu0
        %v2419 = vadd.f32 0.0, %v2418
        %v2420 = vpop.f32.mrb[0].mxu0
        %2421 = vmatprep.mubr.bf16.mxu0 0
        %2422 = vmatmul.mubr.bf16.gmra.mrb[0].mxu0 %v2376
        %v2423 = vpop.f32.mrb[0].mxu0
        %v2424 = vadd.f32 0.0, %v2423
        %v2425 = vpop.f32.mrb[0].mxu0
        %v2426 = vpop.f32.mrb[0].mxu0
        %v2427 = vpop.f32.mrb[0].mxu0
        %2428 = vdwg.mxu0
        %s2429 = scalar_lea.vmem %s11, 12
        %v2430 = vld [vmem:[%s2429] sm:$0xf]
        %v2431 = vpack.c.bf16 %v2419, %v2416
        %v2432 = vpack.c.bf16 %v2424, %v2424
        %v2434 = vsel %vm940, %v2431, 0
        %v2437 = vsel %vm940, %v2432, 0
        %v2440 = vsel %vm1496, %v2430, 0
        %2442 = vmatprep.subr.bf16.mxu0 0
        %2443 = vmatpush1.bf16.msra.mxu0 %v2440
        %2444 = vmatprep.subr.bf16.mxu0 0
        %2445 = vmatpush1.bf16.msra.mxu0 0
        %2446 = vmatprep.subr.bf16.mxu0 0
        %2447 = vmatpush1.bf16.msra.mxu0 0
        %2448 = vmatprep.subr.bf16.mxu0 0
        %2449 = vmatpush1.bf16.msra.mxu0 0
        %2450 = vmatprep.subr.bf16.mxu0 0
        %2451 = vmatpush1.bf16.msra.mxu0 0
        %2452 = vmatprep.subr.bf16.mxu0 0
        %2453 = vmatpush1.bf16.msra.mxu0 0
        %2454 = vmatprep.subr.bf16.mxu0 0
        %2455 = vmatpush1.bf16.msra.mxu0 0
        %2456 = vmatprep.subr.bf16.mxu0 0
        %2457 = vmatpush1.bf16.msra.mxu0 0
        %2458 = vmatprep.subr.bf16.mxu0 0
        %2459 = vmatpush1.bf16.msra.mxu0 0
        %2460 = vmatprep.subr.bf16.mxu0 0
        %2461 = vmatpush1.bf16.msra.mxu0 0
        %2462 = vmatprep.subr.bf16.mxu0 0
        %2463 = vmatpush1.bf16.msra.mxu0 0
        %2464 = vmatprep.subr.bf16.mxu0 0
        %2465 = vmatpush1.bf16.msra.mxu0 0
        %2466 = vmatprep.subr.bf16.mxu0 0
        %2467 = vmatpush1.bf16.msra.mxu0 0
        %2468 = vmatprep.subr.bf16.mxu0 0
        %2469 = vmatpush1.bf16.msra.mxu0 0
        %2470 = vmatprep.subr.bf16.mxu0 0
        %2471 = vmatpush1.bf16.msra.mxu0 0
        %2472 = vmatprep.subr.bf16.mxu0 0
        %2473 = vmatpush1.bf16.msra.mxu0 0
        %2474 = vmatprep.mubr.bf16.mxu0 0
        %2475 = vmatmul.mubr.bf16.gmra.mrb[0].mxu0 %v2434
        %v2476 = vpop.f32.mrb[0].mxu0
        %v2477 = vadd.f32 0.0, %v2476
        %v2478 = vpop.f32.mrb[0].mxu0
        %v2479 = vpop.f32.mrb[0].mxu0
        %v2480 = vadd.f32 0.0, %v2479
        %v2481 = vpop.f32.mrb[0].mxu0
        %2482 = vmatprep.mubr.bf16.mxu0 0
        %2483 = vmatmul.mubr.bf16.gmra.mrb[0].mxu0 %v2437
        %v2484 = vpop.f32.mrb[0].mxu0
        %v2485 = vadd.f32 0.0, %v2484
        %v2486 = vpop.f32.mrb[0].mxu0
        %v2487 = vpop.f32.mrb[0].mxu0
        %v2488 = vpop.f32.mrb[0].mxu0
        %2489 = vdwg.mxu0
        %v2490 = vadd.f32 %v2046, %v2477
        %v2491 = vadd.f32 %v2047, %v2480
        %v2492 = vadd.f32 %v2048, %v2485
        %v2493 = vadd.f32 %v652, %v2490
        %v2494 = vadd.f32 %v653, %v2491
        %v2495 = vadd.f32 %v654, %v2492
        %v2496 = vld [vmem:[%s12] sm:$0x1]
        %v2498 = vlaneseq
        %v2499 = vshrl.u32 %v2498, 7
        %v2500 = vsub.s32 0, %v2499
        %v2501 = vrot.slane %v2496, %v2500
        %v2503 = vadd.f32 %v2493, %v2501
        %v2504 = vadd.f32 %v2494, %v2501
        %v2505 = vadd.f32 %v2495, %v2501
        %v2506 = vld [vmem:[%s13] sm:$0x1]
        %v2507 = vld [vmem:[%s14] sm:$0x1]
        %v2508 = vsel %vm649, %v2503, 0.0
        %2509 = vadd.xlane.f32.xlu0 %v2508
        %v2510 = vpop.xlane.xlu0 %2509
        %v2511 = vsel %vm649, %v2504, 0.0
        %2512 = vadd.xlane.f32.xlu0 %v2511
        %v2513 = vpop.xlane.xlu0 %2512
        %v2514 = vsel %vm641, %v2505, 0.0
        %2515 = vadd.xlane.f32.xlu0 %v2514
        %v2516 = vpop.xlane.xlu0 %2515
        %v2517 = vmul.f32 %v2510, %v666
        %v2518 = vmul.f32 %v2513, %v666
        %v2519 = vmul.f32 %v2516, %v666
        %v2520 = vsub.f32 %v2503, %v2517
        %v2521 = vsub.f32 %v2504, %v2518
        %v2522 = vsub.f32 %v2505, %v2519
        %v2523 = vmul.f32 %v2520, %v2520
        %v2524 = vmul.f32 %v2521, %v2521
        %v2525 = vmul.f32 %v2522, %v2522
        %v2526 = vsel %vm649, %v2523, 0.0
        %2527 = vadd.xlane.f32.xlu0 %v2526
        %v2528 = vpop.xlane.xlu0 %2527
        %v2529 = vsel %vm649, %v2524, 0.0
        %2530 = vadd.xlane.f32.xlu0 %v2529
        %v2531 = vpop.xlane.xlu0 %2530
        %v2532 = vsel %vm641, %v2525, 0.0
        %2533 = vadd.xlane.f32.xlu0 %v2532
        %v2534 = vpop.xlane.xlu0 %2533
        %v2535 = vmul.f32 %v2528, %v666
        %v2536 = vmul.f32 %v2531, %v666
        %v2537 = vmul.f32 %v2534, %v666
        %v2538 = vadd.f32 %v2535, 1e-05
        %v2539 = vadd.f32 %v2536, 1e-05
        %v2540 = vadd.f32 %v2537, 1e-05
        %v2541 = vrsqrt.pop %v2538
        %v2542 = vrsqrt.pop %v2539
        %v2543 = vrsqrt.pop %v2540
        %v2544 = vmul.f32 %v2520, %v2541
        %v2545 = vmul.f32 %v2521, %v2542
        %v2546 = vmul.f32 %v2522, %v2543
        %v2548 = vlaneseq
        %v2549 = vshrl.u32 %v2548, 7
        %v2550 = vsub.s32 0, %v2549
        %v2551 = vrot.slane %v2506, %v2550
        %v2553 = vmul.f32 %v2544, %v2551
        %v2554 = vmul.f32 %v2545, %v2551
        %v2555 = vmul.f32 %v2546, %v2551
        %v2557 = vlaneseq
        %v2558 = vshrl.u32 %v2557, 7
        %v2559 = vsub.s32 0, %v2558
        %v2560 = vrot.slane %v2507, %v2559
        %v2562 = vadd.f32 %v2553, %v2560
        %v2563 = vadd.f32 %v2554, %v2560
        %v2564 = vadd.f32 %v2555, %v2560
        %v2565 = vld [vmem:[%s15] sm:$0xf]
        %v2566 = vld [vmem:[%s15 + $0x4] sm:$0xf]
        %v2567 = vld [vmem:[%s15 + $0x8] sm:$0xf]
        %v2568 = vld [vmem:[%s15 + $0xc] sm:$0xf]
        %v2569 = vpack.c.bf16 %v2563, %v2562
        %v2570 = vpack.c.bf16 %v2564, %v2564
        %v2571 = vld [vmem:[%s16] sm:$0x1]
        %v2573 = vlaneseq
        %v2574 = vshrl.u32 %v2573, 7
        %v2575 = vsub.s32 0, %v2574
        %v2576 = vrot.slane %v2571, %v2575
        %v2582 = vunpack.c.l.b16 %v2565
        %v2583 = vunpack.c.l.b16 %v2566
        %v2584 = vunpack.c.l.b16 %v2567
        %v2585 = vunpack.c.l.b16 %v2568
        %v2586 = vpack.c.b16 %v2583, %v2582
        %v2587 = vpack.c.b16 %v2585, %v2584
        %v2591 = vsel %vm649, %v2569, 0
        %v2594 = vsel %vm649, %v2570, 0
        %2596 = vmatprep.subr.bf16.mxu0 0
        %2597 = vmatpush1.bf16.msra.mxu0 %v2586
        %2598 = vmatprep.subr.bf16.mxu0 0
        %2599 = vmatpush1.bf16.msra.mxu0 %v2587
        %2600 = vmatprep.subr.bf16.mxu0 0
        %2601 = vmatpush1.bf16.msra.mxu0 0
        %2602 = vmatprep.subr.bf16.mxu0 0
        %2603 = vmatpush1.bf16.msra.mxu0 0
        %2604 = vmatprep.subr.bf16.mxu0 0
        %2605 = vmatpush1.bf16.msra.mxu0 0
        %2606 = vmatprep.subr.bf16.mxu0 0
        %2607 = vmatpush1.bf16.msra.mxu0 0
        %2608 = vmatprep.subr.bf16.mxu0 0
        %2609 = vmatpush1.bf16.msra.mxu0 0
        %2610 = vmatprep.subr.bf16.mxu0 0
        %2611 = vmatpush1.bf16.msra.mxu0 0
        %2612 = vmatprep.subr.bf16.mxu0 0
        %2613 = vmatpush1.bf16.msra.mxu0 0
        %2614 = vmatprep.subr.bf16.mxu0 0
        %2615 = vmatpush1.bf16.msra.mxu0 0
        %2616 = vmatprep.subr.bf16.mxu0 0
        %2617 = vmatpush1.bf16.msra.mxu0 0
        %2618 = vmatprep.subr.bf16.mxu0 0
        %2619 = vmatpush1.bf16.msra.mxu0 0
        %2620 = vmatprep.subr.bf16.mxu0 0
        %2621 = vmatpush1.bf16.msra.mxu0 0
        %2622 = vmatprep.subr.bf16.mxu0 0
        %2623 = vmatpush1.bf16.msra.mxu0 0
        %2624 = vmatprep.subr.bf16.mxu0 0
        %2625 = vmatpush1.bf16.msra.mxu0 0
        %2626 = vmatprep.subr.bf16.mxu0 0
        %2627 = vmatpush1.bf16.msra.mxu0 0
        %2628 = vmatprep.mubr.bf16.mxu0 0
        %2629 = vmatmul.mubr.bf16.gmra.mrb[0].mxu0 %v2591
        %v2630 = vpop.f32.mrb[0].mxu0
        %v2631 = vadd.f32 %v2576, %v2630
        %v2632 = vpop.f32.mrb[0].mxu0
        %v2633 = vpop.f32.mrb[0].mxu0
        %v2634 = vadd.f32 %v2576, %v2633
        %v2635 = vpop.f32.mrb[0].mxu0
        %2636 = vmatprep.mubr.bf16.mxu0 0
        %2637 = vmatmul.mubr.bf16.gmra.mrb[0].mxu0 %v2594
        %v2638 = vpop.f32.mrb[0].mxu0
        %v2639 = vadd.f32 %v2576, %v2638
        %v2640 = vpop.f32.mrb[0].mxu0
        %v2641 = vpop.f32.mrb[0].mxu0
        %v2642 = vpop.f32.mrb[0].mxu0
        %2643 = vdwg.mxu0
        %v2644 = vmul.f32 %v2631, %v2631
        %v2645 = vmul.f32 %v2634, %v2634
        %v2646 = vmul.f32 %v2639, %v2639
        %v2647 = vmul.f32 %v2631, %v2644
        %v2648 = vmul.f32 %v2634, %v2645
        %v2649 = vmul.f32 %v2639, %v2646
        %v2650 = vmul.f32 %v2647, 0.044715
        %v2651 = vmul.f32 %v2648, 0.044715
        %v2652 = vmul.f32 %v2649, 0.044715
        %v2653 = vadd.f32 %v2631, %v2650
        %v2654 = vadd.f32 %v2634, %v2651
        %v2655 = vadd.f32 %v2639, %v2652
        %v2656 = vmul.f32 %v2653, 0.7978846
        %v2657 = vmul.f32 %v2654, 0.7978846
        %v2658 = vmul.f32 %v2655, 0.7978846
        %v2659 = vtanh.pop %v2656
        %v2660 = vtanh.pop %v2657
        %v2661 = vtanh.pop %v2658
        %v2662 = vadd.f32 %v2659, 1.0
        %v2663 = vadd.f32 %v2660, 1.0
        %v2664 = vadd.f32 %v2661, 1.0
        %v2665 = vmul.f32 %v2662, 0.5
        %v2666 = vmul.f32 %v2663, 0.5
        %v2667 = vmul.f32 %v2664, 0.5
        %v2668 = vmul.f32 %v2631, %v2665
        %v2669 = vmul.f32 %v2634, %v2666
        %v2670 = vmul.f32 %v2639, %v2667
        %v2671 = vld [vmem:[%s17] sm:$0xf]
        %v2672 = vld [vmem:[%s17 + $0x4] sm:$0xf]
        %v2673 = vld [vmem:[%s17 + $0x8] sm:$0xf]
        %v2674 = vld [vmem:[%s17 + $0xc] sm:$0xf]
        %v2675 = vld [vmem:[%s17 + $0x10] sm:$0xf]
        %v2676 = vld [vmem:[%s17 + $0x14] sm:$0xf]
        %v2677 = vld [vmem:[%s17 + $0x18] sm:$0xf]
        %v2678 = vld [vmem:[%s17 + $0x1c] sm:$0xf]
        %v2679 = vpack.c.bf16 %v2669, %v2668
        %v2680 = vpack.c.bf16 %v2670, %v2670
        %v2689 = vunpack.c.l.b16 %v2671
        %v2690 = vunpack.c.l.b16 %v2672
        %v2691 = vunpack.c.l.b16 %v2673
        %v2692 = vunpack.c.l.b16 %v2674
        %v2693 = vunpack.c.l.b16 %v2675
        %v2694 = vunpack.c.l.b16 %v2676
        %v2695 = vunpack.c.l.b16 %v2677
        %v2696 = vunpack.c.l.b16 %v2678
        %v2697 = vpack.c.b16 %v2690, %v2689
        %v2698 = vpack.c.b16 %v2692, %v2691
        %v2699 = vpack.c.b16 %v2694, %v2693
        %v2700 = vpack.c.b16 %v2696, %v2695
        %vm2705 = vcmask 523264
        %v2707 = vsel %vm2705, %v2679, 0
        %v2710 = vsel %vm2705, %v2680, 0
        %2712 = vmatprep.subr.bf16.mxu0 0
        %2713 = vmatpush1.bf16.msra.mxu0 %v2697
        %2714 = vmatprep.subr.bf16.mxu0 0
        %2715 = vmatpush1.bf16.msra.mxu0 %v2698
        %2716 = vmatprep.subr.bf16.mxu0 0
        %2717 = vmatpush1.bf16.msra.mxu0 %v2699
        %2718 = vmatprep.subr.bf16.mxu0 0
        %2719 = vmatpush1.bf16.msra.mxu0 %v2700
        %2720 = vmatprep.subr.bf16.mxu0 0
        %2721 = vmatpush1.bf16.msra.mxu0 0
        %2722 = vmatprep.subr.bf16.mxu0 0
        %2723 = vmatpush1.bf16.msra.mxu0 0
        %2724 = vmatprep.subr.bf16.mxu0 0
        %2725 = vmatpush1.bf16.msra.mxu0 0
        %2726 = vmatprep.subr.bf16.mxu0 0
        %2727 = vmatpush1.bf16.msra.mxu0 0
        %2728 = vmatprep.subr.bf16.mxu0 0
        %2729 = vmatpush1.bf16.msra.mxu0 0
        %2730 = vmatprep.subr.bf16.mxu0 0
        %2731 = vmatpush1.bf16.msra.mxu0 0
        %2732 = vmatprep.subr.bf16.mxu0 0
        %2733 = vmatpush1.bf16.msra.mxu0 0
        %2734 = vmatprep.subr.bf16.mxu0 0
        %2735 = vmatpush1.bf16.msra.mxu0 0
        %2736 = vmatprep.subr.bf16.mxu0 0
        %2737 = vmatpush1.bf16.msra.mxu0 0
        %2738 = vmatprep.subr.bf16.mxu0 0
        %2739 = vmatpush1.bf16.msra.mxu0 0
        %2740 = vmatprep.subr.bf16.mxu0 0
        %2741 = vmatpush1.bf16.msra.mxu0 0
        %2742 = vmatprep.subr.bf16.mxu0 0
        %2743 = vmatpush1.bf16.msra.mxu0 0
        %2744 = vmatprep.mubr.bf16.mxu0 0
        %2745 = vmatmul.mubr.bf16.gmra.mrb[0].mxu0 %v2707
        %v2746 = vpop.f32.mrb[0].mxu0
        %v2747 = vadd.f32 0.0, %v2746
        %v2748 = vpop.f32.mrb[0].mxu0
        %v2749 = vpop.f32.mrb[0].mxu0
        %v2750 = vadd.f32 0.0, %v2749
        %v2751 = vpop.f32.mrb[0].mxu0
        %2752 = vmatprep.mubr.bf16.mxu0 0
        %2753 = vmatmul.mubr.bf16.gmra.mrb[0].mxu0 %v2710
        %v2754 = vpop.f32.mrb[0].mxu0
        %v2755 = vadd.f32 0.0, %v2754
        %v2756 = vpop.f32.mrb[0].mxu0
        %v2757 = vpop.f32.mrb[0].mxu0
        %v2758 = vpop.f32.mrb[0].mxu0
        %2759 = vdwg.mxu0
        %v2760 = vadd.f32 %v2503, %v2747
        %v2761 = vadd.f32 %v2504, %v2750
        %v2762 = vadd.f32 %v2505, %v2755
        %v2763 = vld [vmem:[%s18] sm:$0x1]
        %v2765 = vlaneseq
        %v2766 = vshrl.u32 %v2765, 7
        %v2767 = vsub.s32 0, %v2766
        %v2768 = vrot.slane %v2763, %v2767
        %v2770 = vadd.f32 %v2760, %v2768
        %v2771 = vadd.f32 %v2761, %v2768
        %v2772 = vadd.f32 %v2762, %v2768
        %s2773 = scalar_lea.vmem %s3, 1
        %v2774 = vld [vmem:[%s2773] sm:$0x1]
        %s2775 = scalar_lea.vmem %s4, 1
        %v2776 = vld [vmem:[%s2775] sm:$0x1]
        %v2777 = vsel %vm649, %v2770, 0.0
        %2778 = vadd.xlane.f32.xlu0 %v2777
        %v2779 = vpop.xlane.xlu0 %2778
        %v2780 = vsel %vm649, %v2771, 0.0
        %2781 = vadd.xlane.f32.xlu0 %v2780
        %v2782 = vpop.xlane.xlu0 %2781
        %v2783 = vsel %vm641, %v2772, 0.0
        %2784 = vadd.xlane.f32.xlu0 %v2783
        %v2785 = vpop.xlane.xlu0 %2784
        %v2786 = vmul.f32 %v2779, %v666
        %v2787 = vmul.f32 %v2782, %v666
        %v2788 = vmul.f32 %v2785, %v666
        %v2789 = vsub.f32 %v2770, %v2786
        %v2790 = vsub.f32 %v2771, %v2787
        %v2791 = vsub.f32 %v2772, %v2788
        %v2792 = vmul.f32 %v2789, %v2789
        %v2793 = vmul.f32 %v2790, %v2790
        %v2794 = vmul.f32 %v2791, %v2791
        %v2795 = vsel %vm649, %v2792, 0.0
        %2796 = vadd.xlane.f32.xlu0 %v2795
        %v2797 = vpop.xlane.xlu0 %2796
        %v2798 = vsel %vm649, %v2793, 0.0
        %2799 = vadd.xlane.f32.xlu0 %v2798
        %v2800 = vpop.xlane.xlu0 %2799
        %v2801 = vsel %vm641, %v2794, 0.0
        %2802 = vadd.xlane.f32.xlu0 %v2801
        %v2803 = vpop.xlane.xlu0 %2802
        %v2804 = vmul.f32 %v2797, %v666
        %v2805 = vmul.f32 %v2800, %v666
        %v2806 = vmul.f32 %v2803, %v666
        %v2807 = vadd.f32 %v2804, 1e-05
        %v2808 = vadd.f32 %v2805, 1e-05
        %v2809 = vadd.f32 %v2806, 1e-05
        %v2810 = vrsqrt.pop %v2807
        %v2811 = vrsqrt.pop %v2808
        %v2812 = vrsqrt.pop %v2809
        %v2813 = vmul.f32 %v2789, %v2810
        %v2814 = vmul.f32 %v2790, %v2811
        %v2815 = vmul.f32 %v2791, %v2812
        %v2817 = vlaneseq
        %v2818 = vshrl.u32 %v2817, 7
        %v2819 = vsub.s32 0, %v2818
        %v2820 = vrot.slane %v2774, %v2819
        %v2822 = vmul.f32 %v2813, %v2820
        %v2823 = vmul.f32 %v2814, %v2820
        %v2824 = vmul.f32 %v2815, %v2820
        %v2826 = vlaneseq
        %v2827 = vshrl.u32 %v2826, 7
        %v2828 = vsub.s32 0, %v2827
        %v2829 = vrot.slane %v2776, %v2828
        %v2831 = vadd.f32 %v2822, %v2829
        %v2832 = vadd.f32 %v2823, %v2829
        %v2833 = vadd.f32 %v2824, %v2829
        %s2834 = scalar_lea.vmem %s5, 64
        %v2835 = vld [vmem:[%s2834] sm:$0xf]
        %v2836 = vld [vmem:[%s2834 + $0x4] sm:$0xf]
        %v2837 = vld [vmem:[%s2834 + $0x8] sm:$0xf]
        %v2838 = vld [vmem:[%s2834 + $0xc] sm:$0xf]
        %v2839 = vpack.c.bf16 %v2832, %v2831
        %v2840 = vpack.c.bf16 %v2833, %v2833
        %s2841 = scalar_lea.vmem %s6, 4
        %v2842 = vld [vmem:[%s2841] sm:$0x1]
        %v2844 = vlaneseq
        %v2845 = vshrl.u32 %v2844, 7
        %v2846 = vsub.s32 0, %v2845
        %v2847 = vrot.slane %v2842, %v2846
        %v2853 = vunpack.c.l.b16 %v2835
        %v2854 = vunpack.c.l.b16 %v2836
        %v2855 = vunpack.c.l.b16 %v2837
        %v2856 = vunpack.c.l.b16 %v2838
        %v2857 = vpack.c.b16 %v2854, %v2853
        %v2858 = vpack.c.b16 %v2856, %v2855
        %v2862 = vsel %vm649, %v2839, 0
        %v2865 = vsel %vm649, %v2840, 0
        %2867 = vmatprep.subr.bf16.mxu0 0
        %2868 = vmatpush1.bf16.msra.mxu0 %v2857
        %2869 = vmatprep.subr.bf16.mxu0 0
        %2870 = vmatpush1.bf16.msra.mxu0 %v2858
        %2871 = vmatprep.subr.bf16.mxu0 0
        %2872 = vmatpush1.bf16.msra.mxu0 0
        %2873 = vmatprep.subr.bf16.mxu0 0
        %2874 = vmatpush1.bf16.msra.mxu0 0
        %2875 = vmatprep.subr.bf16.mxu0 0
        %2876 = vmatpush1.bf16.msra.mxu0 0
        %2877 = vmatprep.subr.bf16.mxu0 0
        %2878 = vmatpush1.bf16.msra.mxu0 0
        %2879 = vmatprep.subr.bf16.mxu0 0
        %2880 = vmatpush1.bf16.msra.mxu0 0
        %2881 = vmatprep.subr.bf16.mxu0 0
        %2882 = vmatpush1.bf16.msra.mxu0 0
        %2883 = vmatprep.subr.bf16.mxu0 0
        %2884 = vmatpush1.bf16.msra.mxu0 0
        %2885 = vmatprep.subr.bf16.mxu0 0
        %2886 = vmatpush1.bf16.msra.mxu0 0
        %2887 = vmatprep.subr.bf16.mxu0 0
        %2888 = vmatpush1.bf16.msra.mxu0 0
        %2889 = vmatprep.subr.bf16.mxu0 0
        %2890 = vmatpush1.bf16.msra.mxu0 0
        %2891 = vmatprep.subr.bf16.mxu0 0
        %2892 = vmatpush1.bf16.msra.mxu0 0
        %2893 = vmatprep.subr.bf16.mxu0 0
        %2894 = vmatpush1.bf16.msra.mxu0 0
        %2895 = vmatprep.subr.bf16.mxu0 0
        %2896 = vmatpush1.bf16.msra.mxu0 0
        %2897 = vmatprep.subr.bf16.mxu0 0
        %2898 = vmatpush1.bf16.msra.mxu0 0
        %2899 = vmatprep.mubr.bf16.mxu0 0
        %2900 = vmatmul.mubr.bf16.gmra.mrb[0].mxu0 %v2862
        %v2901 = vpop.f32.mrb[0].mxu0
        %v2902 = vadd.f32 %v2847, %v2901
        %v2903 = vpop.f32.mrb[0].mxu0
        %v2904 = vpop.f32.mrb[0].mxu0
        %v2905 = vadd.f32 %v2847, %v2904
        %v2906 = vpop.f32.mrb[0].mxu0
        %2907 = vmatprep.mubr.bf16.mxu0 0
        %2908 = vmatmul.mubr.bf16.gmra.mrb[0].mxu0 %v2865
        %v2909 = vpop.f32.mrb[0].mxu0
        %v2910 = vadd.f32 %v2847, %v2909
        %v2911 = vpop.f32.mrb[0].mxu0
        %v2912 = vpop.f32.mrb[0].mxu0
        %v2913 = vpop.f32.mrb[0].mxu0
        %2914 = vdwg.mxu0
        %s2915 = scalar_lea.vmem %s7, 64
        %v2916 = vld [vmem:[%s2915] sm:$0xf]
        %v2917 = vld [vmem:[%s2915 + $0x4] sm:$0xf]
        %v2918 = vld [vmem:[%s2915 + $0x8] sm:$0xf]
        %v2919 = vld [vmem:[%s2915 + $0xc] sm:$0xf]
        %s2920 = scalar_lea.vmem %s8, 4
        %v2921 = vld [vmem:[%s2920] sm:$0x1]
        %v2923 = vlaneseq
        %v2924 = vshrl.u32 %v2923, 7
        %v2925 = vsub.s32 0, %v2924
        %v2926 = vrot.slane %v2921, %v2925
        %v2932 = vunpack.c.l.b16 %v2916
        %v2933 = vunpack.c.l.b16 %v2917
        %v2934 = vunpack.c.l.b16 %v2918
        %v2935 = vunpack.c.l.b16 %v2919
        %v2936 = vpack.c.b16 %v2933, %v2932
        %v2937 = vpack.c.b16 %v2935, %v2934
        %2940 = vmatprep.subr.bf16.mxu0 0
        %2941 = vmatpush1.bf16.msra.mxu0 %v2936
        %2942 = vmatprep.subr.bf16.mxu0 0
        %2943 = vmatpush1.bf16.msra.mxu0 %v2937
        %2944 = vmatprep.subr.bf16.mxu0 0
        %2945 = vmatpush1.bf16.msra.mxu0 0
        %2946 = vmatprep.subr.bf16.mxu0 0
        %2947 = vmatpush1.bf16.msra.mxu0 0
        %2948 = vmatprep.subr.bf16.mxu0 0
        %2949 = vmatpush1.bf16.msra.mxu0 0
        %2950 = vmatprep.subr.bf16.mxu0 0
        %2951 = vmatpush1.bf16.msra.mxu0 0
        %2952 = vmatprep.subr.bf16.mxu0 0
        %2953 = vmatpush1.bf16.msra.mxu0 0
        %2954 = vmatprep.subr.bf16.mxu0 0
        %2955 = vmatpush1.bf16.msra.mxu0 0
        %2956 = vmatprep.subr.bf16.mxu0 0
        %2957 = vmatpush1.bf16.msra.mxu0 0
        %2958 = vmatprep.subr.bf16.mxu0 0
        %2959 = vmatpush1.bf16.msra.mxu0 0
        %2960 = vmatprep.subr.bf16.mxu0 0
        %2961 = vmatpush1.bf16.msra.mxu0 0
        %2962 = vmatprep.subr.bf16.mxu0 0
        %2963 = vmatpush1.bf16.msra.mxu0 0
        %2964 = vmatprep.subr.bf16.mxu0 0
        %2965 = vmatpush1.bf16.msra.mxu0 0
        %2966 = vmatprep.subr.bf16.mxu0 0
        %2967 = vmatpush1.bf16.msra.mxu0 0
        %2968 = vmatprep.subr.bf16.mxu0 0
        %2969 = vmatpush1.bf16.msra.mxu0 0
        %2970 = vmatprep.subr.bf16.mxu0 0
        %2971 = vmatpush1.bf16.msra.mxu0 0
        %2972 = vmatprep.mubr.bf16.mxu0 0
        %2973 = vmatmul.mubr.bf16.gmra.mrb[0].mxu0 %v2862
        %v2974 = vpop.f32.mrb[0].mxu0
        %v2975 = vadd.f32 %v2926, %v2974
        %v2976 = vpop.f32.mrb[0].mxu0
        %v2977 = vpop.f32.mrb[0].mxu0
        %v2978 = vadd.f32 %v2926, %v2977
        %v2979 = vpop.f32.mrb[0].mxu0
        %2980 = vmatprep.mubr.bf16.mxu0 0
        %2981 = vmatmul.mubr.bf16.gmra.mrb[0].mxu0 %v2865
        %v2982 = vpop.f32.mrb[0].mxu0
        %v2983 = vadd.f32 %v2926, %v2982
        %v2984 = vpop.f32.mrb[0].mxu0
        %v2985 = vpop.f32.mrb[0].mxu0
        %v2986 = vpop.f32.mrb[0].mxu0
        %2987 = vdwg.mxu0
        %s2988 = scalar_lea.vmem %s9, 64
        %v2989 = vld [vmem:[%s2988] sm:$0xf]
        %v2990 = vld [vmem:[%s2988 + $0x4] sm:$0xf]
        %v2991 = vld [vmem:[%s2988 + $0x8] sm:$0xf]
        %v2992 = vld [vmem:[%s2988 + $0xc] sm:$0xf]
        %s2993 = scalar_lea.vmem %s10, 4
        %v2994 = vld [vmem:[%s2993] sm:$0x1]
        %v2996 = vlaneseq
        %v2997 = vshrl.u32 %v2996, 7
        %v2998 = vsub.s32 0, %v2997
        %v2999 = vrot.slane %v2994, %v2998
        %v3005 = vunpack.c.l.b16 %v2989
        %v3006 = vunpack.c.l.b16 %v2990
        %v3007 = vunpack.c.l.b16 %v2991
        %v3008 = vunpack.c.l.b16 %v2992
        %v3009 = vpack.c.b16 %v3006, %v3005
        %v3010 = vpack.c.b16 %v3008, %v3007
        %3013 = vmatprep.subr.bf16.mxu0 0
        %3014 = vmatpush1.bf16.msra.mxu0 %v3009
        %3015 = vmatprep.subr.bf16.mxu0 0
        %3016 = vmatpush1.bf16.msra.mxu0 %v3010
        %3017 = vmatprep.subr.bf16.mxu0 0
        %3018 = vmatpush1.bf16.msra.mxu0 0
        %3019 = vmatprep.subr.bf16.mxu0 0
        %3020 = vmatpush1.bf16.msra.mxu0 0
        %3021 = vmatprep.subr.bf16.mxu0 0
        %3022 = vmatpush1.bf16.msra.mxu0 0
        %3023 = vmatprep.subr.bf16.mxu0 0
        %3024 = vmatpush1.bf16.msra.mxu0 0
        %3025 = vmatprep.subr.bf16.mxu0 0
        %3026 = vmatpush1.bf16.msra.mxu0 0
        %3027 = vmatprep.subr.bf16.mxu0 0
        %3028 = vmatpush1.bf16.msra.mxu0 0
        %3029 = vmatprep.subr.bf16.mxu0 0
        %3030 = vmatpush1.bf16.msra.mxu0 0
        %3031 = vmatprep.subr.bf16.mxu0 0
        %3032 = vmatpush1.bf16.msra.mxu0 0
        %3033 = vmatprep.subr.bf16.mxu0 0
        %3034 = vmatpush1.bf16.msra.mxu0 0
        %3035 = vmatprep.subr.bf16.mxu0 0
        %3036 = vmatpush1.bf16.msra.mxu0 0
        %3037 = vmatprep.subr.bf16.mxu0 0
        %3038 = vmatpush1.bf16.msra.mxu0 0
        %3039 = vmatprep.subr.bf16.mxu0 0
        %3040 = vmatpush1.bf16.msra.mxu0 0
        %3041 = vmatprep.subr.bf16.mxu0 0
        %3042 = vmatpush1.bf16.msra.mxu0 0
        %3043 = vmatprep.subr.bf16.mxu0 0
        %3044 = vmatpush1.bf16.msra.mxu0 0
        %3045 = vmatprep.mubr.bf16.mxu0 0
        %3046 = vmatmul.mubr.bf16.gmra.mrb[0].mxu0 %v2862
        %v3047 = vpop.f32.mrb[0].mxu0
        %v3048 = vadd.f32 %v2999, %v3047
        %v3049 = vpop.f32.mrb[0].mxu0
        %v3050 = vpop.f32.mrb[0].mxu0
        %v3051 = vadd.f32 %v2999, %v3050
        %v3052 = vpop.f32.mrb[0].mxu0
        %3053 = vmatprep.mubr.bf16.mxu0 0
        %3054 = vmatmul.mubr.bf16.gmra.mrb[0].mxu0 %v2865
        %v3055 = vpop.f32.mrb[0].mxu0
        %v3056 = vadd.f32 %v2999, %v3055
        %v3057 = vpop.f32.mrb[0].mxu0
        %v3058 = vpop.f32.mrb[0].mxu0
        %v3059 = vpop.f32.mrb[0].mxu0
        %3060 = vdwg.mxu0
        %v3061 = vpack.c.bf16 %v2905, %v2902
        %v3062 = vpack.c.bf16 %v2910, %v2910
        %v3063 = vpack.c.bf16 %v2978, %v2975
        %v3064 = vpack.c.bf16 %v2983, %v2983
        %v3066 = vsel %vm940, %v3061, 0
        %v3069 = vsel %vm940, %v3062, 0
        %v3072 = vsel %vm940, %v3063, 0
        %v3075 = vsel %vm940, %v3064, 0
        %3077 = vmatprep.subr.bf16.mxu0 0
        %3078 = vmatpush1.bf16.xpose.msra.mxu0 %v3072
        %3079 = vmatprep.subr.bf16.mxu0 0
        %3080 = vmatpush1.bf16.xpose.msra.mxu0 %v3075
        %3081 = vmatprep.subr.bf16.mxu0 0
        %3082 = vmatpush1.bf16.xpose.msra.mxu0 0
        %3083 = vmatprep.subr.bf16.mxu0 0
        %3084 = vmatpush1.bf16.xpose.msra.mxu0 0
        %3085 = vmatprep.subr.bf16.mxu0 0
        %3086 = vmatpush1.bf16.xpose.msra.mxu0 0
        %3087 = vmatprep.subr.bf16.mxu0 0
        %3088 = vmatpush1.bf16.xpose.msra.mxu0 0
        %3089 = vmatprep.subr.bf16.mxu0 0
        %3090 = vmatpush1.bf16.xpose.msra.mxu0 0
        %3091 = vmatprep.subr.bf16.mxu0 0
        %3092 = vmatpush1.bf16.xpose.msra.mxu0 0
        %3093 = vmatprep.subr.bf16.mxu0 0
        %3094 = vmatpush1.bf16.xpose.msra.mxu0 0
        %3095 = vmatprep.subr.bf16.mxu0 0
        %3096 = vmatpush1.bf16.xpose.msra.mxu0 0
        %3097 = vmatprep.subr.bf16.mxu0 0
        %3098 = vmatpush1.bf16.xpose.msra.mxu0 0
        %3099 = vmatprep.subr.bf16.mxu0 0
        %3100 = vmatpush1.bf16.xpose.msra.mxu0 0
        %3101 = vmatprep.subr.bf16.mxu0 0
        %3102 = vmatpush1.bf16.xpose.msra.mxu0 0
        %3103 = vmatprep.subr.bf16.mxu0 0
        %3104 = vmatpush1.bf16.xpose.msra.mxu0 0
        %3105 = vmatprep.subr.bf16.mxu0 0
        %3106 = vmatpush1.bf16.xpose.msra.mxu0 0
        %3107 = vmatprep.subr.bf16.mxu0 0
        %3108 = vmatpush1.bf16.xpose.msra.mxu0 0
        %3109 = vmatprep.mubr.bf16.mxu0 0
        %3110 = vmatmul.mubr.bf16.gmra.mrb[0].mxu0 %v3066
        %v3111 = vpop.f32.mrb[0].mxu0
        %v3112 = vadd.f32 0.0, %v3111
        %v3113 = vpop.f32.mrb[0].mxu0
        %v3114 = vpop.f32.mrb[0].mxu0
        %v3115 = vadd.f32 0.0, %v3114
        %v3116 = vpop.f32.mrb[0].mxu0
        %3117 = vmatprep.mubr.bf16.mxu0 0
        %3118 = vmatmul.mubr.bf16.gmra.mrb[0].mxu0 %v3069
        %v3119 = vpop.f32.mrb[0].mxu0
        %v3120 = vadd.f32 0.0, %v3119
        %v3121 = vpop.f32.mrb[0].mxu0
        %v3122 = vpop.f32.mrb[0].mxu0
        %v3123 = vpop.f32.mrb[0].mxu0
        %3124 = vdwg.mxu0
        %v3125 = vmul.f32 %v3112, 0.35355338
        %v3126 = vmul.f32 %v3115, 0.35355338
        %v3127 = vmul.f32 %v3120, 0.35355338
        %v3128 = vsel %vm1004, %v3125, -inf
        %3129 = vmax.xlane.f32.xlu0 %v3128
        %v3130 = vpop.xlane.xlu0 %3129
        %v3131 = vsel %vm1004, %v3126, -inf
        %3132 = vmax.xlane.f32.xlu0 %v3131
        %v3133 = vpop.xlane.xlu0 %3132
        %v3134 = vsel %vm1011, %v3127, -inf
        %3135 = vmax.xlane.f32.xlu0 %v3134
        %v3136 = vpop.xlane.xlu0 %3135
        %v3137 = vsub.f32 %v3125, %v3130
        %v3138 = vsub.f32 %v3126, %v3133
        %v3139 = vsub.f32 %v3127, %v3136
        %v3140 = vmul.f32 %v3137, 1.442695
        %v3141 = vpow.pop %v3140
        %v3142 = vmul.f32 %v3138, 1.442695
        %v3143 = vpow.pop %v3142
        %v3144 = vmul.f32 %v3139, 1.442695
        %v3145 = vpow.pop %v3144
        %v3146 = vsel %vm1004, %v3141, 0.0
        %3147 = vadd.xlane.f32.xlu0 %v3146
        %v3148 = vpop.xlane.xlu0 %3147
        %v3149 = vsel %vm1004, %v3143, 0.0
        %3150 = vadd.xlane.f32.xlu0 %v3149
        %v3151 = vpop.xlane.xlu0 %3150
        %v3152 = vsel %vm1011, %v3145, 0.0
        %3153 = vadd.xlane.f32.xlu0 %v3152
        %v3154 = vpop.xlane.xlu0 %3153
        %v3155 = vrcp.pop %v3148
        %v3156 = vmul.f32 %v3141, %v3155
        %v3157 = vrcp.pop %v3151
        %v3158 = vmul.f32 %v3143, %v3157
        %v3159 = vrcp.pop %v3154
        %v3160 = vmul.f32 %v3145, %v3159
        %v3161 = vpack.c.bf16 %v3158, %v3156
        %v3162 = vpack.c.bf16 %v3160, %v3160
        %v3163 = vpack.c.bf16 %v3051, %v3048
        %v3164 = vpack.c.bf16 %v3056, %v3056
        %v3166 = vsel %vm1004, %v3161, 0
        %v3169 = vsel %vm1004, %v3162, 0
        %v3172 = vand.u32 %v3164, %v1051
        %3174 = vmatprep.subr.bf16.mxu0 0
        %3175 = vmatpush1.bf16.msra.mxu0 %v3163
        %3176 = vmatprep.subr.bf16.mxu0 0
        %3177 = vmatpush1.bf16.msra.mxu0 %v3172
        %3178 = vmatprep.subr.bf16.mxu0 0
        %3179 = vmatpush1.bf16.msra.mxu0 0
        %3180 = vmatprep.subr.bf16.mxu0 0
        %3181 = vmatpush1.bf16.msra.mxu0 0
        %3182 = vmatprep.subr.bf16.mxu0 0
        %3183 = vmatpush1.bf16.msra.mxu0 0
        %3184 = vmatprep.subr.bf16.mxu0 0
        %3185 = vmatpush1.bf16.msra.mxu0 0
        %3186 = vmatprep.subr.bf16.mxu0 0
        %3187 = vmatpush1.bf16.msra.mxu0 0
        %3188 = vmatprep.subr.bf16.mxu0 0
        %3189 = vmatpush1.bf16.msra.mxu0 0
        %3190 = vmatprep.subr.bf16.mxu0 0
        %3191 = vmatpush1.bf16.msra.mxu0 0
        %3192 = vmatprep.subr.bf16.mxu0 0
        %3193 = vmatpush1.bf16.msra.mxu0 0
        %3194 = vmatprep.subr.bf16.mxu0 0
        %3195 = vmatpush1.bf16.msra.mxu0 0
        %3196 = vmatprep.subr.bf16.mxu0 0
        %3197 = vmatpush1.bf16.msra.mxu0 0
        %3198 = vmatprep.subr.bf16.mxu0 0
        %3199 = vmatpush1.bf16.msra.mxu0 0
        %3200 = vmatprep.subr.bf16.mxu0 0
        %3201 = vmatpush1.bf16.msra.mxu0 0
        %3202 = vmatprep.subr.bf16.mxu0 0
        %3203 = vmatpush1.bf16.msra.mxu0 0
        %3204 = vmatprep.subr.bf16.mxu0 0
        %3205 = vmatpush1.bf16.msra.mxu0 0
        %3206 = vmatprep.mubr.bf16.mxu0 0
        %3207 = vmatmul.mubr.bf16.gmra.mrb[0].mxu0 %v3166
        %v3208 = vpop.f32.mrb[0].mxu0
        %v3209 = vadd.f32 0.0, %v3208
        %v3210 = vpop.f32.mrb[0].mxu0
        %v3211 = vpop.f32.mrb[0].mxu0
        %v3212 = vadd.f32 0.0, %v3211
        %v3213 = vpop.f32.mrb[0].mxu0
        %3214 = vmatprep.mubr.bf16.mxu0 0
        %3215 = vmatmul.mubr.bf16.gmra.mrb[0].mxu0 %v3169
        %v3216 = vpop.f32.mrb[0].mxu0
        %v3217 = vadd.f32 0.0, %v3216
        %v3218 = vpop.f32.mrb[0].mxu0
        %v3219 = vpop.f32.mrb[0].mxu0
        %v3220 = vpop.f32.mrb[0].mxu0
        %3221 = vdwg.mxu0
        %s3222 = scalar_lea.vmem %s11, 16
        %v3223 = vld [vmem:[%s3222] sm:$0xf]
        %v3224 = vpack.c.bf16 %v3212, %v3209
        %v3225 = vpack.c.bf16 %v3217, %v3217
        %v3226 = vadd.f32 %v3156, 0.0
        %s3227 = scalar_lea.vmem %s5, 80
        %v3228 = vld [vmem:[%s3227] sm:$0xf]
        %v3229 = vld [vmem:[%s3227 + $0x4] sm:$0xf]
        %v3230 = vld [vmem:[%s3227 + $0x8] sm:$0xf]
        %v3231 = vld [vmem:[%s3227 + $0xc] sm:$0xf]
        %s3232 = scalar_lea.vmem %s6, 5
        %v3233 = vld [vmem:[%s3232] sm:$0x1]
        %v3235 = vlaneseq
        %v3236 = vshrl.u32 %v3235, 7
        %v3237 = vsub.s32 0, %v3236
        %v3238 = vrot.slane %v3233, %v3237
        %v3244 = vunpack.c.l.b16 %v3228
        %v3245 = vunpack.c.l.b16 %v3229
        %v3246 = vunpack.c.l.b16 %v3230
        %v3247 = vunpack.c.l.b16 %v3231
        %v3248 = vpack.c.b16 %v3245, %v3244
        %v3249 = vpack.c.b16 %v3247, %v3246
        %3252 = vmatprep.subr.bf16.mxu0 0
        %3253 = vmatpush1.bf16.msra.mxu0 %v3248
        %3254 = vmatprep.subr.bf16.mxu0 0
        %3255 = vmatpush1.bf16.msra.mxu0 %v3249
        %3256 = vmatprep.subr.bf16.mxu0 0
        %3257 = vmatpush1.bf16.msra.mxu0 0
        %3258 = vmatprep.subr.bf16.mxu0 0
        %3259 = vmatpush1.bf16.msra.mxu0 0
        %3260 = vmatprep.subr.bf16.mxu0 0
        %3261 = vmatpush1.bf16.msra.mxu0 0
        %3262 = vmatprep.subr.bf16.mxu0 0
        %3263 = vmatpush1.bf16.msra.mxu0 0
        %3264 = vmatprep.subr.bf16.mxu0 0
        %3265 = vmatpush1.bf16.msra.mxu0 0
        %3266 = vmatprep.subr.bf16.mxu0 0
        %3267 = vmatpush1.bf16.msra.mxu0 0
        %3268 = vmatprep.subr.bf16.mxu0 0
        %3269 = vmatpush1.bf16.msra.mxu0 0
        %3270 = vmatprep.subr.bf16.mxu0 0
        %3271 = vmatpush1.bf16.msra.mxu0 0
        %3272 = vmatprep.subr.bf16.mxu0 0
        %3273 = vmatpush1.bf16.msra.mxu0 0
        %3274 = vmatprep.subr.bf16.mxu0 0
        %3275 = vmatpush1.bf16.msra.mxu0 0
        %3276 = vmatprep.subr.bf16.mxu0 0
        %3277 = vmatpush1.bf16.msra.mxu0 0
        %3278 = vmatprep.subr.bf16.mxu0 0
        %3279 = vmatpush1.bf16.msra.mxu0 0
        %3280 = vmatprep.subr.bf16.mxu0 0
        %3281 = vmatpush1.bf16.msra.mxu0 0
        %3282 = vmatprep.subr.bf16.mxu0 0
        %3283 = vmatpush1.bf16.msra.mxu0 0
        %3284 = vmatprep.mubr.bf16.mxu0 0
        %3285 = vmatmul.mubr.bf16.gmra.mrb[0].mxu0 %v2862
        %v3286 = vpop.f32.mrb[0].mxu0
        %v3287 = vadd.f32 %v3238, %v3286
        %v3288 = vpop.f32.mrb[0].mxu0
        %v3289 = vpop.f32.mrb[0].mxu0
        %v3290 = vadd.f32 %v3238, %v3289
        %v3291 = vpop.f32.mrb[0].mxu0
        %3292 = vmatprep.mubr.bf16.mxu0 0
        %3293 = vmatmul.mubr.bf16.gmra.mrb[0].mxu0 %v2865
        %v3294 = vpop.f32.mrb[0].mxu0
        %v3295 = vadd.f32 %v3238, %v3294
        %v3296 = vpop.f32.mrb[0].mxu0
        %v3297 = vpop.f32.mrb[0].mxu0
        %v3298 = vpop.f32.mrb[0].mxu0
        %3299 = vdwg.mxu0
        %s3300 = scalar_lea.vmem %s7, 80
        %v3301 = vld [vmem:[%s3300] sm:$0xf]
        %v3302 = vld [vmem:[%s3300 + $0x4] sm:$0xf]
        %v3303 = vld [vmem:[%s3300 + $0x8] sm:$0xf]
        %v3304 = vld [vmem:[%s3300 + $0xc] sm:$0xf]
        %s3305 = scalar_lea.vmem %s8, 5
        %v3306 = vld [vmem:[%s3305] sm:$0x1]
        %v3308 = vlaneseq
        %v3309 = vshrl.u32 %v3308, 7
        %v3310 = vsub.s32 0, %v3309
        %v3311 = vrot.slane %v3306, %v3310
        %v3317 = vunpack.c.l.b16 %v3301
        %v3318 = vunpack.c.l.b16 %v3302
        %v3319 = vunpack.c.l.b16 %v3303
        %v3320 = vunpack.c.l.b16 %v3304
        %v3321 = vpack.c.b16 %v3318, %v3317
        %v3322 = vpack.c.b16 %v3320, %v3319
        %3325 = vmatprep.subr.bf16.mxu0 0
        %3326 = vmatpush1.bf16.msra.mxu0 %v3321
        %3327 = vmatprep.subr.bf16.mxu0 0
        %3328 = vmatpush1.bf16.msra.mxu0 %v3322
        %3329 = vmatprep.subr.bf16.mxu0 0
        %3330 = vmatpush1.bf16.msra.mxu0 0
        %3331 = vmatprep.subr.bf16.mxu0 0
        %3332 = vmatpush1.bf16.msra.mxu0 0
        %3333 = vmatprep.subr.bf16.mxu0 0
        %3334 = vmatpush1.bf16.msra.mxu0 0
        %3335 = vmatprep.subr.bf16.mxu0 0
        %3336 = vmatpush1.bf16.msra.mxu0 0
        %3337 = vmatprep.subr.bf16.mxu0 0
        %3338 = vmatpush1.bf16.msra.mxu0 0
        %3339 = vmatprep.subr.bf16.mxu0 0
        %3340 = vmatpush1.bf16.msra.mxu0 0
        %3341 = vmatprep.subr.bf16.mxu0 0
        %3342 = vmatpush1.bf16.msra.mxu0 0
        %3343 = vmatprep.subr.bf16.mxu0 0
        %3344 = vmatpush1.bf16.msra.mxu0 0
        %3345 = vmatprep.subr.bf16.mxu0 0
        %3346 = vmatpush1.bf16.msra.mxu0 0
        %3347 = vmatprep.subr.bf16.mxu0 0
        %3348 = vmatpush1.bf16.msra.mxu0 0
        %3349 = vmatprep.subr.bf16.mxu0 0
        %3350 = vmatpush1.bf16.msra.mxu0 0
        %3351 = vmatprep.subr.bf16.mxu0 0
        %3352 = vmatpush1.bf16.msra.mxu0 0
        %3353 = vmatprep.subr.bf16.mxu0 0
        %3354 = vmatpush1.bf16.msra.mxu0 0
        %3355 = vmatprep.subr.bf16.mxu0 0
        %3356 = vmatpush1.bf16.msra.mxu0 0
        %3357 = vmatprep.mubr.bf16.mxu0 0
        %3358 = vmatmul.mubr.bf16.gmra.mrb[0].mxu0 %v2862
        %v3359 = vpop.f32.mrb[0].mxu0
        %v3360 = vadd.f32 %v3311, %v3359
        %v3361 = vpop.f32.mrb[0].mxu0
        %v3362 = vpop.f32.mrb[0].mxu0
        %v3363 = vadd.f32 %v3311, %v3362
        %v3364 = vpop.f32.mrb[0].mxu0
        %3365 = vmatprep.mubr.bf16.mxu0 0
        %3366 = vmatmul.mubr.bf16.gmra.mrb[0].mxu0 %v2865
        %v3367 = vpop.f32.mrb[0].mxu0
        %v3368 = vadd.f32 %v3311, %v3367
        %v3369 = vpop.f32.mrb[0].mxu0
        %v3370 = vpop.f32.mrb[0].mxu0
        %v3371 = vpop.f32.mrb[0].mxu0
        %3372 = vdwg.mxu0
        %s3373 = scalar_lea.vmem %s9, 80
        %v3374 = vld [vmem:[%s3373] sm:$0xf]
        %v3375 = vld [vmem:[%s3373 + $0x4] sm:$0xf]
        %v3376 = vld [vmem:[%s3373 + $0x8] sm:$0xf]
        %v3377 = vld [vmem:[%s3373 + $0xc] sm:$0xf]
        %s3378 = scalar_lea.vmem %s10, 5
        %v3379 = vld [vmem:[%s3378] sm:$0x1]
        %v3381 = vlaneseq
        %v3382 = vshrl.u32 %v3381, 7
        %v3383 = vsub.s32 0, %v3382
        %v3384 = vrot.slane %v3379, %v3383
        %v3390 = vunpack.c.l.b16 %v3374
        %v3391 = vunpack.c.l.b16 %v3375
        %v3392 = vunpack.c.l.b16 %v3376
        %v3393 = vunpack.c.l.b16 %v3377
        %v3394 = vpack.c.b16 %v3391, %v3390
        %v3395 = vpack.c.b16 %v3393, %v3392
        %3398 = vmatprep.subr.bf16.mxu0 0
        %3399 = vmatpush1.bf16.msra.mxu0 %v3394
        %3400 = vmatprep.subr.bf16.mxu0 0
        %3401 = vmatpush1.bf16.msra.mxu0 %v3395
        %3402 = vmatprep.subr.bf16.mxu0 0
        %3403 = vmatpush1.bf16.msra.mxu0 0
        %3404 = vmatprep.subr.bf16.mxu0 0
        %3405 = vmatpush1.bf16.msra.mxu0 0
        %3406 = vmatprep.subr.bf16.mxu0 0
        %3407 = vmatpush1.bf16.msra.mxu0 0
        %3408 = vmatprep.subr.bf16.mxu0 0
        %3409 = vmatpush1.bf16.msra.mxu0 0
        %3410 = vmatprep.subr.bf16.mxu0 0
        %3411 = vmatpush1.bf16.msra.mxu0 0
        %3412 = vmatprep.subr.bf16.mxu0 0
        %3413 = vmatpush1.bf16.msra.mxu0 0
        %3414 = vmatprep.subr.bf16.mxu0 0
        %3415 = vmatpush1.bf16.msra.mxu0 0
        %3416 = vmatprep.subr.bf16.mxu0 0
        %3417 = vmatpush1.bf16.msra.mxu0 0
        %3418 = vmatprep.subr.bf16.mxu0 0
        %3419 = vmatpush1.bf16.msra.mxu0 0
        %3420 = vmatprep.subr.bf16.mxu0 0
        %3421 = vmatpush1.bf16.msra.mxu0 0
        %3422 = vmatprep.subr.bf16.mxu0 0
        %3423 = vmatpush1.bf16.msra.mxu0 0
        %3424 = vmatprep.subr.bf16.mxu0 0
        %3425 = vmatpush1.bf16.msra.mxu0 0
        %3426 = vmatprep.subr.bf16.mxu0 0
        %3427 = vmatpush1.bf16.msra.mxu0 0
        %3428 = vmatprep.subr.bf16.mxu0 0
        %3429 = vmatpush1.bf16.msra.mxu0 0
        %3430 = vmatprep.mubr.bf16.mxu0 0
        %3431 = vmatmul.mubr.bf16.gmra.mrb[0].mxu0 %v2862
        %v3432 = vpop.f32.mrb[0].mxu0
        %v3433 = vadd.f32 %v3384, %v3432
        %v3434 = vpop.f32.mrb[0].mxu0
        %v3435 = vpop.f32.mrb[0].mxu0
        %v3436 = vadd.f32 %v3384, %v3435
        %v3437 = vpop.f32.mrb[0].mxu0
        %3438 = vmatprep.mubr.bf16.mxu0 0
        %3439 = vmatmul.mubr.bf16.gmra.mrb[0].mxu0 %v2865
        %v3440 = vpop.f32.mrb[0].mxu0
        %v3441 = vadd.f32 %v3384, %v3440
        %v3442 = vpop.f32.mrb[0].mxu0
        %v3443 = vpop.f32.mrb[0].mxu0
        %v3444 = vpop.f32.mrb[0].mxu0
        %3445 = vdwg.mxu0
        %v3446 = vpack.c.bf16 %v3290, %v3287
        %v3447 = vpack.c.bf16 %v3295, %v3295
        %v3448 = vpack.c.bf16 %v3363, %v3360
        %v3449 = vpack.c.bf16 %v3368, %v3368
        %v3451 = vsel %vm940, %v3446, 0
        %v3454 = vsel %vm940, %v3447, 0
        %v3457 = vsel %vm940, %v3448, 0
        %v3460 = vsel %vm940, %v3449, 0
        %3462 = vmatprep.subr.bf16.mxu0 0
        %3463 = vmatpush1.bf16.xpose.msra.mxu0 %v3457
        %3464 = vmatprep.subr.bf16.mxu0 0
        %3465 = vmatpush1.bf16.xpose.msra.mxu0 %v3460
        %3466 = vmatprep.subr.bf16.mxu0 0
        %3467 = vmatpush1.bf16.xpose.msra.mxu0 0
        %3468 = vmatprep.subr.bf16.mxu0 0
        %3469 = vmatpush1.bf16.xpose.msra.mxu0 0
        %3470 = vmatprep.subr.bf16.mxu0 0
        %3471 = vmatpush1.bf16.xpose.msra.mxu0 0
        %3472 = vmatprep.subr.bf16.mxu0 0
        %3473 = vmatpush1.bf16.xpose.msra.mxu0 0
        %3474 = vmatprep.subr.bf16.mxu0 0
        %3475 = vmatpush1.bf16.xpose.msra.mxu0 0
        %3476 = vmatprep.subr.bf16.mxu0 0
        %3477 = vmatpush1.bf16.xpose.msra.mxu0 0
        %3478 = vmatprep.subr.bf16.mxu0 0
        %3479 = vmatpush1.bf16.xpose.msra.mxu0 0
        %3480 = vmatprep.subr.bf16.mxu0 0
        %3481 = vmatpush1.bf16.xpose.msra.mxu0 0
        %3482 = vmatprep.subr.bf16.mxu0 0
        %3483 = vmatpush1.bf16.xpose.msra.mxu0 0
        %3484 = vmatprep.subr.bf16.mxu0 0
        %3485 = vmatpush1.bf16.xpose.msra.mxu0 0
        %3486 = vmatprep.subr.bf16.mxu0 0
        %3487 = vmatpush1.bf16.xpose.msra.mxu0 0
        %3488 = vmatprep.subr.bf16.mxu0 0
        %3489 = vmatpush1.bf16.xpose.msra.mxu0 0
        %3490 = vmatprep.subr.bf16.mxu0 0
        %3491 = vmatpush1.bf16.xpose.msra.mxu0 0
        %3492 = vmatprep.subr.bf16.mxu0 0
        %3493 = vmatpush1.bf16.xpose.msra.mxu0 0
        %3494 = vmatprep.mubr.bf16.mxu0 0
        %3495 = vmatmul.mubr.bf16.gmra.mrb[0].mxu0 %v3451
        %v3496 = vpop.f32.mrb[0].mxu0
        %v3497 = vadd.f32 0.0, %v3496
        %v3498 = vpop.f32.mrb[0].mxu0
        %v3499 = vpop.f32.mrb[0].mxu0
        %v3500 = vadd.f32 0.0, %v3499
        %v3501 = vpop.f32.mrb[0].mxu0
        %3502 = vmatprep.mubr.bf16.mxu0 0
        %3503 = vmatmul.mubr.bf16.gmra.mrb[0].mxu0 %v3454
        %v3504 = vpop.f32.mrb[0].mxu0
        %v3505 = vadd.f32 0.0, %v3504
        %v3506 = vpop.f32.mrb[0].mxu0
        %v3507 = vpop.f32.mrb[0].mxu0
        %v3508 = vpop.f32.mrb[0].mxu0
        %3509 = vdwg.mxu0
        %v3510 = vmul.f32 %v3497, 0.35355338
        %v3511 = vmul.f32 %v3500, 0.35355338
        %v3512 = vmul.f32 %v3505, 0.35355338
        %v3513 = vsel %vm1004, %v3510, -inf
        %3514 = vmax.xlane.f32.xlu0 %v3513
        %v3515 = vpop.xlane.xlu0 %3514
        %v3516 = vsel %vm1004, %v3511, -inf
        %3517 = vmax.xlane.f32.xlu0 %v3516
        %v3518 = vpop.xlane.xlu0 %3517
        %v3519 = vsel %vm1011, %v3512, -inf
        %3520 = vmax.xlane.f32.xlu0 %v3519
        %v3521 = vpop.xlane.xlu0 %3520
        %v3522 = vsub.f32 %v3510, %v3515
        %v3523 = vsub.f32 %v3511, %v3518
        %v3524 = vsub.f32 %v3512, %v3521
        %v3525 = vmul.f32 %v3522, 1.442695
        %v3526 = vpow.pop %v3525
        %v3527 = vmul.f32 %v3523, 1.442695
        %v3528 = vpow.pop %v3527
        %v3529 = vmul.f32 %v3524, 1.442695
        %v3530 = vpow.pop %v3529
        %v3531 = vsel %vm1004, %v3526, 0.0
        %3532 = vadd.xlane.f32.xlu0 %v3531
        %v3533 = vpop.xlane.xlu0 %3532
        %v3534 = vsel %vm1004, %v3528, 0.0
        %3535 = vadd.xlane.f32.xlu0 %v3534
        %v3536 = vpop.xlane.xlu0 %3535
        %v3537 = vsel %vm1011, %v3530, 0.0
        %3538 = vadd.xlane.f32.xlu0 %v3537
        %v3539 = vpop.xlane.xlu0 %3538
        %v3540 = vrcp.pop %v3533
        %v3541 = vmul.f32 %v3526, %v3540
        %v3542 = vrcp.pop %v3536
        %v3543 = vmul.f32 %v3528, %v3542
        %v3544 = vrcp.pop %v3539
        %v3545 = vmul.f32 %v3530, %v3544
        %v3546 = vpack.c.bf16 %v3543, %v3541
        %v3547 = vpack.c.bf16 %v3545, %v3545
        %v3548 = vpack.c.bf16 %v3436, %v3433
        %v3549 = vpack.c.bf16 %v3441, %v3441
        %v3551 = vsel %vm1004, %v3546, 0
        %v3554 = vsel %vm1004, %v3547, 0
        %v3557 = vand.u32 %v3549, %v1051
        %3559 = vmatprep.subr.bf16.mxu0 0
        %3560 = vmatpush1.bf16.msra.mxu0 %v3548
        %3561 = vmatprep.subr.bf16.mxu0 0
        %3562 = vmatpush1.bf16.msra.mxu0 %v3557
        %3563 = vmatprep.subr.bf16.mxu0 0
        %3564 = vmatpush1.bf16.msra.mxu0 0
        %3565 = vmatprep.subr.bf16.mxu0 0
        %3566 = vmatpush1.bf16.msra.mxu0 0
        %3567 = vmatprep.subr.bf16.mxu0 0
        %3568 = vmatpush1.bf16.msra.mxu0 0
        %3569 = vmatprep.subr.bf16.mxu0 0
        %3570 = vmatpush1.bf16.msra.mxu0 0
        %3571 = vmatprep.subr.bf16.mxu0 0
        %3572 = vmatpush1.bf16.msra.mxu0 0
        %3573 = vmatprep.subr.bf16.mxu0 0
        %3574 = vmatpush1.bf16.msra.mxu0 0
        %3575 = vmatprep.subr.bf16.mxu0 0
        %3576 = vmatpush1.bf16.msra.mxu0 0
        %3577 = vmatprep.subr.bf16.mxu0 0
        %3578 = vmatpush1.bf16.msra.mxu0 0
        %3579 = vmatprep.subr.bf16.mxu0 0
        %3580 = vmatpush1.bf16.msra.mxu0 0
        %3581 = vmatprep.subr.bf16.mxu0 0
        %3582 = vmatpush1.bf16.msra.mxu0 0
        %3583 = vmatprep.subr.bf16.mxu0 0
        %3584 = vmatpush1.bf16.msra.mxu0 0
        %3585 = vmatprep.subr.bf16.mxu0 0
        %3586 = vmatpush1.bf16.msra.mxu0 0
        %3587 = vmatprep.subr.bf16.mxu0 0
        %3588 = vmatpush1.bf16.msra.mxu0 0
        %3589 = vmatprep.subr.bf16.mxu0 0
        %3590 = vmatpush1.bf16.msra.mxu0 0
        %3591 = vmatprep.mubr.bf16.mxu0 0
        %3592 = vmatmul.mubr.bf16.gmra.mrb[0].mxu0 %v3551
        %v3593 = vpop.f32.mrb[0].mxu0
        %v3594 = vadd.f32 0.0, %v3593
        %v3595 = vpop.f32.mrb[0].mxu0
        %v3596 = vpop.f32.mrb[0].mxu0
        %v3597 = vadd.f32 0.0, %v3596
        %v3598 = vpop.f32.mrb[0].mxu0
        %3599 = vmatprep.mubr.bf16.mxu0 0
        %3600 = vmatmul.mubr.bf16.gmra.mrb[0].mxu0 %v3554
        %v3601 = vpop.f32.mrb[0].mxu0
        %v3602 = vadd.f32 0.0, %v3601
        %v3603 = vpop.f32.mrb[0].mxu0
        %v3604 = vpop.f32.mrb[0].mxu0
        %v3605 = vpop.f32.mrb[0].mxu0
        %3606 = vdwg.mxu0
        %s3607 = scalar_lea.vmem %s11, 20
        %v3608 = vld [vmem:[%s3607] sm:$0xf]
        %v3609 = vpack.c.bf16 %v3597, %v3594
        %v3610 = vpack.c.bf16 %v3602, %v3602
        %v3612 = vsel %vm940, %v3609, 0
        %v3615 = vsel %vm940, %v3610, 0
        %v3618 = vsel %vm1496, %v3608, 0
        %3620 = vmatprep.subr.bf16.mxu0 0
        %3621 = vmatpush1.bf16.msra.mxu0 %v3618
        %3622 = vmatprep.subr.bf16.mxu0 0
        %3623 = vmatpush1.bf16.msra.mxu0 0
        %3624 = vmatprep.subr.bf16.mxu0 0
        %3625 = vmatpush1.bf16.msra.mxu0 0
        %3626 = vmatprep.subr.bf16.mxu0 0
        %3627 = vmatpush1.bf16.msra.mxu0 0
        %3628 = vmatprep.subr.bf16.mxu0 0
        %3629 = vmatpush1.bf16.msra.mxu0 0
        %3630 = vmatprep.subr.bf16.mxu0 0
        %3631 = vmatpush1.bf16.msra.mxu0 0
        %3632 = vmatprep.subr.bf16.mxu0 0
        %3633 = vmatpush1.bf16.msra.mxu0 0
        %3634 = vmatprep.subr.bf16.mxu0 0
        %3635 = vmatpush1.bf16.msra.mxu0 0
        %3636 = vmatprep.subr.bf16.mxu0 0
        %3637 = vmatpush1.bf16.msra.mxu0 0
        %3638 = vmatprep.subr.bf16.mxu0 0
        %3639 = vmatpush1.bf16.msra.mxu0 0
        %3640 = vmatprep.subr.bf16.mxu0 0
        %3641 = vmatpush1.bf16.msra.mxu0 0
        %3642 = vmatprep.subr.bf16.mxu0 0
        %3643 = vmatpush1.bf16.msra.mxu0 0
        %3644 = vmatprep.subr.bf16.mxu0 0
        %3645 = vmatpush1.bf16.msra.mxu0 0
        %3646 = vmatprep.subr.bf16.mxu0 0
        %3647 = vmatpush1.bf16.msra.mxu0 0
        %3648 = vmatprep.subr.bf16.mxu0 0
        %3649 = vmatpush1.bf16.msra.mxu0 0
        %3650 = vmatprep.subr.bf16.mxu0 0
        %3651 = vmatpush1.bf16.msra.mxu0 0
        %3652 = vmatprep.mubr.bf16.mxu0 0
        %3653 = vmatmul.mubr.bf16.gmra.mrb[0].mxu0 %v3612
        %v3654 = vpop.f32.mrb[0].mxu0
        %v3655 = vadd.f32 0.0, %v3654
        %v3656 = vpop.f32.mrb[0].mxu0
        %v3657 = vpop.f32.mrb[0].mxu0
        %v3658 = vadd.f32 0.0, %v3657
        %v3659 = vpop.f32.mrb[0].mxu0
        %3660 = vmatprep.mubr.bf16.mxu0 0
        %3661 = vmatmul.mubr.bf16.gmra.mrb[0].mxu0 %v3615
        %v3662 = vpop.f32.mrb[0].mxu0
        %v3663 = vadd.f32 0.0, %v3662
        %v3664 = vpop.f32.mrb[0].mxu0
        %v3665 = vpop.f32.mrb[0].mxu0
        %v3666 = vpop.f32.mrb[0].mxu0
        %3667 = vdwg.mxu0
        %v3669 = vsel %vm940, %v3224, 0
        %v3672 = vsel %vm940, %v3225, 0
        %v3675 = vsel %vm1496, %v3223, 0
        %3677 = vmatprep.subr.bf16.mxu0 0
        %3678 = vmatpush1.bf16.msra.mxu0 %v3675
        %3679 = vmatprep.subr.bf16.mxu0 0
        %3680 = vmatpush1.bf16.msra.mxu0 0
        %3681 = vmatprep.subr.bf16.mxu0 0
        %3682 = vmatpush1.bf16.msra.mxu0 0
        %3683 = vmatprep.subr.bf16.mxu0 0
        %3684 = vmatpush1.bf16.msra.mxu0 0
        %3685 = vmatprep.subr.bf16.mxu0 0
        %3686 = vmatpush1.bf16.msra.mxu0 0
        %3687 = vmatprep.subr.bf16.mxu0 0
        %3688 = vmatpush1.bf16.msra.mxu0 0
        %3689 = vmatprep.subr.bf16.mxu0 0
        %3690 = vmatpush1.bf16.msra.mxu0 0
        %3691 = vmatprep.subr.bf16.mxu0 0
        %3692 = vmatpush1.bf16.msra.mxu0 0
        %3693 = vmatprep.subr.bf16.mxu0 0
        %3694 = vmatpush1.bf16.msra.mxu0 0
        %3695 = vmatprep.subr.bf16.mxu0 0
        %3696 = vmatpush1.bf16.msra.mxu0 0
        %3697 = vmatprep.subr.bf16.mxu0 0
        %3698 = vmatpush1.bf16.msra.mxu0 0
        %3699 = vmatprep.subr.bf16.mxu0 0
        %3700 = vmatpush1.bf16.msra.mxu0 0
        %3701 = vmatprep.subr.bf16.mxu0 0
        %3702 = vmatpush1.bf16.msra.mxu0 0
        %3703 = vmatprep.subr.bf16.mxu0 0
        %3704 = vmatpush1.bf16.msra.mxu0 0
        %3705 = vmatprep.subr.bf16.mxu0 0
        %3706 = vmatpush1.bf16.msra.mxu0 0
        %3707 = vmatprep.subr.bf16.mxu0 0
        %3708 = vmatpush1.bf16.msra.mxu0 0
        %3709 = vmatprep.mubr.bf16.mxu0 0
        %3710 = vmatmul.mubr.bf16.gmra.mrb[0].mxu0 %v3669
        %v3711 = vpop.f32.mrb[0].mxu0
        %v3712 = vadd.f32 %v3655, %v3711
        %v3713 = vpop.f32.mrb[0].mxu0
        %v3714 = vpop.f32.mrb[0].mxu0
        %v3715 = vadd.f32 %v3658, %v3714
        %v3716 = vpop.f32.mrb[0].mxu0
        %3717 = vmatprep.mubr.bf16.mxu0 0
        %3718 = vmatmul.mubr.bf16.gmra.mrb[0].mxu0 %v3672
        %v3719 = vpop.f32.mrb[0].mxu0
        %v3720 = vadd.f32 %v3663, %v3719
        %v3721 = vpop.f32.mrb[0].mxu0
        %v3722 = vpop.f32.mrb[0].mxu0
        %v3723 = vpop.f32.mrb[0].mxu0
        %3724 = vdwg.mxu0
        %v3725 = vadd.f32 %v3226, %v3541
        %s3726 = scalar_lea.vmem %s5, 96
        %v3727 = vld [vmem:[%s3726] sm:$0xf]
        %v3728 = vld [vmem:[%s3726 + $0x4] sm:$0xf]
        %v3729 = vld [vmem:[%s3726 + $0x8] sm:$0xf]
        %v3730 = vld [vmem:[%s3726 + $0xc] sm:$0xf]
        %s3731 = scalar_lea.vmem %s6, 6
        %v3732 = vld [vmem:[%s3731] sm:$0x1]
        %v3734 = vlaneseq
        %v3735 = vshrl.u32 %v3734, 7
        %v3736 = vsub.s32 0, %v3735
        %v3737 = vrot.slane %v3732, %v3736
        %v3743 = vunpack.c.l.b16 %v3727
        %v3744 = vunpack.c.l.b16 %v3728
        %v3745 = vunpack.c.l.b16 %v3729
        %v3746 = vunpack.c.l.b16 %v3730
        %v3747 = vpack.c.b16 %v3744, %v3743
        %v3748 = vpack.c.b16 %v3746, %v3745
        %3751 = vmatprep.subr.bf16.mxu0 0
        %3752 = vmatpush1.bf16.msra.mxu0 %v3747
        %3753 = vmatprep.subr.bf16.mxu0 0
        %3754 = vmatpush1.bf16.msra.mxu0 %v3748
        %3755 = vmatprep.subr.bf16.mxu0 0
        %3756 = vmatpush1.bf16.msra.mxu0 0
        %3757 = vmatprep.subr.bf16.mxu0 0
        %3758 = vmatpush1.bf16.msra.mxu0 0
        %3759 = vmatprep.subr.bf16.mxu0 0
        %3760 = vmatpush1.bf16.msra.mxu0 0
        %3761 = vmatprep.subr.bf16.mxu0 0
        %3762 = vmatpush1.bf16.msra.mxu0 0
        %3763 = vmatprep.subr.bf16.mxu0 0
        %3764 = vmatpush1.bf16.msra.mxu0 0
        %3765 = vmatprep.subr.bf16.mxu0 0
        %3766 = vmatpush1.bf16.msra.mxu0 0
        %3767 = vmatprep.subr.bf16.mxu0 0
        %3768 = vmatpush1.bf16.msra.mxu0 0
        %3769 = vmatprep.subr.bf16.mxu0 0
        %3770 = vmatpush1.bf16.msra.mxu0 0
        %3771 = vmatprep.subr.bf16.mxu0 0
        %3772 = vmatpush1.bf16.msra.mxu0 0
        %3773 = vmatprep.subr.bf16.mxu0 0
        %3774 = vmatpush1.bf16.msra.mxu0 0
        %3775 = vmatprep.subr.bf16.mxu0 0
        %3776 = vmatpush1.bf16.msra.mxu0 0
        %3777 = vmatprep.subr.bf16.mxu0 0
        %3778 = vmatpush1.bf16.msra.mxu0 0
        %3779 = vmatprep.subr.bf16.mxu0 0
        %3780 = vmatpush1.bf16.msra.mxu0 0
        %3781 = vmatprep.subr.bf16.mxu0 0
        %3782 = vmatpush1.bf16.msra.mxu0 0
        %3783 = vmatprep.mubr.bf16.mxu0 0
        %3784 = vmatmul.mubr.bf16.gmra.mrb[0].mxu0 %v2862
        %v3785 = vpop.f32.mrb[0].mxu0
        %v3786 = vadd.f32 %v3737, %v3785
        %v3787 = vpop.f32.mrb[0].mxu0
        %v3788 = vpop.f32.mrb[0].mxu0
        %v3789 = vadd.f32 %v3737, %v3788
        %v3790 = vpop.f32.mrb[0].mxu0
        %3791 = vmatprep.mubr.bf16.mxu0 0
        %3792 = vmatmul.mubr.bf16.gmra.mrb[0].mxu0 %v2865
        %v3793 = vpop.f32.mrb[0].mxu0
        %v3794 = vadd.f32 %v3737, %v3793
        %v3795 = vpop.f32.mrb[0].mxu0
        %v3796 = vpop.f32.mrb[0].mxu0
        %v3797 = vpop.f32.mrb[0].mxu0
        %3798 = vdwg.mxu0
        %s3799 = scalar_lea.vmem %s7, 96
        %v3800 = vld [vmem:[%s3799] sm:$0xf]
        %v3801 = vld [vmem:[%s3799 + $0x4] sm:$0xf]
        %v3802 = vld [vmem:[%s3799 + $0x8] sm:$0xf]
        %v3803 = vld [vmem:[%s3799 + $0xc] sm:$0xf]
        %s3804 = scalar_lea.vmem %s8, 6
        %v3805 = vld [vmem:[%s3804] sm:$0x1]
        %v3807 = vlaneseq
        %v3808 = vshrl.u32 %v3807, 7
        %v3809 = vsub.s32 0, %v3808
        %v3810 = vrot.slane %v3805, %v3809
        %v3816 = vunpack.c.l.b16 %v3800
        %v3817 = vunpack.c.l.b16 %v3801
        %v3818 = vunpack.c.l.b16 %v3802
        %v3819 = vunpack.c.l.b16 %v3803
        %v3820 = vpack.c.b16 %v3817, %v3816
        %v3821 = vpack.c.b16 %v3819, %v3818
        %3824 = vmatprep.subr.bf16.mxu0 0
        %3825 = vmatpush1.bf16.msra.mxu0 %v3820
        %3826 = vmatprep.subr.bf16.mxu0 0
        %3827 = vmatpush1.bf16.msra.mxu0 %v3821
        %3828 = vmatprep.subr.bf16.mxu0 0
        %3829 = vmatpush1.bf16.msra.mxu0 0
        %3830 = vmatprep.subr.bf16.mxu0 0
        %3831 = vmatpush1.bf16.msra.mxu0 0
        %3832 = vmatprep.subr.bf16.mxu0 0
        %3833 = vmatpush1.bf16.msra.mxu0 0
        %3834 = vmatprep.subr.bf16.mxu0 0
        %3835 = vmatpush1.bf16.msra.mxu0 0
        %3836 = vmatprep.subr.bf16.mxu0 0
        %3837 = vmatpush1.bf16.msra.mxu0 0
        %3838 = vmatprep.subr.bf16.mxu0 0
        %3839 = vmatpush1.bf16.msra.mxu0 0
        %3840 = vmatprep.subr.bf16.mxu0 0
        %3841 = vmatpush1.bf16.msra.mxu0 0
        %3842 = vmatprep.subr.bf16.mxu0 0
        %3843 = vmatpush1.bf16.msra.mxu0 0
        %3844 = vmatprep.subr.bf16.mxu0 0
        %3845 = vmatpush1.bf16.msra.mxu0 0
        %3846 = vmatprep.subr.bf16.mxu0 0
        %3847 = vmatpush1.bf16.msra.mxu0 0
        %3848 = vmatprep.subr.bf16.mxu0 0
        %3849 = vmatpush1.bf16.msra.mxu0 0
        %3850 = vmatprep.subr.bf16.mxu0 0
        %3851 = vmatpush1.bf16.msra.mxu0 0
        %3852 = vmatprep.subr.bf16.mxu0 0
        %3853 = vmatpush1.bf16.msra.mxu0 0
        %3854 = vmatprep.subr.bf16.mxu0 0
        %3855 = vmatpush1.bf16.msra.mxu0 0
        %3856 = vmatprep.mubr.bf16.mxu0 0
        %3857 = vmatmul.mubr.bf16.gmra.mrb[0].mxu0 %v2862
        %v3858 = vpop.f32.mrb[0].mxu0
        %v3859 = vadd.f32 %v3810, %v3858
        %v3860 = vpop.f32.mrb[0].mxu0
        %v3861 = vpop.f32.mrb[0].mxu0
        %v3862 = vadd.f32 %v3810, %v3861
        %v3863 = vpop.f32.mrb[0].mxu0
        %3864 = vmatprep.mubr.bf16.mxu0 0
        %3865 = vmatmul.mubr.bf16.gmra.mrb[0].mxu0 %v2865
        %v3866 = vpop.f32.mrb[0].mxu0
        %v3867 = vadd.f32 %v3810, %v3866
        %v3868 = vpop.f32.mrb[0].mxu0
        %v3869 = vpop.f32.mrb[0].mxu0
        %v3870 = vpop.f32.mrb[0].mxu0
        %3871 = vdwg.mxu0
        %s3872 = scalar_lea.vmem %s9, 96
        %v3873 = vld [vmem:[%s3872] sm:$0xf]
        %v3874 = vld [vmem:[%s3872 + $0x4] sm:$0xf]
        %v3875 = vld [vmem:[%s3872 + $0x8] sm:$0xf]
        %v3876 = vld [vmem:[%s3872 + $0xc] sm:$0xf]
        %s3877 = scalar_lea.vmem %s10, 6
        %v3878 = vld [vmem:[%s3877] sm:$0x1]
        %v3880 = vlaneseq
        %v3881 = vshrl.u32 %v3880, 7
        %v3882 = vsub.s32 0, %v3881
        %v3883 = vrot.slane %v3878, %v3882
        %v3889 = vunpack.c.l.b16 %v3873
        %v3890 = vunpack.c.l.b16 %v3874
        %v3891 = vunpack.c.l.b16 %v3875
        %v3892 = vunpack.c.l.b16 %v3876
        %v3893 = vpack.c.b16 %v3890, %v3889
        %v3894 = vpack.c.b16 %v3892, %v3891
        %3897 = vmatprep.subr.bf16.mxu0 0
        %3898 = vmatpush1.bf16.msra.mxu0 %v3893
        %3899 = vmatprep.subr.bf16.mxu0 0
        %3900 = vmatpush1.bf16.msra.mxu0 %v3894
        %3901 = vmatprep.subr.bf16.mxu0 0
        %3902 = vmatpush1.bf16.msra.mxu0 0
        %3903 = vmatprep.subr.bf16.mxu0 0
        %3904 = vmatpush1.bf16.msra.mxu0 0
        %3905 = vmatprep.subr.bf16.mxu0 0
        %3906 = vmatpush1.bf16.msra.mxu0 0
        %3907 = vmatprep.subr.bf16.mxu0 0
        %3908 = vmatpush1.bf16.msra.mxu0 0
        %3909 = vmatprep.subr.bf16.mxu0 0
        %3910 = vmatpush1.bf16.msra.mxu0 0
        %3911 = vmatprep.subr.bf16.mxu0 0
        %3912 = vmatpush1.bf16.msra.mxu0 0
        %3913 = vmatprep.subr.bf16.mxu0 0
        %3914 = vmatpush1.bf16.msra.mxu0 0
        %3915 = vmatprep.subr.bf16.mxu0 0
        %3916 = vmatpush1.bf16.msra.mxu0 0
        %3917 = vmatprep.subr.bf16.mxu0 0
        %3918 = vmatpush1.bf16.msra.mxu0 0
        %3919 = vmatprep.subr.bf16.mxu0 0
        %3920 = vmatpush1.bf16.msra.mxu0 0
        %3921 = vmatprep.subr.bf16.mxu0 0
        %3922 = vmatpush1.bf16.msra.mxu0 0
        %3923 = vmatprep.subr.bf16.mxu0 0
        %3924 = vmatpush1.bf16.msra.mxu0 0
        %3925 = vmatprep.subr.bf16.mxu0 0
        %3926 = vmatpush1.bf16.msra.mxu0 0
        %3927 = vmatprep.subr.bf16.mxu0 0
        %3928 = vmatpush1.bf16.msra.mxu0 0
        %3929 = vmatprep.mubr.bf16.mxu0 0
        %3930 = vmatmul.mubr.bf16.gmra.mrb[0].mxu0 %v2862
        %v3931 = vpop.f32.mrb[0].mxu0
        %v3932 = vadd.f32 %v3883, %v3931
        %v3933 = vpop.f32.mrb[0].mxu0
        %v3934 = vpop.f32.mrb[0].mxu0
        %v3935 = vadd.f32 %v3883, %v3934
        %v3936 = vpop.f32.mrb[0].mxu0
        %3937 = vmatprep.mubr.bf16.mxu0 0
        %3938 = vmatmul.mubr.bf16.gmra.mrb[0].mxu0 %v2865
        %v3939 = vpop.f32.mrb[0].mxu0
        %v3940 = vadd.f32 %v3883, %v3939
        %v3941 = vpop.f32.mrb[0].mxu0
        %v3942 = vpop.f32.mrb[0].mxu0
        %v3943 = vpop.f32.mrb[0].mxu0
        %3944 = vdwg.mxu0
        %v3945 = vpack.c.bf16 %v3789, %v3786
        %v3946 = vpack.c.bf16 %v3794, %v3794
        %v3947 = vpack.c.bf16 %v3862, %v3859
        %v3948 = vpack.c.bf16 %v3867, %v3867
        %v3950 = vsel %vm940, %v3945, 0
        %v3953 = vsel %vm940, %v3946, 0
        %v3956 = vsel %vm940, %v3947, 0
        %v3959 = vsel %vm940, %v3948, 0
        %3961 = vmatprep.subr.bf16.mxu0 0
        %3962 = vmatpush1.bf16.xpose.msra.mxu0 %v3956
        %3963 = vmatprep.subr.bf16.mxu0 0
        %3964 = vmatpush1.bf16.xpose.msra.mxu0 %v3959
        %3965 = vmatprep.subr.bf16.mxu0 0
        %3966 = vmatpush1.bf16.xpose.msra.mxu0 0
        %3967 = vmatprep.subr.bf16.mxu0 0
        %3968 = vmatpush1.bf16.xpose.msra.mxu0 0
        %3969 = vmatprep.subr.bf16.mxu0 0
        %3970 = vmatpush1.bf16.xpose.msra.mxu0 0
        %3971 = vmatprep.subr.bf16.mxu0 0
        %3972 = vmatpush1.bf16.xpose.msra.mxu0 0
        %3973 = vmatprep.subr.bf16.mxu0 0
        %3974 = vmatpush1.bf16.xpose.msra.mxu0 0
        %3975 = vmatprep.subr.bf16.mxu0 0
        %3976 = vmatpush1.bf16.xpose.msra.mxu0 0
        %3977 = vmatprep.subr.bf16.mxu0 0
        %3978 = vmatpush1.bf16.xpose.msra.mxu0 0
        %3979 = vmatprep.subr.bf16.mxu0 0
        %3980 = vmatpush1.bf16.xpose.msra.mxu0 0
        %3981 = vmatprep.subr.bf16.mxu0 0
        %3982 = vmatpush1.bf16.xpose.msra.mxu0 0
        %3983 = vmatprep.subr.bf16.mxu0 0
        %3984 = vmatpush1.bf16.xpose.msra.mxu0 0
        %3985 = vmatprep.subr.bf16.mxu0 0
        %3986 = vmatpush1.bf16.xpose.msra.mxu0 0
        %3987 = vmatprep.subr.bf16.mxu0 0
        %3988 = vmatpush1.bf16.xpose.msra.mxu0 0
        %3989 = vmatprep.subr.bf16.mxu0 0
        %3990 = vmatpush1.bf16.xpose.msra.mxu0 0
        %3991 = vmatprep.subr.bf16.mxu0 0
        %3992 = vmatpush1.bf16.xpose.msra.mxu0 0
        %3993 = vmatprep.mubr.bf16.mxu0 0
        %3994 = vmatmul.mubr.bf16.gmra.mrb[0].mxu0 %v3950
        %v3995 = vpop.f32.mrb[0].mxu0
        %v3996 = vadd.f32 0.0, %v3995
        %v3997 = vpop.f32.mrb[0].mxu0
        %v3998 = vpop.f32.mrb[0].mxu0
        %v3999 = vadd.f32 0.0, %v3998
        %v4000 = vpop.f32.mrb[0].mxu0
        %4001 = vmatprep.mubr.bf16.mxu0 0
        %4002 = vmatmul.mubr.bf16.gmra.mrb[0].mxu0 %v3953
        %v4003 = vpop.f32.mrb[0].mxu0
        %v4004 = vadd.f32 0.0, %v4003
        %v4005 = vpop.f32.mrb[0].mxu0
        %v4006 = vpop.f32.mrb[0].mxu0
        %v4007 = vpop.f32.mrb[0].mxu0
        %4008 = vdwg.mxu0
        %v4009 = vmul.f32 %v3996, 0.35355338
        %v4010 = vmul.f32 %v3999, 0.35355338
        %v4011 = vmul.f32 %v4004, 0.35355338
        %v4012 = vsel %vm1004, %v4009, -inf
        %4013 = vmax.xlane.f32.xlu0 %v4012
        %v4014 = vpop.xlane.xlu0 %4013
        %v4015 = vsel %vm1004, %v4010, -inf
        %4016 = vmax.xlane.f32.xlu0 %v4015
        %v4017 = vpop.xlane.xlu0 %4016
        %v4018 = vsel %vm1011, %v4011, -inf
        %4019 = vmax.xlane.f32.xlu0 %v4018
        %v4020 = vpop.xlane.xlu0 %4019
        %v4021 = vsub.f32 %v4009, %v4014
        %v4022 = vsub.f32 %v4010, %v4017
        %v4023 = vsub.f32 %v4011, %v4020
        %v4024 = vmul.f32 %v4021, 1.442695
        %v4025 = vpow.pop %v4024
        %v4026 = vmul.f32 %v4022, 1.442695
        %v4027 = vpow.pop %v4026
        %v4028 = vmul.f32 %v4023, 1.442695
        %v4029 = vpow.pop %v4028
        %v4030 = vsel %vm1004, %v4025, 0.0
        %4031 = vadd.xlane.f32.xlu0 %v4030
        %v4032 = vpop.xlane.xlu0 %4031
        %v4033 = vsel %vm1004, %v4027, 0.0
        %4034 = vadd.xlane.f32.xlu0 %v4033
        %v4035 = vpop.xlane.xlu0 %4034
        %v4036 = vsel %vm1011, %v4029, 0.0
        %4037 = vadd.xlane.f32.xlu0 %v4036
        %v4038 = vpop.xlane.xlu0 %4037
        %v4039 = vrcp.pop %v4032
        %v4040 = vmul.f32 %v4025, %v4039
        %v4041 = vrcp.pop %v4035
        %v4042 = vmul.f32 %v4027, %v4041
        %v4043 = vrcp.pop %v4038
        %v4044 = vmul.f32 %v4029, %v4043
        %v4045 = vpack.c.bf16 %v4042, %v4040
        %v4046 = vpack.c.bf16 %v4044, %v4044
        %v4047 = vpack.c.bf16 %v3935, %v3932
        %v4048 = vpack.c.bf16 %v3940, %v3940
        %v4050 = vsel %vm1004, %v4045, 0
        %v4053 = vsel %vm1004, %v4046, 0
        %v4056 = vand.u32 %v4048, %v1051
        %4058 = vmatprep.subr.bf16.mxu0 0
        %4059 = vmatpush1.bf16.msra.mxu0 %v4047
        %4060 = vmatprep.subr.bf16.mxu0 0
        %4061 = vmatpush1.bf16.msra.mxu0 %v4056
        %4062 = vmatprep.subr.bf16.mxu0 0
        %4063 = vmatpush1.bf16.msra.mxu0 0
        %4064 = vmatprep.subr.bf16.mxu0 0
        %4065 = vmatpush1.bf16.msra.mxu0 0
        %4066 = vmatprep.subr.bf16.mxu0 0
        %4067 = vmatpush1.bf16.msra.mxu0 0
        %4068 = vmatprep.subr.bf16.mxu0 0
        %4069 = vmatpush1.bf16.msra.mxu0 0
        %4070 = vmatprep.subr.bf16.mxu0 0
        %4071 = vmatpush1.bf16.msra.mxu0 0
        %4072 = vmatprep.subr.bf16.mxu0 0
        %4073 = vmatpush1.bf16.msra.mxu0 0
        %4074 = vmatprep.subr.bf16.mxu0 0
        %4075 = vmatpush1.bf16.msra.mxu0 0
        %4076 = vmatprep.subr.bf16.mxu0 0
        %4077 = vmatpush1.bf16.msra.mxu0 0
        %4078 = vmatprep.subr.bf16.mxu0 0
        %4079 = vmatpush1.bf16.msra.mxu0 0
        %4080 = vmatprep.subr.bf16.mxu0 0
        %4081 = vmatpush1.bf16.msra.mxu0 0
        %4082 = vmatprep.subr.bf16.mxu0 0
        %4083 = vmatpush1.bf16.msra.mxu0 0
        %4084 = vmatprep.subr.bf16.mxu0 0
        %4085 = vmatpush1.bf16.msra.mxu0 0
        %4086 = vmatprep.subr.bf16.mxu0 0
        %4087 = vmatpush1.bf16.msra.mxu0 0
        %4088 = vmatprep.subr.bf16.mxu0 0
        %4089 = vmatpush1.bf16.msra.mxu0 0
        %4090 = vmatprep.mubr.bf16.mxu0 0
        %4091 = vmatmul.mubr.bf16.gmra.mrb[0].mxu0 %v4050
        %v4092 = vpop.f32.mrb[0].mxu0
        %v4093 = vadd.f32 0.0, %v4092
        %v4094 = vpop.f32.mrb[0].mxu0
        %v4095 = vpop.f32.mrb[0].mxu0
        %v4096 = vadd.f32 0.0, %v4095
        %v4097 = vpop.f32.mrb[0].mxu0
        %4098 = vmatprep.mubr.bf16.mxu0 0
        %4099 = vmatmul.mubr.bf16.gmra.mrb[0].mxu0 %v4053
        %v4100 = vpop.f32.mrb[0].mxu0
        %v4101 = vadd.f32 0.0, %v4100
        %v4102 = vpop.f32.mrb[0].mxu0
        %v4103 = vpop.f32.mrb[0].mxu0
        %v4104 = vpop.f32.mrb[0].mxu0
        %4105 = vdwg.mxu0
        %s4106 = scalar_lea.vmem %s11, 24
        %v4107 = vld [vmem:[%s4106] sm:$0xf]
        %v4108 = vpack.c.bf16 %v4096, %v4093
        %v4109 = vpack.c.bf16 %v4101, %v4101
        %v4111 = vsel %vm940, %v4108, 0
        %v4114 = vsel %vm940, %v4109, 0
        %v4117 = vsel %vm1496, %v4107, 0
        %4119 = vmatprep.subr.bf16.mxu0 0
        %4120 = vmatpush1.bf16.msra.mxu0 %v4117
        %4121 = vmatprep.subr.bf16.mxu0 0
        %4122 = vmatpush1.bf16.msra.mxu0 0
        %4123 = vmatprep.subr.bf16.mxu0 0
        %4124 = vmatpush1.bf16.msra.mxu0 0
        %4125 = vmatprep.subr.bf16.mxu0 0
        %4126 = vmatpush1.bf16.msra.mxu0 0
        %4127 = vmatprep.subr.bf16.mxu0 0
        %4128 = vmatpush1.bf16.msra.mxu0 0
        %4129 = vmatprep.subr.bf16.mxu0 0
        %4130 = vmatpush1.bf16.msra.mxu0 0
        %4131 = vmatprep.subr.bf16.mxu0 0
        %4132 = vmatpush1.bf16.msra.mxu0 0
        %4133 = vmatprep.subr.bf16.mxu0 0
        %4134 = vmatpush1.bf16.msra.mxu0 0
        %4135 = vmatprep.subr.bf16.mxu0 0
        %4136 = vmatpush1.bf16.msra.mxu0 0
        %4137 = vmatprep.subr.bf16.mxu0 0
        %4138 = vmatpush1.bf16.msra.mxu0 0
        %4139 = vmatprep.subr.bf16.mxu0 0
        %4140 = vmatpush1.bf16.msra.mxu0 0
        %4141 = vmatprep.subr.bf16.mxu0 0
        %4142 = vmatpush1.bf16.msra.mxu0 0
        %4143 = vmatprep.subr.bf16.mxu0 0
        %4144 = vmatpush1.bf16.msra.mxu0 0
        %4145 = vmatprep.subr.bf16.mxu0 0
        %4146 = vmatpush1.bf16.msra.mxu0 0
        %4147 = vmatprep.subr.bf16.mxu0 0
        %4148 = vmatpush1.bf16.msra.mxu0 0
        %4149 = vmatprep.subr.bf16.mxu0 0
        %4150 = vmatpush1.bf16.msra.mxu0 0
        %4151 = vmatprep.mubr.bf16.mxu0 0
        %4152 = vmatmul.mubr.bf16.gmra.mrb[0].mxu0 %v4111
        %v4153 = vpop.f32.mrb[0].mxu0
        %v4154 = vadd.f32 0.0, %v4153
        %v4155 = vpop.f32.mrb[0].mxu0
        %v4156 = vpop.f32.mrb[0].mxu0
        %v4157 = vadd.f32 0.0, %v4156
        %v4158 = vpop.f32.mrb[0].mxu0
        %4159 = vmatprep.mubr.bf16.mxu0 0
        %4160 = vmatmul.mubr.bf16.gmra.mrb[0].mxu0 %v4114
        %v4161 = vpop.f32.mrb[0].mxu0
        %v4162 = vadd.f32 0.0, %v4161
        %v4163 = vpop.f32.mrb[0].mxu0
        %v4164 = vpop.f32.mrb[0].mxu0
        %v4165 = vpop.f32.mrb[0].mxu0
        %4166 = vdwg.mxu0
        %v4167 = vadd.f32 %v3712, %v4154
        %v4168 = vadd.f32 %v3715, %v4157
        %v4169 = vadd.f32 %v3720, %v4162
        %v4170 = vadd.f32 %v3725, %v4040
        %s4171 = scalar_lea.vmem %s5, 112
        %v4172 = vld [vmem:[%s4171] sm:$0xf]
        %v4173 = vld [vmem:[%s4171 + $0x4] sm:$0xf]
        %v4174 = vld [vmem:[%s4171 + $0x8] sm:$0xf]
        %v4175 = vld [vmem:[%s4171 + $0xc] sm:$0xf]
        %s4176 = scalar_lea.vmem %s6, 7
        %v4177 = vld [vmem:[%s4176] sm:$0x1]
        %v4179 = vlaneseq
        %v4180 = vshrl.u32 %v4179, 7
        %v4181 = vsub.s32 0, %v4180
        %v4182 = vrot.slane %v4177, %v4181
        %v4188 = vunpack.c.l.b16 %v4172
        %v4189 = vunpack.c.l.b16 %v4173
        %v4190 = vunpack.c.l.b16 %v4174
        %v4191 = vunpack.c.l.b16 %v4175
        %v4192 = vpack.c.b16 %v4189, %v4188
        %v4193 = vpack.c.b16 %v4191, %v4190
        %4196 = vmatprep.subr.bf16.mxu0 0
        %4197 = vmatpush1.bf16.msra.mxu0 %v4192
        %4198 = vmatprep.subr.bf16.mxu0 0
        %4199 = vmatpush1.bf16.msra.mxu0 %v4193
        %4200 = vmatprep.subr.bf16.mxu0 0
        %4201 = vmatpush1.bf16.msra.mxu0 0
        %4202 = vmatprep.subr.bf16.mxu0 0
        %4203 = vmatpush1.bf16.msra.mxu0 0
        %4204 = vmatprep.subr.bf16.mxu0 0
        %4205 = vmatpush1.bf16.msra.mxu0 0
        %4206 = vmatprep.subr.bf16.mxu0 0
        %4207 = vmatpush1.bf16.msra.mxu0 0
        %4208 = vmatprep.subr.bf16.mxu0 0
        %4209 = vmatpush1.bf16.msra.mxu0 0
        %4210 = vmatprep.subr.bf16.mxu0 0
        %4211 = vmatpush1.bf16.msra.mxu0 0
        %4212 = vmatprep.subr.bf16.mxu0 0
        %4213 = vmatpush1.bf16.msra.mxu0 0
        %4214 = vmatprep.subr.bf16.mxu0 0
        %4215 = vmatpush1.bf16.msra.mxu0 0
        %4216 = vmatprep.subr.bf16.mxu0 0
        %4217 = vmatpush1.bf16.msra.mxu0 0
        %4218 = vmatprep.subr.bf16.mxu0 0
        %4219 = vmatpush1.bf16.msra.mxu0 0
        %4220 = vmatprep.subr.bf16.mxu0 0
        %4221 = vmatpush1.bf16.msra.mxu0 0
        %4222 = vmatprep.subr.bf16.mxu0 0
        %4223 = vmatpush1.bf16.msra.mxu0 0
        %4224 = vmatprep.subr.bf16.mxu0 0
        %4225 = vmatpush1.bf16.msra.mxu0 0
        %4226 = vmatprep.subr.bf16.mxu0 0
        %4227 = vmatpush1.bf16.msra.mxu0 0
        %4228 = vmatprep.mubr.bf16.mxu0 0
        %4229 = vmatmul.mubr.bf16.gmra.mrb[0].mxu0 %v2862
        %v4230 = vpop.f32.mrb[0].mxu0
        %v4231 = vadd.f32 %v4182, %v4230
        %v4232 = vpop.f32.mrb[0].mxu0
        %v4233 = vpop.f32.mrb[0].mxu0
        %v4234 = vadd.f32 %v4182, %v4233
        %v4235 = vpop.f32.mrb[0].mxu0
        %4236 = vmatprep.mubr.bf16.mxu0 0
        %4237 = vmatmul.mubr.bf16.gmra.mrb[0].mxu0 %v2865
        %v4238 = vpop.f32.mrb[0].mxu0
        %v4239 = vadd.f32 %v4182, %v4238
        %v4240 = vpop.f32.mrb[0].mxu0
        %v4241 = vpop.f32.mrb[0].mxu0
        %v4242 = vpop.f32.mrb[0].mxu0
        %4243 = vdwg.mxu0
        %s4244 = scalar_lea.vmem %s7, 112
        %v4245 = vld [vmem:[%s4244] sm:$0xf]
        %v4246 = vld [vmem:[%s4244 + $0x4] sm:$0xf]
        %v4247 = vld [vmem:[%s4244 + $0x8] sm:$0xf]
        %v4248 = vld [vmem:[%s4244 + $0xc] sm:$0xf]
        %s4249 = scalar_lea.vmem %s8, 7
        %v4250 = vld [vmem:[%s4249] sm:$0x1]
        %v4252 = vlaneseq
        %v4253 = vshrl.u32 %v4252, 7
        %v4254 = vsub.s32 0, %v4253
        %v4255 = vrot.slane %v4250, %v4254
        %v4261 = vunpack.c.l.b16 %v4245
        %v4262 = vunpack.c.l.b16 %v4246
        %v4263 = vunpack.c.l.b16 %v4247
        %v4264 = vunpack.c.l.b16 %v4248
        %v4265 = vpack.c.b16 %v4262, %v4261
        %v4266 = vpack.c.b16 %v4264, %v4263
        %4269 = vmatprep.subr.bf16.mxu0 0
        %4270 = vmatpush1.bf16.msra.mxu0 %v4265
        %4271 = vmatprep.subr.bf16.mxu0 0
        %4272 = vmatpush1.bf16.msra.mxu0 %v4266
        %4273 = vmatprep.subr.bf16.mxu0 0
        %4274 = vmatpush1.bf16.msra.mxu0 0
        %4275 = vmatprep.subr.bf16.mxu0 0
        %4276 = vmatpush1.bf16.msra.mxu0 0
        %4277 = vmatprep.subr.bf16.mxu0 0
        %4278 = vmatpush1.bf16.msra.mxu0 0
        %4279 = vmatprep.subr.bf16.mxu0 0
        %4280 = vmatpush1.bf16.msra.mxu0 0
        %4281 = vmatprep.subr.bf16.mxu0 0
        %4282 = vmatpush1.bf16.msra.mxu0 0
        %4283 = vmatprep.subr.bf16.mxu0 0
        %4284 = vmatpush1.bf16.msra.mxu0 0
        %4285 = vmatprep.subr.bf16.mxu0 0
        %4286 = vmatpush1.bf16.msra.mxu0 0
        %4287 = vmatprep.subr.bf16.mxu0 0
        %4288 = vmatpush1.bf16.msra.mxu0 0
        %4289 = vmatprep.subr.bf16.mxu0 0
        %4290 = vmatpush1.bf16.msra.mxu0 0
        %4291 = vmatprep.subr.bf16.mxu0 0
        %4292 = vmatpush1.bf16.msra.mxu0 0
        %4293 = vmatprep.subr.bf16.mxu0 0
        %4294 = vmatpush1.bf16.msra.mxu0 0
        %4295 = vmatprep.subr.bf16.mxu0 0
        %4296 = vmatpush1.bf16.msra.mxu0 0
        %4297 = vmatprep.subr.bf16.mxu0 0
        %4298 = vmatpush1.bf16.msra.mxu0 0
        %4299 = vmatprep.subr.bf16.mxu0 0
        %4300 = vmatpush1.bf16.msra.mxu0 0
        %4301 = vmatprep.mubr.bf16.mxu0 0
        %4302 = vmatmul.mubr.bf16.gmra.mrb[0].mxu0 %v2862
        %v4303 = vpop.f32.mrb[0].mxu0
        %v4304 = vadd.f32 %v4255, %v4303
        %v4305 = vpop.f32.mrb[0].mxu0
        %v4306 = vpop.f32.mrb[0].mxu0
        %v4307 = vadd.f32 %v4255, %v4306
        %v4308 = vpop.f32.mrb[0].mxu0
        %4309 = vmatprep.mubr.bf16.mxu0 0
        %4310 = vmatmul.mubr.bf16.gmra.mrb[0].mxu0 %v2865
        %v4311 = vpop.f32.mrb[0].mxu0
        %v4312 = vadd.f32 %v4255, %v4311
        %v4313 = vpop.f32.mrb[0].mxu0
        %v4314 = vpop.f32.mrb[0].mxu0
        %v4315 = vpop.f32.mrb[0].mxu0
        %4316 = vdwg.mxu0
        %s4317 = scalar_lea.vmem %s9, 112
        %v4318 = vld [vmem:[%s4317] sm:$0xf]
        %v4319 = vld [vmem:[%s4317 + $0x4] sm:$0xf]
        %v4320 = vld [vmem:[%s4317 + $0x8] sm:$0xf]
        %v4321 = vld [vmem:[%s4317 + $0xc] sm:$0xf]
        %s4322 = scalar_lea.vmem %s10, 7
        %v4323 = vld [vmem:[%s4322] sm:$0x1]
        %v4325 = vlaneseq
        %v4326 = vshrl.u32 %v4325, 7
        %v4327 = vsub.s32 0, %v4326
        %v4328 = vrot.slane %v4323, %v4327
        %v4334 = vunpack.c.l.b16 %v4318
        %v4335 = vunpack.c.l.b16 %v4319
        %v4336 = vunpack.c.l.b16 %v4320
        %v4337 = vunpack.c.l.b16 %v4321
        %v4338 = vpack.c.b16 %v4335, %v4334
        %v4339 = vpack.c.b16 %v4337, %v4336
        %4342 = vmatprep.subr.bf16.mxu0 0
        %4343 = vmatpush1.bf16.msra.mxu0 %v4338
        %4344 = vmatprep.subr.bf16.mxu0 0
        %4345 = vmatpush1.bf16.msra.mxu0 %v4339
        %4346 = vmatprep.subr.bf16.mxu0 0
        %4347 = vmatpush1.bf16.msra.mxu0 0
        %4348 = vmatprep.subr.bf16.mxu0 0
        %4349 = vmatpush1.bf16.msra.mxu0 0
        %4350 = vmatprep.subr.bf16.mxu0 0
        %4351 = vmatpush1.bf16.msra.mxu0 0
        %4352 = vmatprep.subr.bf16.mxu0 0
        %4353 = vmatpush1.bf16.msra.mxu0 0
        %4354 = vmatprep.subr.bf16.mxu0 0
        %4355 = vmatpush1.bf16.msra.mxu0 0
        %4356 = vmatprep.subr.bf16.mxu0 0
        %4357 = vmatpush1.bf16.msra.mxu0 0
        %4358 = vmatprep.subr.bf16.mxu0 0
        %4359 = vmatpush1.bf16.msra.mxu0 0
        %4360 = vmatprep.subr.bf16.mxu0 0
        %4361 = vmatpush1.bf16.msra.mxu0 0
        %4362 = vmatprep.subr.bf16.mxu0 0
        %4363 = vmatpush1.bf16.msra.mxu0 0
        %4364 = vmatprep.subr.bf16.mxu0 0
        %4365 = vmatpush1.bf16.msra.mxu0 0
        %4366 = vmatprep.subr.bf16.mxu0 0
        %4367 = vmatpush1.bf16.msra.mxu0 0
        %4368 = vmatprep.subr.bf16.mxu0 0
        %4369 = vmatpush1.bf16.msra.mxu0 0
        %4370 = vmatprep.subr.bf16.mxu0 0
        %4371 = vmatpush1.bf16.msra.mxu0 0
        %4372 = vmatprep.subr.bf16.mxu0 0
        %4373 = vmatpush1.bf16.msra.mxu0 0
        %4374 = vmatprep.mubr.bf16.mxu0 0
        %4375 = vmatmul.mubr.bf16.gmra.mrb[0].mxu0 %v2862
        %v4376 = vpop.f32.mrb[0].mxu0
        %v4377 = vadd.f32 %v4328, %v4376
        %v4378 = vpop.f32.mrb[0].mxu0
        %v4379 = vpop.f32.mrb[0].mxu0
        %v4380 = vadd.f32 %v4328, %v4379
        %v4381 = vpop.f32.mrb[0].mxu0
        %4382 = vmatprep.mubr.bf16.mxu0 0
        %4383 = vmatmul.mubr.bf16.gmra.mrb[0].mxu0 %v2865
        %v4384 = vpop.f32.mrb[0].mxu0
        %v4385 = vadd.f32 %v4328, %v4384
        %v4386 = vpop.f32.mrb[0].mxu0
        %v4387 = vpop.f32.mrb[0].mxu0
        %v4388 = vpop.f32.mrb[0].mxu0
        %4389 = vdwg.mxu0
        %v4390 = vpack.c.bf16 %v4234, %v4231
        %v4391 = vpack.c.bf16 %v4239, %v4239
        %v4392 = vpack.c.bf16 %v4307, %v4304
        %v4393 = vpack.c.bf16 %v4312, %v4312
        %v4395 = vsel %vm940, %v4390, 0
        %v4398 = vsel %vm940, %v4391, 0
        %v4401 = vsel %vm940, %v4392, 0
        %v4404 = vsel %vm940, %v4393, 0
        %4406 = vmatprep.subr.bf16.mxu0 0
        %4407 = vmatpush1.bf16.xpose.msra.mxu0 %v4401
        %4408 = vmatprep.subr.bf16.mxu0 0
        %4409 = vmatpush1.bf16.xpose.msra.mxu0 %v4404
        %4410 = vmatprep.subr.bf16.mxu0 0
        %4411 = vmatpush1.bf16.xpose.msra.mxu0 0
        %4412 = vmatprep.subr.bf16.mxu0 0
        %4413 = vmatpush1.bf16.xpose.msra.mxu0 0
        %4414 = vmatprep.subr.bf16.mxu0 0
        %4415 = vmatpush1.bf16.xpose.msra.mxu0 0
        %4416 = vmatprep.subr.bf16.mxu0 0
        %4417 = vmatpush1.bf16.xpose.msra.mxu0 0
        %4418 = vmatprep.subr.bf16.mxu0 0
        %4419 = vmatpush1.bf16.xpose.msra.mxu0 0
        %4420 = vmatprep.subr.bf16.mxu0 0
        %4421 = vmatpush1.bf16.xpose.msra.mxu0 0
        %4422 = vmatprep.subr.bf16.mxu0 0
        %4423 = vmatpush1.bf16.xpose.msra.mxu0 0
        %4424 = vmatprep.subr.bf16.mxu0 0
        %4425 = vmatpush1.bf16.xpose.msra.mxu0 0
        %4426 = vmatprep.subr.bf16.mxu0 0
        %4427 = vmatpush1.bf16.xpose.msra.mxu0 0
        %4428 = vmatprep.subr.bf16.mxu0 0
        %4429 = vmatpush1.bf16.xpose.msra.mxu0 0
        %4430 = vmatprep.subr.bf16.mxu0 0
        %4431 = vmatpush1.bf16.xpose.msra.mxu0 0
        %4432 = vmatprep.subr.bf16.mxu0 0
        %4433 = vmatpush1.bf16.xpose.msra.mxu0 0
        %4434 = vmatprep.subr.bf16.mxu0 0
        %4435 = vmatpush1.bf16.xpose.msra.mxu0 0
        %4436 = vmatprep.subr.bf16.mxu0 0
        %4437 = vmatpush1.bf16.xpose.msra.mxu0 0
        %4438 = vmatprep.mubr.bf16.mxu0 0
        %4439 = vmatmul.mubr.bf16.gmra.mrb[0].mxu0 %v4395
        %v4440 = vpop.f32.mrb[0].mxu0
        %v4441 = vadd.f32 0.0, %v4440
        %v4442 = vpop.f32.mrb[0].mxu0
        %v4443 = vpop.f32.mrb[0].mxu0
        %v4444 = vadd.f32 0.0, %v4443
        %v4445 = vpop.f32.mrb[0].mxu0
        %4446 = vmatprep.mubr.bf16.mxu0 0
        %4447 = vmatmul.mubr.bf16.gmra.mrb[0].mxu0 %v4398
        %v4448 = vpop.f32.mrb[0].mxu0
        %v4449 = vadd.f32 0.0, %v4448
        %v4450 = vpop.f32.mrb[0].mxu0
        %v4451 = vpop.f32.mrb[0].mxu0
        %v4452 = vpop.f32.mrb[0].mxu0
        %4453 = vdwg.mxu0
        %v4454 = vmul.f32 %v4441, 0.35355338
        %v4455 = vmul.f32 %v4444, 0.35355338
        %v4456 = vmul.f32 %v4449, 0.35355338
        %v4457 = vsel %vm1004, %v4454, -inf
        %4458 = vmax.xlane.f32.xlu0 %v4457
        %v4459 = vpop.xlane.xlu0 %4458
        %v4460 = vsel %vm1004, %v4455, -inf
        %4461 = vmax.xlane.f32.xlu0 %v4460
        %v4462 = vpop.xlane.xlu0 %4461
        %v4463 = vsel %vm1011, %v4456, -inf
        %4464 = vmax.xlane.f32.xlu0 %v4463
        %v4465 = vpop.xlane.xlu0 %4464
        %v4466 = vsub.f32 %v4454, %v4459
        %v4467 = vsub.f32 %v4455, %v4462
        %v4468 = vsub.f32 %v4456, %v4465
        %v4469 = vmul.f32 %v4466, 1.442695
        %v4470 = vpow.pop %v4469
        %v4471 = vmul.f32 %v4467, 1.442695
        %v4472 = vpow.pop %v4471
        %v4473 = vmul.f32 %v4468, 1.442695
        %v4474 = vpow.pop %v4473
        %v4475 = vsel %vm1004, %v4470, 0.0
        %4476 = vadd.xlane.f32.xlu0 %v4475
        %v4477 = vpop.xlane.xlu0 %4476
        %v4478 = vsel %vm1004, %v4472, 0.0
        %4479 = vadd.xlane.f32.xlu0 %v4478
        %v4480 = vpop.xlane.xlu0 %4479
        %v4481 = vsel %vm1011, %v4474, 0.0
        %4482 = vadd.xlane.f32.xlu0 %v4481
        %v4483 = vpop.xlane.xlu0 %4482
        %v4484 = vrcp.pop %v4477
        %v4485 = vmul.f32 %v4470, %v4484
        %v4486 = vrcp.pop %v4480
        %v4487 = vmul.f32 %v4472, %v4486
        %v4488 = vrcp.pop %v4483
        %v4489 = vmul.f32 %v4474, %v4488
        %v4490 = vpack.c.bf16 %v4487, %v4485
        %v4491 = vpack.c.bf16 %v4489, %v4489
        %v4492 = vpack.c.bf16 %v4380, %v4377
        %v4493 = vpack.c.bf16 %v4385, %v4385
        %v4495 = vsel %vm1004, %v4490, 0
        %v4498 = vsel %vm1004, %v4491, 0
        %v4501 = vand.u32 %v4493, %v1051
        %4503 = vmatprep.subr.bf16.mxu0 0
        %4504 = vmatpush1.bf16.msra.mxu0 %v4492
        %4505 = vmatprep.subr.bf16.mxu0 0
        %4506 = vmatpush1.bf16.msra.mxu0 %v4501
        %4507 = vmatprep.subr.bf16.mxu0 0
        %4508 = vmatpush1.bf16.msra.mxu0 0
        %4509 = vmatprep.subr.bf16.mxu0 0
        %4510 = vmatpush1.bf16.msra.mxu0 0
        %4511 = vmatprep.subr.bf16.mxu0 0
        %4512 = vmatpush1.bf16.msra.mxu0 0
        %4513 = vmatprep.subr.bf16.mxu0 0
        %4514 = vmatpush1.bf16.msra.mxu0 0
        %4515 = vmatprep.subr.bf16.mxu0 0
        %4516 = vmatpush1.bf16.msra.mxu0 0
        %4517 = vmatprep.subr.bf16.mxu0 0
        %4518 = vmatpush1.bf16.msra.mxu0 0
        %4519 = vmatprep.subr.bf16.mxu0 0
        %4520 = vmatpush1.bf16.msra.mxu0 0
        %4521 = vmatprep.subr.bf16.mxu0 0
        %4522 = vmatpush1.bf16.msra.mxu0 0
        %4523 = vmatprep.subr.bf16.mxu0 0
        %4524 = vmatpush1.bf16.msra.mxu0 0
        %4525 = vmatprep.subr.bf16.mxu0 0
        %4526 = vmatpush1.bf16.msra.mxu0 0
        %4527 = vmatprep.subr.bf16.mxu0 0
        %4528 = vmatpush1.bf16.msra.mxu0 0
        %4529 = vmatprep.subr.bf16.mxu0 0
        %4530 = vmatpush1.bf16.msra.mxu0 0
        %4531 = vmatprep.subr.bf16.mxu0 0
        %4532 = vmatpush1.bf16.msra.mxu0 0
        %4533 = vmatprep.subr.bf16.mxu0 0
        %4534 = vmatpush1.bf16.msra.mxu0 0
        %4535 = vmatprep.mubr.bf16.mxu0 0
        %4536 = vmatmul.mubr.bf16.gmra.mrb[0].mxu0 %v4495
        %v4537 = vpop.f32.mrb[0].mxu0
        %v4538 = vadd.f32 0.0, %v4537
        %v4539 = vpop.f32.mrb[0].mxu0
        %v4540 = vpop.f32.mrb[0].mxu0
        %v4541 = vadd.f32 0.0, %v4540
        %v4542 = vpop.f32.mrb[0].mxu0
        %4543 = vmatprep.mubr.bf16.mxu0 0
        %4544 = vmatmul.mubr.bf16.gmra.mrb[0].mxu0 %v4498
        %v4545 = vpop.f32.mrb[0].mxu0
        %v4546 = vadd.f32 0.0, %v4545
        %v4547 = vpop.f32.mrb[0].mxu0
        %v4548 = vpop.f32.mrb[0].mxu0
        %v4549 = vpop.f32.mrb[0].mxu0
        %4550 = vdwg.mxu0
        %s4551 = scalar_lea.vmem %s11, 28
        %v4552 = vld [vmem:[%s4551] sm:$0xf]
        %v4553 = vpack.c.bf16 %v4541, %v4538
        %v4554 = vpack.c.bf16 %v4546, %v4546
        %v4556 = vsel %vm940, %v4553, 0
        %v4559 = vsel %vm940, %v4554, 0
        %v4562 = vsel %vm1496, %v4552, 0
        %4564 = vmatprep.subr.bf16.mxu0 0
        %4565 = vmatpush1.bf16.msra.mxu0 %v4562
        %4566 = vmatprep.subr.bf16.mxu0 0
        %4567 = vmatpush1.bf16.msra.mxu0 0
        %4568 = vmatprep.subr.bf16.mxu0 0
        %4569 = vmatpush1.bf16.msra.mxu0 0
        %4570 = vmatprep.subr.bf16.mxu0 0
        %4571 = vmatpush1.bf16.msra.mxu0 0
        %4572 = vmatprep.subr.bf16.mxu0 0
        %4573 = vmatpush1.bf16.msra.mxu0 0
        %4574 = vmatprep.subr.bf16.mxu0 0
        %4575 = vmatpush1.bf16.msra.mxu0 0
        %4576 = vmatprep.subr.bf16.mxu0 0
        %4577 = vmatpush1.bf16.msra.mxu0 0
        %4578 = vmatprep.subr.bf16.mxu0 0
        %4579 = vmatpush1.bf16.msra.mxu0 0
        %4580 = vmatprep.subr.bf16.mxu0 0
        %4581 = vmatpush1.bf16.msra.mxu0 0
        %4582 = vmatprep.subr.bf16.mxu0 0
        %4583 = vmatpush1.bf16.msra.mxu0 0
        %4584 = vmatprep.subr.bf16.mxu0 0
        %4585 = vmatpush1.bf16.msra.mxu0 0
        %4586 = vmatprep.subr.bf16.mxu0 0
        %4587 = vmatpush1.bf16.msra.mxu0 0
        %4588 = vmatprep.subr.bf16.mxu0 0
        %4589 = vmatpush1.bf16.msra.mxu0 0
        %4590 = vmatprep.subr.bf16.mxu0 0
        %4591 = vmatpush1.bf16.msra.mxu0 0
        %4592 = vmatprep.subr.bf16.mxu0 0
        %4593 = vmatpush1.bf16.msra.mxu0 0
        %4594 = vmatprep.subr.bf16.mxu0 0
        %4595 = vmatpush1.bf16.msra.mxu0 0
        %4596 = vmatprep.mubr.bf16.mxu0 0
        %4597 = vmatmul.mubr.bf16.gmra.mrb[0].mxu0 %v4556
        %v4598 = vpop.f32.mrb[0].mxu0
        %v4599 = vadd.f32 0.0, %v4598
        %v4600 = vpop.f32.mrb[0].mxu0
        %v4601 = vpop.f32.mrb[0].mxu0
        %v4602 = vadd.f32 0.0, %v4601
        %v4603 = vpop.f32.mrb[0].mxu0
        %4604 = vmatprep.mubr.bf16.mxu0 0
        %4605 = vmatmul.mubr.bf16.gmra.mrb[0].mxu0 %v4559
        %v4606 = vpop.f32.mrb[0].mxu0
        %v4607 = vadd.f32 0.0, %v4606
        %v4608 = vpop.f32.mrb[0].mxu0
        %v4609 = vpop.f32.mrb[0].mxu0
        %v4610 = vpop.f32.mrb[0].mxu0
        %4611 = vdwg.mxu0
        %v4612 = vadd.f32 %v4167, %v4599
        %v4613 = vadd.f32 %v4168, %v4602
        %v4614 = vadd.f32 %v4169, %v4607
        %v4615 = vadd.f32 %v4170, %v4485
        %v4616 = vadd.f32 %v2770, %v4612
        %v4617 = vadd.f32 %v2771, %v4613
        %v4618 = vadd.f32 %v2772, %v4614
        %s4619 = scalar_lea.vmem %s12, 1
        %v4620 = vld [vmem:[%s4619] sm:$0x1]
        %v4622 = vlaneseq
        %v4623 = vshrl.u32 %v4622, 7
        %v4624 = vsub.s32 0, %v4623
        %v4625 = vrot.slane %v4620, %v4624
        %v4627 = vadd.f32 %v4616, %v4625
        %v4628 = vadd.f32 %v4617, %v4625
        %v4629 = vadd.f32 %v4618, %v4625
        %s4630 = scalar_lea.vmem %s13, 1
        %v4631 = vld [vmem:[%s4630] sm:$0x1]
        %s4632 = scalar_lea.vmem %s14, 1
        %v4633 = vld [vmem:[%s4632] sm:$0x1]
        %v4634 = vsel %vm649, %v4627, 0.0
        %4635 = vadd.xlane.f32.xlu0 %v4634
        %v4636 = vpop.xlane.xlu0 %4635
        %v4637 = vsel %vm649, %v4628, 0.0
        %4638 = vadd.xlane.f32.xlu0 %v4637
        %v4639 = vpop.xlane.xlu0 %4638
        %v4640 = vsel %vm641, %v4629, 0.0
        %4641 = vadd.xlane.f32.xlu0 %v4640
        %v4642 = vpop.xlane.xlu0 %4641
        %v4643 = vmul.f32 %v4636, %v666
        %v4644 = vmul.f32 %v4639, %v666
        %v4645 = vmul.f32 %v4642, %v666
        %v4646 = vsub.f32 %v4627, %v4643
        %v4647 = vsub.f32 %v4628, %v4644
        %v4648 = vsub.f32 %v4629, %v4645
        %v4649 = vmul.f32 %v4646, %v4646
        %v4650 = vmul.f32 %v4647, %v4647
        %v4651 = vmul.f32 %v4648, %v4648
        %v4652 = vsel %vm649, %v4649, 0.0
        %4653 = vadd.xlane.f32.xlu0 %v4652
        %v4654 = vpop.xlane.xlu0 %4653
        %v4655 = vsel %vm649, %v4650, 0.0
        %4656 = vadd.xlane.f32.xlu0 %v4655
        %v4657 = vpop.xlane.xlu0 %4656
        %v4658 = vsel %vm641, %v4651, 0.0
        %4659 = vadd.xlane.f32.xlu0 %v4658
        %v4660 = vpop.xlane.xlu0 %4659
        %v4661 = vmul.f32 %v4654, %v666
        %v4662 = vmul.f32 %v4657, %v666
        %v4663 = vmul.f32 %v4660, %v666
        %v4664 = vadd.f32 %v4661, 1e-05
        %v4665 = vadd.f32 %v4662, 1e-05
        %v4666 = vadd.f32 %v4663, 1e-05
        %v4667 = vrsqrt.pop %v4664
        %v4668 = vrsqrt.pop %v4665
        %v4669 = vrsqrt.pop %v4666
        %v4670 = vmul.f32 %v4646, %v4667
        %v4671 = vmul.f32 %v4647, %v4668
        %v4672 = vmul.f32 %v4648, %v4669
        %v4674 = vlaneseq
        %v4675 = vshrl.u32 %v4674, 7
        %v4676 = vsub.s32 0, %v4675
        %v4677 = vrot.slane %v4631, %v4676
        %v4679 = vmul.f32 %v4670, %v4677
        %v4680 = vmul.f32 %v4671, %v4677
        %v4681 = vmul.f32 %v4672, %v4677
        %v4683 = vlaneseq
        %v4684 = vshrl.u32 %v4683, 7
        %v4685 = vsub.s32 0, %v4684
        %v4686 = vrot.slane %v4633, %v4685
        %v4688 = vadd.f32 %v4679, %v4686
        %v4689 = vadd.f32 %v4680, %v4686
        %v4690 = vadd.f32 %v4681, %v4686
        %s4691 = scalar_lea.vmem %s15, 16
        %v4692 = vld [vmem:[%s4691] sm:$0xf]
        %v4693 = vld [vmem:[%s4691 + $0x4] sm:$0xf]
        %v4694 = vld [vmem:[%s4691 + $0x8] sm:$0xf]
        %v4695 = vld [vmem:[%s4691 + $0xc] sm:$0xf]
        %v4696 = vpack.c.bf16 %v4689, %v4688
        %v4697 = vpack.c.bf16 %v4690, %v4690
        %s4698 = scalar_lea.vmem %s16, 1
        %v4699 = vld [vmem:[%s4698] sm:$0x1]
        %v4701 = vlaneseq
        %v4702 = vshrl.u32 %v4701, 7
        %v4703 = vsub.s32 0, %v4702
        %v4704 = vrot.slane %v4699, %v4703
        %v4710 = vunpack.c.l.b16 %v4692
        %v4711 = vunpack.c.l.b16 %v4693
        %v4712 = vunpack.c.l.b16 %v4694
        %v4713 = vunpack.c.l.b16 %v4695
        %v4714 = vpack.c.b16 %v4711, %v4710
        %v4715 = vpack.c.b16 %v4713, %v4712
        %v4719 = vsel %vm649, %v4696, 0
        %v4722 = vsel %vm649, %v4697, 0
        %4724 = vmatprep.subr.bf16.mxu0 0
        %4725 = vmatpush1.bf16.msra.mxu0 %v4714
        %4726 = vmatprep.subr.bf16.mxu0 0
        %4727 = vmatpush1.bf16.msra.mxu0 %v4715
        %4728 = vmatprep.subr.bf16.mxu0 0
        %4729 = vmatpush1.bf16.msra.mxu0 0
        %4730 = vmatprep.subr.bf16.mxu0 0
        %4731 = vmatpush1.bf16.msra.mxu0 0
        %4732 = vmatprep.subr.bf16.mxu0 0
        %4733 = vmatpush1.bf16.msra.mxu0 0
        %4734 = vmatprep.subr.bf16.mxu0 0
        %4735 = vmatpush1.bf16.msra.mxu0 0
        %4736 = vmatprep.subr.bf16.mxu0 0
        %4737 = vmatpush1.bf16.msra.mxu0 0
        %4738 = vmatprep.subr.bf16.mxu0 0
        %4739 = vmatpush1.bf16.msra.mxu0 0
        %4740 = vmatprep.subr.bf16.mxu0 0
        %4741 = vmatpush1.bf16.msra.mxu0 0
        %4742 = vmatprep.subr.bf16.mxu0 0
        %4743 = vmatpush1.bf16.msra.mxu0 0
        %4744 = vmatprep.subr.bf16.mxu0 0
        %4745 = vmatpush1.bf16.msra.mxu0 0
        %4746 = vmatprep.subr.bf16.mxu0 0
        %4747 = vmatpush1.bf16.msra.mxu0 0
        %4748 = vmatprep.subr.bf16.mxu0 0
        %4749 = vmatpush1.bf16.msra.mxu0 0
        %4750 = vmatprep.subr.bf16.mxu0 0
        %4751 = vmatpush1.bf16.msra.mxu0 0
        %4752 = vmatprep.subr.bf16.mxu0 0
        %4753 = vmatpush1.bf16.msra.mxu0 0
        %4754 = vmatprep.subr.bf16.mxu0 0
        %4755 = vmatpush1.bf16.msra.mxu0 0
        %4756 = vmatprep.mubr.bf16.mxu0 0
        %4757 = vmatmul.mubr.bf16.gmra.mrb[0].mxu0 %v4719
        %v4758 = vpop.f32.mrb[0].mxu0
        %v4759 = vadd.f32 %v4704, %v4758
        %v4760 = vpop.f32.mrb[0].mxu0
        %v4761 = vpop.f32.mrb[0].mxu0
        %v4762 = vadd.f32 %v4704, %v4761
        %v4763 = vpop.f32.mrb[0].mxu0
        %4764 = vmatprep.mubr.bf16.mxu0 0
        %4765 = vmatmul.mubr.bf16.gmra.mrb[0].mxu0 %v4722
        %v4766 = vpop.f32.mrb[0].mxu0
        %v4767 = vadd.f32 %v4704, %v4766
        %v4768 = vpop.f32.mrb[0].mxu0
        %v4769 = vpop.f32.mrb[0].mxu0
        %v4770 = vpop.f32.mrb[0].mxu0
        %4771 = vdwg.mxu0
        %v4772 = vmul.f32 %v4759, %v4759
        %v4773 = vmul.f32 %v4762, %v4762
        %v4774 = vmul.f32 %v4767, %v4767
        %v4775 = vmul.f32 %v4759, %v4772
        %v4776 = vmul.f32 %v4762, %v4773
        %v4777 = vmul.f32 %v4767, %v4774
        %v4778 = vmul.f32 %v4775, 0.044715
        %v4779 = vmul.f32 %v4776, 0.044715
        %v4780 = vmul.f32 %v4777, 0.044715
        %v4781 = vadd.f32 %v4759, %v4778
        %v4782 = vadd.f32 %v4762, %v4779
        %v4783 = vadd.f32 %v4767, %v4780
        %v4784 = vmul.f32 %v4781, 0.7978846
        %v4785 = vmul.f32 %v4782, 0.7978846
        %v4786 = vmul.f32 %v4783, 0.7978846
        %v4787 = vtanh.pop %v4784
        %v4788 = vtanh.pop %v4785
        %v4789 = vtanh.pop %v4786
        %v4790 = vadd.f32 %v4787, 1.0
        %v4791 = vadd.f32 %v4788, 1.0
        %v4792 = vadd.f32 %v4789, 1.0
        %v4793 = vmul.f32 %v4790, 0.5
        %v4794 = vmul.f32 %v4791, 0.5
        %v4795 = vmul.f32 %v4792, 0.5
        %v4796 = vmul.f32 %v4759, %v4793
        %v4797 = vmul.f32 %v4762, %v4794
        %v4798 = vmul.f32 %v4767, %v4795
        %s4799 = scalar_lea.vmem %s17, 32
        %v4800 = vld [vmem:[%s4799] sm:$0xf]
        %v4801 = vld [vmem:[%s4799 + $0x4] sm:$0xf]
        %v4802 = vld [vmem:[%s4799 + $0x8] sm:$0xf]
        %v4803 = vld [vmem:[%s4799 + $0xc] sm:$0xf]
        %v4804 = vld [vmem:[%s4799 + $0x10] sm:$0xf]
        %v4805 = vld [vmem:[%s4799 + $0x14] sm:$0xf]
        %v4806 = vld [vmem:[%s4799 + $0x18] sm:$0xf]
        %v4807 = vld [vmem:[%s4799 + $0x1c] sm:$0xf]
        %v4808 = vpack.c.bf16 %v4797, %v4796
        %v4809 = vpack.c.bf16 %v4798, %v4798
        %v4818 = vunpack.c.l.b16 %v4800
        %v4819 = vunpack.c.l.b16 %v4801
        %v4820 = vunpack.c.l.b16 %v4802
        %v4821 = vunpack.c.l.b16 %v4803
        %v4822 = vunpack.c.l.b16 %v4804
        %v4823 = vunpack.c.l.b16 %v4805
        %v4824 = vunpack.c.l.b16 %v4806
        %v4825 = vunpack.c.l.b16 %v4807
        %v4826 = vpack.c.b16 %v4819, %v4818
        %v4827 = vpack.c.b16 %v4821, %v4820
        %v4828 = vpack.c.b16 %v4823, %v4822
        %v4829 = vpack.c.b16 %v4825, %v4824
        %v4835 = vsel %vm2705, %v4808, 0
        %v4838 = vsel %vm2705, %v4809, 0
        %4840 = vmatprep.subr.bf16.mxu0 0
        %4841 = vmatpush1.bf16.msra.mxu0 %v4826
        %4842 = vmatprep.subr.bf16.mxu0 0
        %4843 = vmatpush1.bf16.msra.mxu0 %v4827
        %4844 = vmatprep.subr.bf16.mxu0 0
        %4845 = vmatpush1.bf16.msra.mxu0 %v4828
        %4846 = vmatprep.subr.bf16.mxu0 0
        %4847 = vmatpush1.bf16.msra.mxu0 %v4829
        %4848 = vmatprep.subr.bf16.mxu0 0
        %4849 = vmatpush1.bf16.msra.mxu0 0
        %4850 = vmatprep.subr.bf16.mxu0 0
        %4851 = vmatpush1.bf16.msra.mxu0 0
        %4852 = vmatprep.subr.bf16.mxu0 0
        %4853 = vmatpush1.bf16.msra.mxu0 0
        %4854 = vmatprep.subr.bf16.mxu0 0
        %4855 = vmatpush1.bf16.msra.mxu0 0
        %4856 = vmatprep.subr.bf16.mxu0 0
        %4857 = vmatpush1.bf16.msra.mxu0 0
        %4858 = vmatprep.subr.bf16.mxu0 0
        %4859 = vmatpush1.bf16.msra.mxu0 0
        %4860 = vmatprep.subr.bf16.mxu0 0
        %4861 = vmatpush1.bf16.msra.mxu0 0
        %4862 = vmatprep.subr.bf16.mxu0 0
        %4863 = vmatpush1.bf16.msra.mxu0 0
        %4864 = vmatprep.subr.bf16.mxu0 0
        %4865 = vmatpush1.bf16.msra.mxu0 0
        %4866 = vmatprep.subr.bf16.mxu0 0
        %4867 = vmatpush1.bf16.msra.mxu0 0
        %4868 = vmatprep.subr.bf16.mxu0 0
        %4869 = vmatpush1.bf16.msra.mxu0 0
        %4870 = vmatprep.subr.bf16.mxu0 0
        %4871 = vmatpush1.bf16.msra.mxu0 0
        %4872 = vmatprep.mubr.bf16.mxu0 0
        %4873 = vmatmul.mubr.bf16.gmra.mrb[0].mxu0 %v4835
        %v4874 = vpop.f32.mrb[0].mxu0
        %v4875 = vadd.f32 0.0, %v4874
        %v4876 = vpop.f32.mrb[0].mxu0
        %v4877 = vpop.f32.mrb[0].mxu0
        %v4878 = vpop.f32.mrb[0].mxu0
        %4879 = vmatprep.mubr.bf16.mxu0 0
        %4880 = vmatmul.mubr.bf16.gmra.mrb[0].mxu0 %v4838
        %v4881 = vpop.f32.mrb[0].mxu0
        %v4882 = vpop.f32.mrb[0].mxu0
        %v4883 = vpop.f32.mrb[0].mxu0
        %v4884 = vpop.f32.mrb[0].mxu0
        %4885 = vdwg.mxu0
        %v4886 = vadd.f32 %v4627, %v4875
        %s4887 = scalar_lea.vmem %s18, 1
        %v4888 = vld [vmem:[%s4887] sm:$0x1]
        %v4890 = vlaneseq
        %v4891 = vshrl.u32 %v4890, 7
        %v4892 = vsub.s32 0, %v4891
        %v4893 = vrot.slane %v4888, %v4892
        %v4895 = vadd.f32 %v4886, %v4893
        %4896 = vst.msk [vmem:[%s625] sm:$0x1] %vm641, %v4895
        %v4897 = vmul.f32 %v4615, 0.25
        %4898 = vst.msk [vmem:[%s631] sm:$0x1] %vm1011, %v4897
        %s4899 = sand.u32 %s450, 1
        %s4900 = scalar_lea.sflag [#allocation4], %s4899
        %s4901 = sand.u32 %s450, 1
        %s4902 = scalar_lea.vmem [#allocation3], %s4901
        %s4903 = sand.u32 %s476, 1
        %s4904 = scalar_lea.sflag [#allocation6], %s4903
        %s4905 = sand.u32 %s476, 1
        %s4906 = scalar_lea.vmem [#allocation5], %s4905
        // Predicated region
        $region97: #{tpu_custom_call.1} parent=95 // pred_check
          %p4907 = pneg %p460
        $region98: #{tpu_custom_call.1} parent=95 // pred_check_branch
          %4909 = sbr.rel (%p4907) target = $region100
        $region99: #{tpu_custom_call.1} parent=95 // pred_region
          %s4911 = ssub.s32 16, 16
          %4912 = vsyncadd %s4900, %s4911
          %s4913 = smul.addr %s38, 16
          %s4914 = scalar_lea.hbm %s19, %s4913
          %s4916 = sshll.u32 %s4902, 4
          %s4917 = int_to_ptr.vmem [resolvable:$true] %s4916
          %4919 = dma.vmem_to_hbm [thread:$0]  %s4917, 16, %s4914, %s4900
        $region100: #{tpu_custom_call.1} parent=95 // pred_fallthru
          _
        // Predicated region
        $region101: #{tpu_custom_call.1} parent=95 // pred_check
          %p4920 = pneg %p486
        $region102: #{tpu_custom_call.1} parent=95 // pred_check_branch
          %4922 = sbr.rel (%p4920) target = $region104
        $region103: #{tpu_custom_call.1} parent=95 // pred_region
          %s4924 = ssub.s32 16, 16
          %4925 = vsyncadd %s4904, %s4924
          %s4926 = smul.addr %s38, 16
          %s4927 = scalar_lea.hbm %s20, %s4926
          %s4929 = sshll.u32 %s4906, 4
          %s4930 = int_to_ptr.vmem [resolvable:$true] %s4929
          %4932 = dma.vmem_to_hbm [thread:$0]  %s4930, 16, %s4927, %s4904
        $region104: #{tpu_custom_call.1} parent=95 // pred_fallthru
          _
      $region96: #{tpu_custom_call.1} parent=5 // pred_fallthru
        _
      %p4933 = scmp.le.s32.totalorder 2, %s33
      // Predicated region
      $region105: #{tpu_custom_call.1} parent=5 // pred_check
        %p4934 = pneg %p4933
      $region106: #{tpu_custom_call.1} parent=5 // pred_check_branch
        %4936 = sbr.rel (%p4934) target = $region108
      $region107: #{tpu_custom_call.1} parent=5 // pred_region
        %s4937 = ssub.s32 %s33, 2
        // Predicated region
        $region109: #{tpu_custom_call.1} parent=107 // pred_check
          %p4938 = pneg %p466
        $region110: #{tpu_custom_call.1} parent=107 // pred_check_branch
          %4940 = sbr.rel (%p4938) target = $region112
        $region111: #{tpu_custom_call.1} parent=107 // pred_region
          %s4941 = sand.u32 %s451, 1
          %s4942 = scalar_lea.sflag [#allocation4], %s4941
          %s4943 = sand.u32 %s451, 1
          %s4944 = scalar_lea.vmem [#allocation3], %s4943
          %4945 = dma.done %s4942, 16
        $region112: #{tpu_custom_call.1} parent=107 // pred_fallthru
          _
        // Predicated region
        $region113: #{tpu_custom_call.1} parent=107 // pred_check
          %p4946 = pneg %p492
        $region114: #{tpu_custom_call.1} parent=107 // pred_check_branch
          %4948 = sbr.rel (%p4946) target = $region116
        $region115: #{tpu_custom_call.1} parent=107 // pred_region
          %s4949 = sand.u32 %s477, 1
          %s4950 = scalar_lea.sflag [#allocation6], %s4949
          %s4951 = sand.u32 %s477, 1
          %s4952 = scalar_lea.vmem [#allocation5], %s4951
          %4953 = dma.done %s4950, 16
        $region116: #{tpu_custom_call.1} parent=107 // pred_fallthru
          _
      $region108: #{tpu_custom_call.1} parent=5 // pred_fallthru
        _
    $region6: #{tpu_custom_call.1} parent=1 // loop_footer
      %s37 = sadd.s32 1, %s33
    $region7: #{tpu_custom_call.1} parent=1 // loop_footer_branch
      %32 = sbr.rel target = $region3
    $region8: #{tpu_custom_call.1} parent=1 // loop_exit
      _
    %4954 = vsyncpa [#allocation4], 1
    %s4955 = scalar_lea.sflag [#allocation4], 1
    %4956 = vsyncpa %s4955, 1
    %4957 = vsyncpa [#allocation6], 1
    %s4958 = scalar_lea.sflag [#allocation6], 1
    %4959 = vsyncpa %s4958, 1

</llo_original>
